<compile_context>
chip_gen: v6e
topology: v6e:2x2x1
jax: 0.10.0
libtpu: 0.0.40
codegen_flags: <defaults>
</compile_context>

<pallas_src>
import math

import jax
import jax.numpy as jnp
from jax.experimental import pallas as pl
from jax.experimental.pallas import tpu as pltpu


# ----------------------------------------------------------------------------- config
def build_pyramid_cfgs(num_blocks, nf, in_channels=3):
    """Replicates clc_Pyramid.__init__ / make_layer block bookkeeping."""
    def make_layer(cin, cout, num):
        layer = [dict(cin=cin, cout=cout, down=(cin != cout))]
        for _ in range(1, num):
            layer.append(dict(cin=cout, cout=cout, down=False))
        return layer

    cfgs = []
    cin = in_channels
    for num in num_blocks:
        cfgs += make_layer(cin, nf, num)
        cin = nf
    # The PyTorch constructor reuses the leaked loop variable `num` (= num_blocks[-1]).
    cfgs += make_layer(cin, 3, num_blocks[-1])
    return cfgs


def init_pyramid_params(key, cfgs):
    """PyTorch-style init: Conv2d weight ~ N(0, sqrt(2/(k*k*out_channels))), OIHW, no bias."""
    params = []
    for cfg in cfgs:
        key, k1, k2, k3 = jax.random.split(key, 4)
        cin, cout = cfg["cin"], cfg["cout"]
        std3 = math.sqrt(2.0 / (3 * 3 * cout))
        p = {
            "w1": std3 * jax.random.normal(k1, (cout, cin, 3, 3), jnp.float32),
            "w2": std3 * jax.random.normal(k2, (cout, cout, 3, 3), jnp.float32),
        }
        if cfg["down"]:
            std1 = math.sqrt(2.0 / (1 * 1 * cout))
            p["wd"] = std1 * jax.random.normal(k3, (cout, cin, 1, 1), jnp.float32)
        params.append(p)
    return params


# ----------------------------------------------------------------------------- kernel
def make_pyramid_kernel(cfgs, H, W):
    HW = H * W

    def elu(v):
        # PyTorch nn.ELU (alpha=1.0): x if x > 0 else exp(x) - 1
        return jnp.where(v > 0, v, jnp.exp(jnp.minimum(v, 0.0)) - 1.0)

    def kernel(*refs):
        # refs: x_ref, <per-block weight matrices...>, out_ref   (no scratch)
        x_ref = refs[0]
        out_ref = refs[-1]
        w_refs = refs[1:-1]

        # Horizontal-validity masks, shared by every conv in the pyramid.
        col = jax.lax.broadcasted_iota(jnp.int32, (1, HW), 1) % W
        col_masks = {
            dx: ((col + dx >= 0) & (col + dx < W)).astype(jnp.float32)
            for dx in (-1, 1)
        }

        def conv3x3(img, wmat):
            # img: (Cin, HW) f32, wmat: (Cout, 9*Cin) f32  -> (Cout, HW) f32
            cin = img.shape[0]
            zpad = jnp.zeros((cin, W + 1), jnp.float32)
            xpad = jnp.concatenate([zpad, img, zpad], axis=1)   # (Cin, HW + 2W + 2)
            taps = []
            for ky in range(3):
                for kx in range(3):
                    start = (W + 1) + (ky - 1) * W + (kx - 1)
                    tap = xpad[:, start:start + HW]             # (Cin, HW), static lane slice
                    if kx != 1:                                  # mask horizontal wrap only;
                        tap = tap * col_masks[kx - 1]            # vertical OOB hits the zero pad
                    taps.append(tap)
            stk = jnp.concatenate(taps, axis=0)                 # (9*Cin, HW)
            return jnp.dot(wmat, stk, preferred_element_type=jnp.float32)

        a = x_ref[0].astype(jnp.float32)                        # (Cin0, HW)
        wi = 0
        for cfg in cfgs:
            w1 = w_refs[wi][...]
            w2 = w_refs[wi + 1][...]
            wi += 2
            if cfg["down"]:
                wd = w_refs[wi][...]
                wi += 1
                res = elu(jnp.dot(wd, a, preferred_element_type=jnp.float32))
            else:
                res = a
            h = elu(conv3x3(a, w1))
            h = conv3x3(h, w2)
            a = elu(h + res)
        out_ref[0] = a.astype(out_ref.dtype)

    return kernel


# ----------------------------------------------------------------------------- wrapper
def clc_pyramid_pallas(x_nchw, cfgs, params):
    """x_nchw: (N, C0, H, W) float32.  Returns (N, 3, H, W)."""
    N, C0, H, W = x_nchw.shape
    HW = H * W
    assert C0 == cfgs[0]["cin"]
    cout_final = cfgs[-1]["cout"]

    x_flat = x_nchw.reshape(N, C0, HW)                          # free reshape (no transpose)

    # Flatten weights into matmul-ready matrices (done once, outside the kernel):
    #   conv3x3 OIHW (Co,Ci,3,3) -> (Co, 9*Ci) with K index ((ky*3+kx)*Ci + ci)
    #   conv1x1 OIHW (Co,Ci,1,1) -> (Co, Ci)
    weight_args = []
    for cfg, p in zip(cfgs, params):
        cin, cout = cfg["cin"], cfg["cout"]
        weight_args.append(jnp.transpose(p["w1"], (0, 2, 3, 1)).reshape(cout, 9 * cin))
        weight_args.append(jnp.transpose(p["w2"], (0, 2, 3, 1)).reshape(cout, 9 * cout))
        if cfg["down"]:
            weight_args.append(p["wd"].reshape(cout, cin))

    in_specs = [pl.BlockSpec((1, C0, HW), lambda n: (n, 0, 0))]
    for w in weight_args:
        in_specs.append(pl.BlockSpec(w.shape, lambda n: (0, 0)))

    out_flat = pl.pallas_call(
        make_pyramid_kernel(cfgs, H, W),
        out_shape=jax.ShapeDtypeStruct((N, cout_final, HW), x_nchw.dtype),
        grid_spec=pltpu.PrefetchScalarGridSpec(
            num_scalar_prefetch=0,
            grid=(N,),
            in_specs=in_specs,
            out_specs=pl.BlockSpec((1, cout_final, HW), lambda n: (n, 0, 0)),
        ),
        compiler_params=pltpu.CompilerParams(
            dimension_semantics=("parallel",)),
    )(x_flat, *weight_args)

    return out_flat.reshape(N, cout_final, H, W)


# ----------------------------------------------------------------------------- reference
def clc_pyramid_reference(x, cfgs, params):
    """Plain-JAX NCHW reference replicating the PyTorch forward."""
    def conv(a, w, pad):
        return jax.lax.conv_general_dilated(
            a, w, window_strides=(1, 1), padding=pad,
            dimension_numbers=("NCHW", "OIHW", "NCHW"))

    out = x
    for cfg, p in zip(cfgs, params):
        res = out
        h = jax.nn.elu(conv(out, p["w1"], "SAME"))
        h = conv(h, p["w2"], "SAME")
        if cfg["down"]:
            res = jax.nn.elu(conv(out, p["wd"], "VALID"))
        out = jax.nn.elu(h + res)
    return out


# ----------------------------------------------------------------------------- main
if __name__ == "__main__":
    key = jax.random.PRNGKey(0)

    N, H, W = 2, 16, 16
    in_channels = 3          # clc_Pyramid default
    nf = 8                   # small demo feature width
    num_blocks = (2, 2)      # 2 groups of 2 blocks + final 3-channel group of 2 blocks

    cfgs = build_pyramid_cfgs(num_blocks, nf, in_channels)
    key, kparam, kx = jax.random.split(key, 3)
    params = init_pyramid_params(kparam, cfgs)
    x = jax.random.normal(kx, (N, in_channels, H, W), dtype=jnp.float32)

    out = clc_pyramid_pallas(x, cfgs, params)
    out = jax.block_until_ready(out)

    ref = clc_pyramid_reference(x, cfgs, params)
    assert out.shape == (N, 3, H, W), out.shape
    err = float(jnp.max(jnp.abs(out - ref)))
    assert jnp.allclose(out, ref, atol=1e-4, rtol=1e-4), f"mismatch vs reference, max err {err}"

    print("KERNEL_OK")
</pallas_src>

<mosaic_0001>
module attributes {stable_mosaic.version = 11 : i64} {
  func.func @kernel(%arg0: i32, %arg1: memref<1x3x256xf32, #tpu.memory_space<vmem>>, %arg2: memref<8x27xf32, #tpu.memory_space<vmem>>, %arg3: memref<8x72xf32, #tpu.memory_space<vmem>>, %arg4: memref<8x3xf32, #tpu.memory_space<vmem>>, %arg5: memref<8x72xf32, #tpu.memory_space<vmem>>, %arg6: memref<8x72xf32, #tpu.memory_space<vmem>>, %arg7: memref<8x72xf32, #tpu.memory_space<vmem>>, %arg8: memref<8x72xf32, #tpu.memory_space<vmem>>, %arg9: memref<8x72xf32, #tpu.memory_space<vmem>>, %arg10: memref<8x72xf32, #tpu.memory_space<vmem>>, %arg11: memref<3x72xf32, #tpu.memory_space<vmem>>, %arg12: memref<3x27xf32, #tpu.memory_space<vmem>>, %arg13: memref<3x8xf32, #tpu.memory_space<vmem>>, %arg14: memref<3x27xf32, #tpu.memory_space<vmem>>, %arg15: memref<3x27xf32, #tpu.memory_space<vmem>>, %arg16: memref<1x3x256xf32, #tpu.memory_space<vmem>>) attributes {dimension_semantics = [#tpu.dimension_semantics<parallel>], iteration_bounds = array<i64: 2>, scalar_prefetch = 0 : i64, scratch_operands = 0 : i64, tpu.core_type = #tpu.core_type<tc>, window_params = [{transform_indices = @transform_0, window_bounds = array<i64: 1, 3, 256>}, {pipeline_mode = #tpu.pipeline_mode<synchronous>, transform_indices = @transform_1, window_bounds = array<i64: 8, 27>}, {pipeline_mode = #tpu.pipeline_mode<synchronous>, transform_indices = @transform_2, window_bounds = array<i64: 8, 72>}, {pipeline_mode = #tpu.pipeline_mode<synchronous>, transform_indices = @transform_3, window_bounds = array<i64: 8, 3>}, {pipeline_mode = #tpu.pipeline_mode<synchronous>, transform_indices = @transform_4, window_bounds = array<i64: 8, 72>}, {pipeline_mode = #tpu.pipeline_mode<synchronous>, transform_indices = @transform_5, window_bounds = array<i64: 8, 72>}, {pipeline_mode = #tpu.pipeline_mode<synchronous>, transform_indices = @transform_6, window_bounds = array<i64: 8, 72>}, {pipeline_mode = #tpu.pipeline_mode<synchronous>, transform_indices = @transform_7, window_bounds = array<i64: 8, 72>}, {pipeline_mode = #tpu.pipeline_mode<synchronous>, transform_indices = @transform_8, window_bounds = array<i64: 8, 72>}, {pipeline_mode = #tpu.pipeline_mode<synchronous>, transform_indices = @transform_9, window_bounds = array<i64: 8, 72>}, {pipeline_mode = #tpu.pipeline_mode<synchronous>, transform_indices = @transform_10, window_bounds = array<i64: 3, 72>}, {pipeline_mode = #tpu.pipeline_mode<synchronous>, transform_indices = @transform_11, window_bounds = array<i64: 3, 27>}, {pipeline_mode = #tpu.pipeline_mode<synchronous>, transform_indices = @transform_12, window_bounds = array<i64: 3, 8>}, {pipeline_mode = #tpu.pipeline_mode<synchronous>, transform_indices = @transform_13, window_bounds = array<i64: 3, 27>}, {pipeline_mode = #tpu.pipeline_mode<synchronous>, transform_indices = @transform_14, window_bounds = array<i64: 3, 27>}, {transform_indices = @transform_15, window_bounds = array<i64: 1, 3, 256>}]} {
    %0 = tpu.iota {dimensions = array<i32: 1>} : vector<1x256xi32>
    %c16_i32 = arith.constant 16 : i32
    %c0_i32 = arith.constant 0 : i32
    %1 = arith.cmpi eq, %c16_i32, %c0_i32 : i32
    %c1_i32 = arith.constant 1 : i32
    %2 = arith.select %1, %c1_i32, %c16_i32 : i32
    %3 = vector.broadcast %2 : i32 to vector<1x256xi32>
    %4 = arith.remsi %0, %3 : vector<1x256xi32>
    %c0_i32_0 = arith.constant 0 : i32
    %5 = vector.broadcast %c0_i32_0 : i32 to vector<1x256xi32>
    %6 = arith.cmpi ne, %4, %5 : vector<1x256xi32>
    %c0_i32_1 = arith.constant 0 : i32
    %7 = vector.broadcast %c0_i32_1 : i32 to vector<1x256xi32>
    %8 = arith.cmpi slt, %4, %7 : vector<1x256xi32>
    %c0_i32_2 = arith.constant 0 : i32
    %9 = arith.cmpi slt, %2, %c0_i32_2 : i32
    %10 = vector.broadcast %9 : i1 to vector<1x256xi1>
    %11 = vector.broadcast %10 : vector<1x256xi1> to vector<1x256xi1>
    %12 = arith.xori %8, %11 : vector<1x256xi1>
    %13 = arith.andi %12, %6 : vector<1x256xi1>
    %14 = vector.broadcast %2 : i32 to vector<1x256xi32>
    %15 = arith.addi %4, %14 : vector<1x256xi32>
    %16 = arith.select %13, %15, %4 : vector<1x256xi1>, vector<1x256xi32>
    %c-1_i32 = arith.constant -1 : i32
    %17 = vector.broadcast %c-1_i32 : i32 to vector<1x256xi32>
    %18 = arith.addi %16, %17 : vector<1x256xi32>
    %c0_i32_3 = arith.constant 0 : i32
    %19 = vector.broadcast %c0_i32_3 : i32 to vector<1x256xi32>
    %20 = arith.cmpi sge, %18, %19 : vector<1x256xi32>
    %c-1_i32_4 = arith.constant -1 : i32
    %21 = vector.broadcast %c-1_i32_4 : i32 to vector<1x256xi32>
    %22 = arith.addi %16, %21 : vector<1x256xi32>
    %c16_i32_5 = arith.constant 16 : i32
    %23 = vector.broadcast %c16_i32_5 : i32 to vector<1x256xi32>
    %24 = arith.cmpi slt, %22, %23 : vector<1x256xi32>
    %25 = arith.andi %20, %24 : vector<1x256xi1>
    %26 = arith.extui %25 : vector<1x256xi1> to vector<1x256xi32>
    %27 = arith.sitofp %26 : vector<1x256xi32> to vector<1x256xf32>
    %c1_i32_6 = arith.constant 1 : i32
    %28 = vector.broadcast %c1_i32_6 : i32 to vector<1x256xi32>
    %29 = arith.addi %16, %28 : vector<1x256xi32>
    %c0_i32_7 = arith.constant 0 : i32
    %30 = vector.broadcast %c0_i32_7 : i32 to vector<1x256xi32>
    %31 = arith.cmpi sge, %29, %30 : vector<1x256xi32>
    %c1_i32_8 = arith.constant 1 : i32
    %32 = vector.broadcast %c1_i32_8 : i32 to vector<1x256xi32>
    %33 = arith.addi %16, %32 : vector<1x256xi32>
    %c16_i32_9 = arith.constant 16 : i32
    %34 = vector.broadcast %c16_i32_9 : i32 to vector<1x256xi32>
    %35 = arith.cmpi slt, %33, %34 : vector<1x256xi32>
    %36 = arith.andi %31, %35 : vector<1x256xi1>
    %37 = arith.extui %36 : vector<1x256xi1> to vector<1x256xi32>
    %38 = arith.sitofp %37 : vector<1x256xi32> to vector<1x256xf32>
    %c0 = arith.constant 0 : index
    %c0_10 = arith.constant 0 : index
    %c0_11 = arith.constant 0 : index
    %39 = vector.load %arg1[%c0, %c0_10, %c0_11] : memref<1x3x256xf32, #tpu.memory_space<vmem>>, vector<1x3x256xf32>
    %40 = vector.shape_cast %39 : vector<1x3x256xf32> to vector<3x256xf32>
    %c0_12 = arith.constant 0 : index
    %c0_13 = arith.constant 0 : index
    %41 = vector.load %arg2[%c0_12, %c0_13] : memref<8x27xf32, #tpu.memory_space<vmem>>, vector<8x27xf32>
    %c0_14 = arith.constant 0 : index
    %c0_15 = arith.constant 0 : index
    %42 = vector.load %arg3[%c0_14, %c0_15] : memref<8x72xf32, #tpu.memory_space<vmem>>, vector<8x72xf32>
    %c0_16 = arith.constant 0 : index
    %c0_17 = arith.constant 0 : index
    %43 = vector.load %arg4[%c0_16, %c0_17] : memref<8x3xf32, #tpu.memory_space<vmem>>, vector<8x3xf32>
    %cst = arith.constant dense<0.000000e+00> : vector<8x256xf32>
    %44 = tpu.matmul %43, %40, %cst {dimension_numbers = #tpu.dot_dimension_numbers<[1], [0], [0], [1], [0, 0, 1, 1], [], []>} : vector<8x3xf32>, vector<3x256xf32>, vector<8x256xf32> -> vector<8x256xf32>
    %cst_18 = arith.constant 0.000000e+00 : f32
    %45 = vector.broadcast %cst_18 : f32 to vector<8x256xf32>
    %46 = arith.cmpf ogt, %44, %45 : vector<8x256xf32>
    %cst_19 = arith.constant 0.000000e+00 : f32
    %47 = vector.broadcast %cst_19 : f32 to vector<8x256xf32>
    %48 = arith.minimumf %44, %47 : vector<8x256xf32>
    %49 = math.exp %48 : vector<8x256xf32>
    %cst_20 = arith.constant 1.000000e+00 : f32
    %50 = vector.broadcast %cst_20 : f32 to vector<8x256xf32>
    %51 = arith.subf %49, %50 : vector<8x256xf32>
    %52 = arith.select %46, %44, %51 : vector<8x256xi1>, vector<8x256xf32>
    %cst_21 = arith.constant 0.000000e+00 : f32
    %53 = vector.broadcast %cst_21 : f32 to vector<3x17xf32>
    %54 = tpu.concatenate %53, %40, %53 in 1 : vector<3x17xf32>, vector<3x256xf32>, vector<3x17xf32> -> vector<3x290xf32>
    %55 = vector.extract_strided_slice %54 {offsets = [0, 0], sizes = [3, 256], strides = [1, 1]} : vector<3x290xf32> to vector<3x256xf32>
    %56 = vector.broadcast %27 : vector<1x256xf32> to vector<3x256xf32>
    %57 = arith.mulf %55, %56 : vector<3x256xf32>
    %58 = vector.extract_strided_slice %54 {offsets = [0, 1], sizes = [3, 256], strides = [1, 1]} : vector<3x290xf32> to vector<3x256xf32>
    %59 = vector.extract_strided_slice %54 {offsets = [0, 2], sizes = [3, 256], strides = [1, 1]} : vector<3x290xf32> to vector<3x256xf32>
    %60 = vector.broadcast %38 : vector<1x256xf32> to vector<3x256xf32>
    %61 = arith.mulf %59, %60 : vector<3x256xf32>
    %62 = vector.extract_strided_slice %54 {offsets = [0, 16], sizes = [3, 256], strides = [1, 1]} : vector<3x290xf32> to vector<3x256xf32>
    %63 = vector.broadcast %27 : vector<1x256xf32> to vector<3x256xf32>
    %64 = arith.mulf %62, %63 : vector<3x256xf32>
    %65 = vector.extract_strided_slice %54 {offsets = [0, 17], sizes = [3, 256], strides = [1, 1]} : vector<3x290xf32> to vector<3x256xf32>
    %66 = vector.extract_strided_slice %54 {offsets = [0, 18], sizes = [3, 256], strides = [1, 1]} : vector<3x290xf32> to vector<3x256xf32>
    %67 = vector.broadcast %38 : vector<1x256xf32> to vector<3x256xf32>
    %68 = arith.mulf %66, %67 : vector<3x256xf32>
    %69 = vector.extract_strided_slice %54 {offsets = [0, 32], sizes = [3, 256], strides = [1, 1]} : vector<3x290xf32> to vector<3x256xf32>
    %70 = vector.broadcast %27 : vector<1x256xf32> to vector<3x256xf32>
    %71 = arith.mulf %69, %70 : vector<3x256xf32>
    %72 = vector.extract_strided_slice %54 {offsets = [0, 33], sizes = [3, 256], strides = [1, 1]} : vector<3x290xf32> to vector<3x256xf32>
    %73 = vector.extract_strided_slice %54 {offsets = [0, 34], sizes = [3, 256], strides = [1, 1]} : vector<3x290xf32> to vector<3x256xf32>
    %74 = vector.broadcast %38 : vector<1x256xf32> to vector<3x256xf32>
    %75 = arith.mulf %73, %74 : vector<3x256xf32>
    %76 = tpu.concatenate %57, %58, %61, %64, %65, %68, %71, %72, %75 in 0 : vector<3x256xf32>, vector<3x256xf32>, vector<3x256xf32>, vector<3x256xf32>, vector<3x256xf32>, vector<3x256xf32>, vector<3x256xf32>, vector<3x256xf32>, vector<3x256xf32> -> vector<27x256xf32>
    %cst_22 = arith.constant dense<0.000000e+00> : vector<8x256xf32>
    %77 = tpu.matmul %41, %76, %cst_22 {dimension_numbers = #tpu.dot_dimension_numbers<[1], [0], [0], [1], [0, 0, 1, 1], [], []>} : vector<8x27xf32>, vector<27x256xf32>, vector<8x256xf32> -> vector<8x256xf32>
    %cst_23 = arith.constant 0.000000e+00 : f32
    %78 = vector.broadcast %cst_23 : f32 to vector<8x256xf32>
    %79 = arith.cmpf ogt, %77, %78 : vector<8x256xf32>
    %cst_24 = arith.constant 0.000000e+00 : f32
    %80 = vector.broadcast %cst_24 : f32 to vector<8x256xf32>
    %81 = arith.minimumf %77, %80 : vector<8x256xf32>
    %82 = math.exp %81 : vector<8x256xf32>
    %cst_25 = arith.constant 1.000000e+00 : f32
    %83 = vector.broadcast %cst_25 : f32 to vector<8x256xf32>
    %84 = arith.subf %82, %83 : vector<8x256xf32>
    %85 = arith.select %79, %77, %84 : vector<8x256xi1>, vector<8x256xf32>
    %cst_26 = arith.constant 0.000000e+00 : f32
    %86 = vector.broadcast %cst_26 : f32 to vector<8x17xf32>
    %87 = tpu.concatenate %86, %85, %86 in 1 : vector<8x17xf32>, vector<8x256xf32>, vector<8x17xf32> -> vector<8x290xf32>
    %88 = vector.extract_strided_slice %87 {offsets = [0, 0], sizes = [8, 256], strides = [1, 1]} : vector<8x290xf32> to vector<8x256xf32>
    %89 = vector.broadcast %27 : vector<1x256xf32> to vector<8x256xf32>
    %90 = arith.mulf %88, %89 : vector<8x256xf32>
    %91 = vector.extract_strided_slice %87 {offsets = [0, 1], sizes = [8, 256], strides = [1, 1]} : vector<8x290xf32> to vector<8x256xf32>
    %92 = vector.extract_strided_slice %87 {offsets = [0, 2], sizes = [8, 256], strides = [1, 1]} : vector<8x290xf32> to vector<8x256xf32>
    %93 = vector.broadcast %38 : vector<1x256xf32> to vector<8x256xf32>
    %94 = arith.mulf %92, %93 : vector<8x256xf32>
    %95 = vector.extract_strided_slice %87 {offsets = [0, 16], sizes = [8, 256], strides = [1, 1]} : vector<8x290xf32> to vector<8x256xf32>
    %96 = vector.broadcast %27 : vector<1x256xf32> to vector<8x256xf32>
    %97 = arith.mulf %95, %96 : vector<8x256xf32>
    %98 = vector.extract_strided_slice %87 {offsets = [0, 17], sizes = [8, 256], strides = [1, 1]} : vector<8x290xf32> to vector<8x256xf32>
    %99 = vector.extract_strided_slice %87 {offsets = [0, 18], sizes = [8, 256], strides = [1, 1]} : vector<8x290xf32> to vector<8x256xf32>
    %100 = vector.broadcast %38 : vector<1x256xf32> to vector<8x256xf32>
    %101 = arith.mulf %99, %100 : vector<8x256xf32>
    %102 = vector.extract_strided_slice %87 {offsets = [0, 32], sizes = [8, 256], strides = [1, 1]} : vector<8x290xf32> to vector<8x256xf32>
    %103 = vector.broadcast %27 : vector<1x256xf32> to vector<8x256xf32>
    %104 = arith.mulf %102, %103 : vector<8x256xf32>
    %105 = vector.extract_strided_slice %87 {offsets = [0, 33], sizes = [8, 256], strides = [1, 1]} : vector<8x290xf32> to vector<8x256xf32>
    %106 = vector.extract_strided_slice %87 {offsets = [0, 34], sizes = [8, 256], strides = [1, 1]} : vector<8x290xf32> to vector<8x256xf32>
    %107 = vector.broadcast %38 : vector<1x256xf32> to vector<8x256xf32>
    %108 = arith.mulf %106, %107 : vector<8x256xf32>
    %109 = tpu.concatenate %90, %91, %94, %97, %98, %101, %104, %105, %108 in 0 : vector<8x256xf32>, vector<8x256xf32>, vector<8x256xf32>, vector<8x256xf32>, vector<8x256xf32>, vector<8x256xf32>, vector<8x256xf32>, vector<8x256xf32>, vector<8x256xf32> -> vector<72x256xf32>
    %cst_27 = arith.constant dense<0.000000e+00> : vector<8x256xf32>
    %110 = tpu.matmul %42, %109, %cst_27 {dimension_numbers = #tpu.dot_dimension_numbers<[1], [0], [0], [1], [0, 0, 1, 1], [], []>} : vector<8x72xf32>, vector<72x256xf32>, vector<8x256xf32> -> vector<8x256xf32>
    %111 = arith.addf %110, %52 : vector<8x256xf32>
    %cst_28 = arith.constant 0.000000e+00 : f32
    %112 = vector.broadcast %cst_28 : f32 to vector<8x256xf32>
    %113 = arith.cmpf ogt, %111, %112 : vector<8x256xf32>
    %cst_29 = arith.constant 0.000000e+00 : f32
    %114 = vector.broadcast %cst_29 : f32 to vector<8x256xf32>
    %115 = arith.minimumf %111, %114 : vector<8x256xf32>
    %116 = math.exp %115 : vector<8x256xf32>
    %cst_30 = arith.constant 1.000000e+00 : f32
    %117 = vector.broadcast %cst_30 : f32 to vector<8x256xf32>
    %118 = arith.subf %116, %117 : vector<8x256xf32>
    %119 = arith.select %113, %111, %118 : vector<8x256xi1>, vector<8x256xf32>
    %c0_31 = arith.constant 0 : index
    %c0_32 = arith.constant 0 : index
    %120 = vector.load %arg5[%c0_31, %c0_32] : memref<8x72xf32, #tpu.memory_space<vmem>>, vector<8x72xf32>
    %c0_33 = arith.constant 0 : index
    %c0_34 = arith.constant 0 : index
    %121 = vector.load %arg6[%c0_33, %c0_34] : memref<8x72xf32, #tpu.memory_space<vmem>>, vector<8x72xf32>
    %cst_35 = arith.constant 0.000000e+00 : f32
    %122 = vector.broadcast %cst_35 : f32 to vector<8x17xf32>
    %123 = tpu.concatenate %122, %119, %122 in 1 : vector<8x17xf32>, vector<8x256xf32>, vector<8x17xf32> -> vector<8x290xf32>
    %124 = vector.extract_strided_slice %123 {offsets = [0, 0], sizes = [8, 256], strides = [1, 1]} : vector<8x290xf32> to vector<8x256xf32>
    %125 = vector.broadcast %27 : vector<1x256xf32> to vector<8x256xf32>
    %126 = arith.mulf %124, %125 : vector<8x256xf32>
    %127 = vector.extract_strided_slice %123 {offsets = [0, 1], sizes = [8, 256], strides = [1, 1]} : vector<8x290xf32> to vector<8x256xf32>
    %128 = vector.extract_strided_slice %123 {offsets = [0, 2], sizes = [8, 256], strides = [1, 1]} : vector<8x290xf32> to vector<8x256xf32>
    %129 = vector.broadcast %38 : vector<1x256xf32> to vector<8x256xf32>
    %130 = arith.mulf %128, %129 : vector<8x256xf32>
    %131 = vector.extract_strided_slice %123 {offsets = [0, 16], sizes = [8, 256], strides = [1, 1]} : vector<8x290xf32> to vector<8x256xf32>
    %132 = vector.broadcast %27 : vector<1x256xf32> to vector<8x256xf32>
    %133 = arith.mulf %131, %132 : vector<8x256xf32>
    %134 = vector.extract_strided_slice %123 {offsets = [0, 17], sizes = [8, 256], strides = [1, 1]} : vector<8x290xf32> to vector<8x256xf32>
    %135 = vector.extract_strided_slice %123 {offsets = [0, 18], sizes = [8, 256], strides = [1, 1]} : vector<8x290xf32> to vector<8x256xf32>
    %136 = vector.broadcast %38 : vector<1x256xf32> to vector<8x256xf32>
    %137 = arith.mulf %135, %136 : vector<8x256xf32>
    %138 = vector.extract_strided_slice %123 {offsets = [0, 32], sizes = [8, 256], strides = [1, 1]} : vector<8x290xf32> to vector<8x256xf32>
    %139 = vector.broadcast %27 : vector<1x256xf32> to vector<8x256xf32>
    %140 = arith.mulf %138, %139 : vector<8x256xf32>
    %141 = vector.extract_strided_slice %123 {offsets = [0, 33], sizes = [8, 256], strides = [1, 1]} : vector<8x290xf32> to vector<8x256xf32>
    %142 = vector.extract_strided_slice %123 {offsets = [0, 34], sizes = [8, 256], strides = [1, 1]} : vector<8x290xf32> to vector<8x256xf32>
    %143 = vector.broadcast %38 : vector<1x256xf32> to vector<8x256xf32>
    %144 = arith.mulf %142, %143 : vector<8x256xf32>
    %145 = tpu.concatenate %126, %127, %130, %133, %134, %137, %140, %141, %144 in 0 : vector<8x256xf32>, vector<8x256xf32>, vector<8x256xf32>, vector<8x256xf32>, vector<8x256xf32>, vector<8x256xf32>, vector<8x256xf32>, vector<8x256xf32>, vector<8x256xf32> -> vector<72x256xf32>
    %cst_36 = arith.constant dense<0.000000e+00> : vector<8x256xf32>
    %146 = tpu.matmul %120, %145, %cst_36 {dimension_numbers = #tpu.dot_dimension_numbers<[1], [0], [0], [1], [0, 0, 1, 1], [], []>} : vector<8x72xf32>, vector<72x256xf32>, vector<8x256xf32> -> vector<8x256xf32>
    %cst_37 = arith.constant 0.000000e+00 : f32
    %147 = vector.broadcast %cst_37 : f32 to vector<8x256xf32>
    %148 = arith.cmpf ogt, %146, %147 : vector<8x256xf32>
    %cst_38 = arith.constant 0.000000e+00 : f32
    %149 = vector.broadcast %cst_38 : f32 to vector<8x256xf32>
    %150 = arith.minimumf %146, %149 : vector<8x256xf32>
    %151 = math.exp %150 : vector<8x256xf32>
    %cst_39 = arith.constant 1.000000e+00 : f32
    %152 = vector.broadcast %cst_39 : f32 to vector<8x256xf32>
    %153 = arith.subf %151, %152 : vector<8x256xf32>
    %154 = arith.select %148, %146, %153 : vector<8x256xi1>, vector<8x256xf32>
    %cst_40 = arith.constant 0.000000e+00 : f32
    %155 = vector.broadcast %cst_40 : f32 to vector<8x17xf32>
    %156 = tpu.concatenate %155, %154, %155 in 1 : vector<8x17xf32>, vector<8x256xf32>, vector<8x17xf32> -> vector<8x290xf32>
    %157 = vector.extract_strided_slice %156 {offsets = [0, 0], sizes = [8, 256], strides = [1, 1]} : vector<8x290xf32> to vector<8x256xf32>
    %158 = vector.broadcast %27 : vector<1x256xf32> to vector<8x256xf32>
    %159 = arith.mulf %157, %158 : vector<8x256xf32>
    %160 = vector.extract_strided_slice %156 {offsets = [0, 1], sizes = [8, 256], strides = [1, 1]} : vector<8x290xf32> to vector<8x256xf32>
    %161 = vector.extract_strided_slice %156 {offsets = [0, 2], sizes = [8, 256], strides = [1, 1]} : vector<8x290xf32> to vector<8x256xf32>
    %162 = vector.broadcast %38 : vector<1x256xf32> to vector<8x256xf32>
    %163 = arith.mulf %161, %162 : vector<8x256xf32>
    %164 = vector.extract_strided_slice %156 {offsets = [0, 16], sizes = [8, 256], strides = [1, 1]} : vector<8x290xf32> to vector<8x256xf32>
    %165 = vector.broadcast %27 : vector<1x256xf32> to vector<8x256xf32>
    %166 = arith.mulf %164, %165 : vector<8x256xf32>
    %167 = vector.extract_strided_slice %156 {offsets = [0, 17], sizes = [8, 256], strides = [1, 1]} : vector<8x290xf32> to vector<8x256xf32>
    %168 = vector.extract_strided_slice %156 {offsets = [0, 18], sizes = [8, 256], strides = [1, 1]} : vector<8x290xf32> to vector<8x256xf32>
    %169 = vector.broadcast %38 : vector<1x256xf32> to vector<8x256xf32>
    %170 = arith.mulf %168, %169 : vector<8x256xf32>
    %171 = vector.extract_strided_slice %156 {offsets = [0, 32], sizes = [8, 256], strides = [1, 1]} : vector<8x290xf32> to vector<8x256xf32>
    %172 = vector.broadcast %27 : vector<1x256xf32> to vector<8x256xf32>
    %173 = arith.mulf %171, %172 : vector<8x256xf32>
    %174 = vector.extract_strided_slice %156 {offsets = [0, 33], sizes = [8, 256], strides = [1, 1]} : vector<8x290xf32> to vector<8x256xf32>
    %175 = vector.extract_strided_slice %156 {offsets = [0, 34], sizes = [8, 256], strides = [1, 1]} : vector<8x290xf32> to vector<8x256xf32>
    %176 = vector.broadcast %38 : vector<1x256xf32> to vector<8x256xf32>
    %177 = arith.mulf %175, %176 : vector<8x256xf32>
    %178 = tpu.concatenate %159, %160, %163, %166, %167, %170, %173, %174, %177 in 0 : vector<8x256xf32>, vector<8x256xf32>, vector<8x256xf32>, vector<8x256xf32>, vector<8x256xf32>, vector<8x256xf32>, vector<8x256xf32>, vector<8x256xf32>, vector<8x256xf32> -> vector<72x256xf32>
    %cst_41 = arith.constant dense<0.000000e+00> : vector<8x256xf32>
    %179 = tpu.matmul %121, %178, %cst_41 {dimension_numbers = #tpu.dot_dimension_numbers<[1], [0], [0], [1], [0, 0, 1, 1], [], []>} : vector<8x72xf32>, vector<72x256xf32>, vector<8x256xf32> -> vector<8x256xf32>
    %180 = arith.addf %179, %119 : vector<8x256xf32>
    %cst_42 = arith.constant 0.000000e+00 : f32
    %181 = vector.broadcast %cst_42 : f32 to vector<8x256xf32>
    %182 = arith.cmpf ogt, %180, %181 : vector<8x256xf32>
    %cst_43 = arith.constant 0.000000e+00 : f32
    %183 = vector.broadcast %cst_43 : f32 to vector<8x256xf32>
    %184 = arith.minimumf %180, %183 : vector<8x256xf32>
    %185 = math.exp %184 : vector<8x256xf32>
    %cst_44 = arith.constant 1.000000e+00 : f32
    %186 = vector.broadcast %cst_44 : f32 to vector<8x256xf32>
    %187 = arith.subf %185, %186 : vector<8x256xf32>
    %188 = arith.select %182, %180, %187 : vector<8x256xi1>, vector<8x256xf32>
    %c0_45 = arith.constant 0 : index
    %c0_46 = arith.constant 0 : index
    %189 = vector.load %arg7[%c0_45, %c0_46] : memref<8x72xf32, #tpu.memory_space<vmem>>, vector<8x72xf32>
    %c0_47 = arith.constant 0 : index
    %c0_48 = arith.constant 0 : index
    %190 = vector.load %arg8[%c0_47, %c0_48] : memref<8x72xf32, #tpu.memory_space<vmem>>, vector<8x72xf32>
    %cst_49 = arith.constant 0.000000e+00 : f32
    %191 = vector.broadcast %cst_49 : f32 to vector<8x17xf32>
    %192 = tpu.concatenate %191, %188, %191 in 1 : vector<8x17xf32>, vector<8x256xf32>, vector<8x17xf32> -> vector<8x290xf32>
    %193 = vector.extract_strided_slice %192 {offsets = [0, 0], sizes = [8, 256], strides = [1, 1]} : vector<8x290xf32> to vector<8x256xf32>
    %194 = vector.broadcast %27 : vector<1x256xf32> to vector<8x256xf32>
    %195 = arith.mulf %193, %194 : vector<8x256xf32>
    %196 = vector.extract_strided_slice %192 {offsets = [0, 1], sizes = [8, 256], strides = [1, 1]} : vector<8x290xf32> to vector<8x256xf32>
    %197 = vector.extract_strided_slice %192 {offsets = [0, 2], sizes = [8, 256], strides = [1, 1]} : vector<8x290xf32> to vector<8x256xf32>
    %198 = vector.broadcast %38 : vector<1x256xf32> to vector<8x256xf32>
    %199 = arith.mulf %197, %198 : vector<8x256xf32>
    %200 = vector.extract_strided_slice %192 {offsets = [0, 16], sizes = [8, 256], strides = [1, 1]} : vector<8x290xf32> to vector<8x256xf32>
    %201 = vector.broadcast %27 : vector<1x256xf32> to vector<8x256xf32>
    %202 = arith.mulf %200, %201 : vector<8x256xf32>
    %203 = vector.extract_strided_slice %192 {offsets = [0, 17], sizes = [8, 256], strides = [1, 1]} : vector<8x290xf32> to vector<8x256xf32>
    %204 = vector.extract_strided_slice %192 {offsets = [0, 18], sizes = [8, 256], strides = [1, 1]} : vector<8x290xf32> to vector<8x256xf32>
    %205 = vector.broadcast %38 : vector<1x256xf32> to vector<8x256xf32>
    %206 = arith.mulf %204, %205 : vector<8x256xf32>
    %207 = vector.extract_strided_slice %192 {offsets = [0, 32], sizes = [8, 256], strides = [1, 1]} : vector<8x290xf32> to vector<8x256xf32>
    %208 = vector.broadcast %27 : vector<1x256xf32> to vector<8x256xf32>
    %209 = arith.mulf %207, %208 : vector<8x256xf32>
    %210 = vector.extract_strided_slice %192 {offsets = [0, 33], sizes = [8, 256], strides = [1, 1]} : vector<8x290xf32> to vector<8x256xf32>
    %211 = vector.extract_strided_slice %192 {offsets = [0, 34], sizes = [8, 256], strides = [1, 1]} : vector<8x290xf32> to vector<8x256xf32>
    %212 = vector.broadcast %38 : vector<1x256xf32> to vector<8x256xf32>
    %213 = arith.mulf %211, %212 : vector<8x256xf32>
    %214 = tpu.concatenate %195, %196, %199, %202, %203, %206, %209, %210, %213 in 0 : vector<8x256xf32>, vector<8x256xf32>, vector<8x256xf32>, vector<8x256xf32>, vector<8x256xf32>, vector<8x256xf32>, vector<8x256xf32>, vector<8x256xf32>, vector<8x256xf32> -> vector<72x256xf32>
    %cst_50 = arith.constant dense<0.000000e+00> : vector<8x256xf32>
    %215 = tpu.matmul %189, %214, %cst_50 {dimension_numbers = #tpu.dot_dimension_numbers<[1], [0], [0], [1], [0, 0, 1, 1], [], []>} : vector<8x72xf32>, vector<72x256xf32>, vector<8x256xf32> -> vector<8x256xf32>
    %cst_51 = arith.constant 0.000000e+00 : f32
    %216 = vector.broadcast %cst_51 : f32 to vector<8x256xf32>
    %217 = arith.cmpf ogt, %215, %216 : vector<8x256xf32>
    %cst_52 = arith.constant 0.000000e+00 : f32
    %218 = vector.broadcast %cst_52 : f32 to vector<8x256xf32>
    %219 = arith.minimumf %215, %218 : vector<8x256xf32>
    %220 = math.exp %219 : vector<8x256xf32>
    %cst_53 = arith.constant 1.000000e+00 : f32
    %221 = vector.broadcast %cst_53 : f32 to vector<8x256xf32>
    %222 = arith.subf %220, %221 : vector<8x256xf32>
    %223 = arith.select %217, %215, %222 : vector<8x256xi1>, vector<8x256xf32>
    %cst_54 = arith.constant 0.000000e+00 : f32
    %224 = vector.broadcast %cst_54 : f32 to vector<8x17xf32>
    %225 = tpu.concatenate %224, %223, %224 in 1 : vector<8x17xf32>, vector<8x256xf32>, vector<8x17xf32> -> vector<8x290xf32>
    %226 = vector.extract_strided_slice %225 {offsets = [0, 0], sizes = [8, 256], strides = [1, 1]} : vector<8x290xf32> to vector<8x256xf32>
    %227 = vector.broadcast %27 : vector<1x256xf32> to vector<8x256xf32>
    %228 = arith.mulf %226, %227 : vector<8x256xf32>
    %229 = vector.extract_strided_slice %225 {offsets = [0, 1], sizes = [8, 256], strides = [1, 1]} : vector<8x290xf32> to vector<8x256xf32>
    %230 = vector.extract_strided_slice %225 {offsets = [0, 2], sizes = [8, 256], strides = [1, 1]} : vector<8x290xf32> to vector<8x256xf32>
    %231 = vector.broadcast %38 : vector<1x256xf32> to vector<8x256xf32>
    %232 = arith.mulf %230, %231 : vector<8x256xf32>
    %233 = vector.extract_strided_slice %225 {offsets = [0, 16], sizes = [8, 256], strides = [1, 1]} : vector<8x290xf32> to vector<8x256xf32>
    %234 = vector.broadcast %27 : vector<1x256xf32> to vector<8x256xf32>
    %235 = arith.mulf %233, %234 : vector<8x256xf32>
    %236 = vector.extract_strided_slice %225 {offsets = [0, 17], sizes = [8, 256], strides = [1, 1]} : vector<8x290xf32> to vector<8x256xf32>
    %237 = vector.extract_strided_slice %225 {offsets = [0, 18], sizes = [8, 256], strides = [1, 1]} : vector<8x290xf32> to vector<8x256xf32>
    %238 = vector.broadcast %38 : vector<1x256xf32> to vector<8x256xf32>
    %239 = arith.mulf %237, %238 : vector<8x256xf32>
    %240 = vector.extract_strided_slice %225 {offsets = [0, 32], sizes = [8, 256], strides = [1, 1]} : vector<8x290xf32> to vector<8x256xf32>
    %241 = vector.broadcast %27 : vector<1x256xf32> to vector<8x256xf32>
    %242 = arith.mulf %240, %241 : vector<8x256xf32>
    %243 = vector.extract_strided_slice %225 {offsets = [0, 33], sizes = [8, 256], strides = [1, 1]} : vector<8x290xf32> to vector<8x256xf32>
    %244 = vector.extract_strided_slice %225 {offsets = [0, 34], sizes = [8, 256], strides = [1, 1]} : vector<8x290xf32> to vector<8x256xf32>
    %245 = vector.broadcast %38 : vector<1x256xf32> to vector<8x256xf32>
    %246 = arith.mulf %244, %245 : vector<8x256xf32>
    %247 = tpu.concatenate %228, %229, %232, %235, %236, %239, %242, %243, %246 in 0 : vector<8x256xf32>, vector<8x256xf32>, vector<8x256xf32>, vector<8x256xf32>, vector<8x256xf32>, vector<8x256xf32>, vector<8x256xf32>, vector<8x256xf32>, vector<8x256xf32> -> vector<72x256xf32>
    %cst_55 = arith.constant dense<0.000000e+00> : vector<8x256xf32>
    %248 = tpu.matmul %190, %247, %cst_55 {dimension_numbers = #tpu.dot_dimension_numbers<[1], [0], [0], [1], [0, 0, 1, 1], [], []>} : vector<8x72xf32>, vector<72x256xf32>, vector<8x256xf32> -> vector<8x256xf32>
    %249 = arith.addf %248, %188 : vector<8x256xf32>
    %cst_56 = arith.constant 0.000000e+00 : f32
    %250 = vector.broadcast %cst_56 : f32 to vector<8x256xf32>
    %251 = arith.cmpf ogt, %249, %250 : vector<8x256xf32>
    %cst_57 = arith.constant 0.000000e+00 : f32
    %252 = vector.broadcast %cst_57 : f32 to vector<8x256xf32>
    %253 = arith.minimumf %249, %252 : vector<8x256xf32>
    %254 = math.exp %253 : vector<8x256xf32>
    %cst_58 = arith.constant 1.000000e+00 : f32
    %255 = vector.broadcast %cst_58 : f32 to vector<8x256xf32>
    %256 = arith.subf %254, %255 : vector<8x256xf32>
    %257 = arith.select %251, %249, %256 : vector<8x256xi1>, vector<8x256xf32>
    %c0_59 = arith.constant 0 : index
    %c0_60 = arith.constant 0 : index
    %258 = vector.load %arg9[%c0_59, %c0_60] : memref<8x72xf32, #tpu.memory_space<vmem>>, vector<8x72xf32>
    %c0_61 = arith.constant 0 : index
    %c0_62 = arith.constant 0 : index
    %259 = vector.load %arg10[%c0_61, %c0_62] : memref<8x72xf32, #tpu.memory_space<vmem>>, vector<8x72xf32>
    %cst_63 = arith.constant 0.000000e+00 : f32
    %260 = vector.broadcast %cst_63 : f32 to vector<8x17xf32>
    %261 = tpu.concatenate %260, %257, %260 in 1 : vector<8x17xf32>, vector<8x256xf32>, vector<8x17xf32> -> vector<8x290xf32>
    %262 = vector.extract_strided_slice %261 {offsets = [0, 0], sizes = [8, 256], strides = [1, 1]} : vector<8x290xf32> to vector<8x256xf32>
    %263 = vector.broadcast %27 : vector<1x256xf32> to vector<8x256xf32>
    %264 = arith.mulf %262, %263 : vector<8x256xf32>
    %265 = vector.extract_strided_slice %261 {offsets = [0, 1], sizes = [8, 256], strides = [1, 1]} : vector<8x290xf32> to vector<8x256xf32>
    %266 = vector.extract_strided_slice %261 {offsets = [0, 2], sizes = [8, 256], strides = [1, 1]} : vector<8x290xf32> to vector<8x256xf32>
    %267 = vector.broadcast %38 : vector<1x256xf32> to vector<8x256xf32>
    %268 = arith.mulf %266, %267 : vector<8x256xf32>
    %269 = vector.extract_strided_slice %261 {offsets = [0, 16], sizes = [8, 256], strides = [1, 1]} : vector<8x290xf32> to vector<8x256xf32>
    %270 = vector.broadcast %27 : vector<1x256xf32> to vector<8x256xf32>
    %271 = arith.mulf %269, %270 : vector<8x256xf32>
    %272 = vector.extract_strided_slice %261 {offsets = [0, 17], sizes = [8, 256], strides = [1, 1]} : vector<8x290xf32> to vector<8x256xf32>
    %273 = vector.extract_strided_slice %261 {offsets = [0, 18], sizes = [8, 256], strides = [1, 1]} : vector<8x290xf32> to vector<8x256xf32>
    %274 = vector.broadcast %38 : vector<1x256xf32> to vector<8x256xf32>
    %275 = arith.mulf %273, %274 : vector<8x256xf32>
    %276 = vector.extract_strided_slice %261 {offsets = [0, 32], sizes = [8, 256], strides = [1, 1]} : vector<8x290xf32> to vector<8x256xf32>
    %277 = vector.broadcast %27 : vector<1x256xf32> to vector<8x256xf32>
    %278 = arith.mulf %276, %277 : vector<8x256xf32>
    %279 = vector.extract_strided_slice %261 {offsets = [0, 33], sizes = [8, 256], strides = [1, 1]} : vector<8x290xf32> to vector<8x256xf32>
    %280 = vector.extract_strided_slice %261 {offsets = [0, 34], sizes = [8, 256], strides = [1, 1]} : vector<8x290xf32> to vector<8x256xf32>
    %281 = vector.broadcast %38 : vector<1x256xf32> to vector<8x256xf32>
    %282 = arith.mulf %280, %281 : vector<8x256xf32>
    %283 = tpu.concatenate %264, %265, %268, %271, %272, %275, %278, %279, %282 in 0 : vector<8x256xf32>, vector<8x256xf32>, vector<8x256xf32>, vector<8x256xf32>, vector<8x256xf32>, vector<8x256xf32>, vector<8x256xf32>, vector<8x256xf32>, vector<8x256xf32> -> vector<72x256xf32>
    %cst_64 = arith.constant dense<0.000000e+00> : vector<8x256xf32>
    %284 = tpu.matmul %258, %283, %cst_64 {dimension_numbers = #tpu.dot_dimension_numbers<[1], [0], [0], [1], [0, 0, 1, 1], [], []>} : vector<8x72xf32>, vector<72x256xf32>, vector<8x256xf32> -> vector<8x256xf32>
    %cst_65 = arith.constant 0.000000e+00 : f32
    %285 = vector.broadcast %cst_65 : f32 to vector<8x256xf32>
    %286 = arith.cmpf ogt, %284, %285 : vector<8x256xf32>
    %cst_66 = arith.constant 0.000000e+00 : f32
    %287 = vector.broadcast %cst_66 : f32 to vector<8x256xf32>
    %288 = arith.minimumf %284, %287 : vector<8x256xf32>
    %289 = math.exp %288 : vector<8x256xf32>
    %cst_67 = arith.constant 1.000000e+00 : f32
    %290 = vector.broadcast %cst_67 : f32 to vector<8x256xf32>
    %291 = arith.subf %289, %290 : vector<8x256xf32>
    %292 = arith.select %286, %284, %291 : vector<8x256xi1>, vector<8x256xf32>
    %cst_68 = arith.constant 0.000000e+00 : f32
    %293 = vector.broadcast %cst_68 : f32 to vector<8x17xf32>
    %294 = tpu.concatenate %293, %292, %293 in 1 : vector<8x17xf32>, vector<8x256xf32>, vector<8x17xf32> -> vector<8x290xf32>
    %295 = vector.extract_strided_slice %294 {offsets = [0, 0], sizes = [8, 256], strides = [1, 1]} : vector<8x290xf32> to vector<8x256xf32>
    %296 = vector.broadcast %27 : vector<1x256xf32> to vector<8x256xf32>
    %297 = arith.mulf %295, %296 : vector<8x256xf32>
    %298 = vector.extract_strided_slice %294 {offsets = [0, 1], sizes = [8, 256], strides = [1, 1]} : vector<8x290xf32> to vector<8x256xf32>
    %299 = vector.extract_strided_slice %294 {offsets = [0, 2], sizes = [8, 256], strides = [1, 1]} : vector<8x290xf32> to vector<8x256xf32>
    %300 = vector.broadcast %38 : vector<1x256xf32> to vector<8x256xf32>
    %301 = arith.mulf %299, %300 : vector<8x256xf32>
    %302 = vector.extract_strided_slice %294 {offsets = [0, 16], sizes = [8, 256], strides = [1, 1]} : vector<8x290xf32> to vector<8x256xf32>
    %303 = vector.broadcast %27 : vector<1x256xf32> to vector<8x256xf32>
    %304 = arith.mulf %302, %303 : vector<8x256xf32>
    %305 = vector.extract_strided_slice %294 {offsets = [0, 17], sizes = [8, 256], strides = [1, 1]} : vector<8x290xf32> to vector<8x256xf32>
    %306 = vector.extract_strided_slice %294 {offsets = [0, 18], sizes = [8, 256], strides = [1, 1]} : vector<8x290xf32> to vector<8x256xf32>
    %307 = vector.broadcast %38 : vector<1x256xf32> to vector<8x256xf32>
    %308 = arith.mulf %306, %307 : vector<8x256xf32>
    %309 = vector.extract_strided_slice %294 {offsets = [0, 32], sizes = [8, 256], strides = [1, 1]} : vector<8x290xf32> to vector<8x256xf32>
    %310 = vector.broadcast %27 : vector<1x256xf32> to vector<8x256xf32>
    %311 = arith.mulf %309, %310 : vector<8x256xf32>
    %312 = vector.extract_strided_slice %294 {offsets = [0, 33], sizes = [8, 256], strides = [1, 1]} : vector<8x290xf32> to vector<8x256xf32>
    %313 = vector.extract_strided_slice %294 {offsets = [0, 34], sizes = [8, 256], strides = [1, 1]} : vector<8x290xf32> to vector<8x256xf32>
    %314 = vector.broadcast %38 : vector<1x256xf32> to vector<8x256xf32>
    %315 = arith.mulf %313, %314 : vector<8x256xf32>
    %316 = tpu.concatenate %297, %298, %301, %304, %305, %308, %311, %312, %315 in 0 : vector<8x256xf32>, vector<8x256xf32>, vector<8x256xf32>, vector<8x256xf32>, vector<8x256xf32>, vector<8x256xf32>, vector<8x256xf32>, vector<8x256xf32>, vector<8x256xf32> -> vector<72x256xf32>
    %cst_69 = arith.constant dense<0.000000e+00> : vector<8x256xf32>
    %317 = tpu.matmul %259, %316, %cst_69 {dimension_numbers = #tpu.dot_dimension_numbers<[1], [0], [0], [1], [0, 0, 1, 1], [], []>} : vector<8x72xf32>, vector<72x256xf32>, vector<8x256xf32> -> vector<8x256xf32>
    %318 = arith.addf %317, %257 : vector<8x256xf32>
    %cst_70 = arith.constant 0.000000e+00 : f32
    %319 = vector.broadcast %cst_70 : f32 to vector<8x256xf32>
    %320 = arith.cmpf ogt, %318, %319 : vector<8x256xf32>
    %cst_71 = arith.constant 0.000000e+00 : f32
    %321 = vector.broadcast %cst_71 : f32 to vector<8x256xf32>
    %322 = arith.minimumf %318, %321 : vector<8x256xf32>
    %323 = math.exp %322 : vector<8x256xf32>
    %cst_72 = arith.constant 1.000000e+00 : f32
    %324 = vector.broadcast %cst_72 : f32 to vector<8x256xf32>
    %325 = arith.subf %323, %324 : vector<8x256xf32>
    %326 = arith.select %320, %318, %325 : vector<8x256xi1>, vector<8x256xf32>
    %c0_73 = arith.constant 0 : index
    %c0_74 = arith.constant 0 : index
    %327 = vector.load %arg11[%c0_73, %c0_74] : memref<3x72xf32, #tpu.memory_space<vmem>>, vector<3x72xf32>
    %c0_75 = arith.constant 0 : index
    %c0_76 = arith.constant 0 : index
    %328 = vector.load %arg12[%c0_75, %c0_76] : memref<3x27xf32, #tpu.memory_space<vmem>>, vector<3x27xf32>
    %c0_77 = arith.constant 0 : index
    %c0_78 = arith.constant 0 : index
    %329 = vector.load %arg13[%c0_77, %c0_78] : memref<3x8xf32, #tpu.memory_space<vmem>>, vector<3x8xf32>
    %cst_79 = arith.constant dense<0.000000e+00> : vector<3x256xf32>
    %330 = tpu.matmul %329, %326, %cst_79 {dimension_numbers = #tpu.dot_dimension_numbers<[1], [0], [0], [1], [0, 0, 1, 1], [], []>} : vector<3x8xf32>, vector<8x256xf32>, vector<3x256xf32> -> vector<3x256xf32>
    %cst_80 = arith.constant 0.000000e+00 : f32
    %331 = vector.broadcast %cst_80 : f32 to vector<3x256xf32>
    %332 = arith.cmpf ogt, %330, %331 : vector<3x256xf32>
    %cst_81 = arith.constant 0.000000e+00 : f32
    %333 = vector.broadcast %cst_81 : f32 to vector<3x256xf32>
    %334 = arith.minimumf %330, %333 : vector<3x256xf32>
    %335 = math.exp %334 : vector<3x256xf32>
    %cst_82 = arith.constant 1.000000e+00 : f32
    %336 = vector.broadcast %cst_82 : f32 to vector<3x256xf32>
    %337 = arith.subf %335, %336 : vector<3x256xf32>
    %338 = arith.select %332, %330, %337 : vector<3x256xi1>, vector<3x256xf32>
    %cst_83 = arith.constant 0.000000e+00 : f32
    %339 = vector.broadcast %cst_83 : f32 to vector<8x17xf32>
    %340 = tpu.concatenate %339, %326, %339 in 1 : vector<8x17xf32>, vector<8x256xf32>, vector<8x17xf32> -> vector<8x290xf32>
    %341 = vector.extract_strided_slice %340 {offsets = [0, 0], sizes = [8, 256], strides = [1, 1]} : vector<8x290xf32> to vector<8x256xf32>
    %342 = vector.broadcast %27 : vector<1x256xf32> to vector<8x256xf32>
    %343 = arith.mulf %341, %342 : vector<8x256xf32>
    %344 = vector.extract_strided_slice %340 {offsets = [0, 1], sizes = [8, 256], strides = [1, 1]} : vector<8x290xf32> to vector<8x256xf32>
    %345 = vector.extract_strided_slice %340 {offsets = [0, 2], sizes = [8, 256], strides = [1, 1]} : vector<8x290xf32> to vector<8x256xf32>
    %346 = vector.broadcast %38 : vector<1x256xf32> to vector<8x256xf32>
    %347 = arith.mulf %345, %346 : vector<8x256xf32>
    %348 = vector.extract_strided_slice %340 {offsets = [0, 16], sizes = [8, 256], strides = [1, 1]} : vector<8x290xf32> to vector<8x256xf32>
    %349 = vector.broadcast %27 : vector<1x256xf32> to vector<8x256xf32>
    %350 = arith.mulf %348, %349 : vector<8x256xf32>
    %351 = vector.extract_strided_slice %340 {offsets = [0, 17], sizes = [8, 256], strides = [1, 1]} : vector<8x290xf32> to vector<8x256xf32>
    %352 = vector.extract_strided_slice %340 {offsets = [0, 18], sizes = [8, 256], strides = [1, 1]} : vector<8x290xf32> to vector<8x256xf32>
    %353 = vector.broadcast %38 : vector<1x256xf32> to vector<8x256xf32>
    %354 = arith.mulf %352, %353 : vector<8x256xf32>
    %355 = vector.extract_strided_slice %340 {offsets = [0, 32], sizes = [8, 256], strides = [1, 1]} : vector<8x290xf32> to vector<8x256xf32>
    %356 = vector.broadcast %27 : vector<1x256xf32> to vector<8x256xf32>
    %357 = arith.mulf %355, %356 : vector<8x256xf32>
    %358 = vector.extract_strided_slice %340 {offsets = [0, 33], sizes = [8, 256], strides = [1, 1]} : vector<8x290xf32> to vector<8x256xf32>
    %359 = vector.extract_strided_slice %340 {offsets = [0, 34], sizes = [8, 256], strides = [1, 1]} : vector<8x290xf32> to vector<8x256xf32>
    %360 = vector.broadcast %38 : vector<1x256xf32> to vector<8x256xf32>
    %361 = arith.mulf %359, %360 : vector<8x256xf32>
    %362 = tpu.concatenate %343, %344, %347, %350, %351, %354, %357, %358, %361 in 0 : vector<8x256xf32>, vector<8x256xf32>, vector<8x256xf32>, vector<8x256xf32>, vector<8x256xf32>, vector<8x256xf32>, vector<8x256xf32>, vector<8x256xf32>, vector<8x256xf32> -> vector<72x256xf32>
    %cst_84 = arith.constant dense<0.000000e+00> : vector<3x256xf32>
    %363 = tpu.matmul %327, %362, %cst_84 {dimension_numbers = #tpu.dot_dimension_numbers<[1], [0], [0], [1], [0, 0, 1, 1], [], []>} : vector<3x72xf32>, vector<72x256xf32>, vector<3x256xf32> -> vector<3x256xf32>
    %cst_85 = arith.constant 0.000000e+00 : f32
    %364 = vector.broadcast %cst_85 : f32 to vector<3x256xf32>
    %365 = arith.cmpf ogt, %363, %364 : vector<3x256xf32>
    %cst_86 = arith.constant 0.000000e+00 : f32
    %366 = vector.broadcast %cst_86 : f32 to vector<3x256xf32>
    %367 = arith.minimumf %363, %366 : vector<3x256xf32>
    %368 = math.exp %367 : vector<3x256xf32>
    %cst_87 = arith.constant 1.000000e+00 : f32
    %369 = vector.broadcast %cst_87 : f32 to vector<3x256xf32>
    %370 = arith.subf %368, %369 : vector<3x256xf32>
    %371 = arith.select %365, %363, %370 : vector<3x256xi1>, vector<3x256xf32>
    %cst_88 = arith.constant 0.000000e+00 : f32
    %372 = vector.broadcast %cst_88 : f32 to vector<3x17xf32>
    %373 = tpu.concatenate %372, %371, %372 in 1 : vector<3x17xf32>, vector<3x256xf32>, vector<3x17xf32> -> vector<3x290xf32>
    %374 = vector.extract_strided_slice %373 {offsets = [0, 0], sizes = [3, 256], strides = [1, 1]} : vector<3x290xf32> to vector<3x256xf32>
    %375 = vector.broadcast %27 : vector<1x256xf32> to vector<3x256xf32>
    %376 = arith.mulf %374, %375 : vector<3x256xf32>
    %377 = vector.extract_strided_slice %373 {offsets = [0, 1], sizes = [3, 256], strides = [1, 1]} : vector<3x290xf32> to vector<3x256xf32>
    %378 = vector.extract_strided_slice %373 {offsets = [0, 2], sizes = [3, 256], strides = [1, 1]} : vector<3x290xf32> to vector<3x256xf32>
    %379 = vector.broadcast %38 : vector<1x256xf32> to vector<3x256xf32>
    %380 = arith.mulf %378, %379 : vector<3x256xf32>
    %381 = vector.extract_strided_slice %373 {offsets = [0, 16], sizes = [3, 256], strides = [1, 1]} : vector<3x290xf32> to vector<3x256xf32>
    %382 = vector.broadcast %27 : vector<1x256xf32> to vector<3x256xf32>
    %383 = arith.mulf %381, %382 : vector<3x256xf32>
    %384 = vector.extract_strided_slice %373 {offsets = [0, 17], sizes = [3, 256], strides = [1, 1]} : vector<3x290xf32> to vector<3x256xf32>
    %385 = vector.extract_strided_slice %373 {offsets = [0, 18], sizes = [3, 256], strides = [1, 1]} : vector<3x290xf32> to vector<3x256xf32>
    %386 = vector.broadcast %38 : vector<1x256xf32> to vector<3x256xf32>
    %387 = arith.mulf %385, %386 : vector<3x256xf32>
    %388 = vector.extract_strided_slice %373 {offsets = [0, 32], sizes = [3, 256], strides = [1, 1]} : vector<3x290xf32> to vector<3x256xf32>
    %389 = vector.broadcast %27 : vector<1x256xf32> to vector<3x256xf32>
    %390 = arith.mulf %388, %389 : vector<3x256xf32>
    %391 = vector.extract_strided_slice %373 {offsets = [0, 33], sizes = [3, 256], strides = [1, 1]} : vector<3x290xf32> to vector<3x256xf32>
    %392 = vector.extract_strided_slice %373 {offsets = [0, 34], sizes = [3, 256], strides = [1, 1]} : vector<3x290xf32> to vector<3x256xf32>
    %393 = vector.broadcast %38 : vector<1x256xf32> to vector<3x256xf32>
    %394 = arith.mulf %392, %393 : vector<3x256xf32>
    %395 = tpu.concatenate %376, %377, %380, %383, %384, %387, %390, %391, %394 in 0 : vector<3x256xf32>, vector<3x256xf32>, vector<3x256xf32>, vector<3x256xf32>, vector<3x256xf32>, vector<3x256xf32>, vector<3x256xf32>, vector<3x256xf32>, vector<3x256xf32> -> vector<27x256xf32>
    %cst_89 = arith.constant dense<0.000000e+00> : vector<3x256xf32>
    %396 = tpu.matmul %328, %395, %cst_89 {dimension_numbers = #tpu.dot_dimension_numbers<[1], [0], [0], [1], [0, 0, 1, 1], [], []>} : vector<3x27xf32>, vector<27x256xf32>, vector<3x256xf32> -> vector<3x256xf32>
    %397 = arith.addf %396, %338 : vector<3x256xf32>
    %cst_90 = arith.constant 0.000000e+00 : f32
    %398 = vector.broadcast %cst_90 : f32 to vector<3x256xf32>
    %399 = arith.cmpf ogt, %397, %398 : vector<3x256xf32>
    %cst_91 = arith.constant 0.000000e+00 : f32
    %400 = vector.broadcast %cst_91 : f32 to vector<3x256xf32>
    %401 = arith.minimumf %397, %400 : vector<3x256xf32>
    %402 = math.exp %401 : vector<3x256xf32>
    %cst_92 = arith.constant 1.000000e+00 : f32
    %403 = vector.broadcast %cst_92 : f32 to vector<3x256xf32>
    %404 = arith.subf %402, %403 : vector<3x256xf32>
    %405 = arith.select %399, %397, %404 : vector<3x256xi1>, vector<3x256xf32>
    %c0_93 = arith.constant 0 : index
    %c0_94 = arith.constant 0 : index
    %406 = vector.load %arg14[%c0_93, %c0_94] : memref<3x27xf32, #tpu.memory_space<vmem>>, vector<3x27xf32>
    %c0_95 = arith.constant 0 : index
    %c0_96 = arith.constant 0 : index
    %407 = vector.load %arg15[%c0_95, %c0_96] : memref<3x27xf32, #tpu.memory_space<vmem>>, vector<3x27xf32>
    %cst_97 = arith.constant 0.000000e+00 : f32
    %408 = vector.broadcast %cst_97 : f32 to vector<3x17xf32>
    %409 = tpu.concatenate %408, %405, %408 in 1 : vector<3x17xf32>, vector<3x256xf32>, vector<3x17xf32> -> vector<3x290xf32>
    %410 = vector.extract_strided_slice %409 {offsets = [0, 0], sizes = [3, 256], strides = [1, 1]} : vector<3x290xf32> to vector<3x256xf32>
    %411 = vector.broadcast %27 : vector<1x256xf32> to vector<3x256xf32>
    %412 = arith.mulf %410, %411 : vector<3x256xf32>
    %413 = vector.extract_strided_slice %409 {offsets = [0, 1], sizes = [3, 256], strides = [1, 1]} : vector<3x290xf32> to vector<3x256xf32>
    %414 = vector.extract_strided_slice %409 {offsets = [0, 2], sizes = [3, 256], strides = [1, 1]} : vector<3x290xf32> to vector<3x256xf32>
    %415 = vector.broadcast %38 : vector<1x256xf32> to vector<3x256xf32>
    %416 = arith.mulf %414, %415 : vector<3x256xf32>
    %417 = vector.extract_strided_slice %409 {offsets = [0, 16], sizes = [3, 256], strides = [1, 1]} : vector<3x290xf32> to vector<3x256xf32>
    %418 = vector.broadcast %27 : vector<1x256xf32> to vector<3x256xf32>
    %419 = arith.mulf %417, %418 : vector<3x256xf32>
    %420 = vector.extract_strided_slice %409 {offsets = [0, 17], sizes = [3, 256], strides = [1, 1]} : vector<3x290xf32> to vector<3x256xf32>
    %421 = vector.extract_strided_slice %409 {offsets = [0, 18], sizes = [3, 256], strides = [1, 1]} : vector<3x290xf32> to vector<3x256xf32>
    %422 = vector.broadcast %38 : vector<1x256xf32> to vector<3x256xf32>
    %423 = arith.mulf %421, %422 : vector<3x256xf32>
    %424 = vector.extract_strided_slice %409 {offsets = [0, 32], sizes = [3, 256], strides = [1, 1]} : vector<3x290xf32> to vector<3x256xf32>
    %425 = vector.broadcast %27 : vector<1x256xf32> to vector<3x256xf32>
    %426 = arith.mulf %424, %425 : vector<3x256xf32>
    %427 = vector.extract_strided_slice %409 {offsets = [0, 33], sizes = [3, 256], strides = [1, 1]} : vector<3x290xf32> to vector<3x256xf32>
    %428 = vector.extract_strided_slice %409 {offsets = [0, 34], sizes = [3, 256], strides = [1, 1]} : vector<3x290xf32> to vector<3x256xf32>
    %429 = vector.broadcast %38 : vector<1x256xf32> to vector<3x256xf32>
    %430 = arith.mulf %428, %429 : vector<3x256xf32>
    %431 = tpu.concatenate %412, %413, %416, %419, %420, %423, %426, %427, %430 in 0 : vector<3x256xf32>, vector<3x256xf32>, vector<3x256xf32>, vector<3x256xf32>, vector<3x256xf32>, vector<3x256xf32>, vector<3x256xf32>, vector<3x256xf32>, vector<3x256xf32> -> vector<27x256xf32>
    %cst_98 = arith.constant dense<0.000000e+00> : vector<3x256xf32>
    %432 = tpu.matmul %406, %431, %cst_98 {dimension_numbers = #tpu.dot_dimension_numbers<[1], [0], [0], [1], [0, 0, 1, 1], [], []>} : vector<3x27xf32>, vector<27x256xf32>, vector<3x256xf32> -> vector<3x256xf32>
    %cst_99 = arith.constant 0.000000e+00 : f32
    %433 = vector.broadcast %cst_99 : f32 to vector<3x256xf32>
    %434 = arith.cmpf ogt, %432, %433 : vector<3x256xf32>
    %cst_100 = arith.constant 0.000000e+00 : f32
    %435 = vector.broadcast %cst_100 : f32 to vector<3x256xf32>
    %436 = arith.minimumf %432, %435 : vector<3x256xf32>
    %437 = math.exp %436 : vector<3x256xf32>
    %cst_101 = arith.constant 1.000000e+00 : f32
    %438 = vector.broadcast %cst_101 : f32 to vector<3x256xf32>
    %439 = arith.subf %437, %438 : vector<3x256xf32>
    %440 = arith.select %434, %432, %439 : vector<3x256xi1>, vector<3x256xf32>
    %cst_102 = arith.constant 0.000000e+00 : f32
    %441 = vector.broadcast %cst_102 : f32 to vector<3x17xf32>
    %442 = tpu.concatenate %441, %440, %441 in 1 : vector<3x17xf32>, vector<3x256xf32>, vector<3x17xf32> -> vector<3x290xf32>
    %443 = vector.extract_strided_slice %442 {offsets = [0, 0], sizes = [3, 256], strides = [1, 1]} : vector<3x290xf32> to vector<3x256xf32>
    %444 = vector.broadcast %27 : vector<1x256xf32> to vector<3x256xf32>
    %445 = arith.mulf %443, %444 : vector<3x256xf32>
    %446 = vector.extract_strided_slice %442 {offsets = [0, 1], sizes = [3, 256], strides = [1, 1]} : vector<3x290xf32> to vector<3x256xf32>
    %447 = vector.extract_strided_slice %442 {offsets = [0, 2], sizes = [3, 256], strides = [1, 1]} : vector<3x290xf32> to vector<3x256xf32>
    %448 = vector.broadcast %38 : vector<1x256xf32> to vector<3x256xf32>
    %449 = arith.mulf %447, %448 : vector<3x256xf32>
    %450 = vector.extract_strided_slice %442 {offsets = [0, 16], sizes = [3, 256], strides = [1, 1]} : vector<3x290xf32> to vector<3x256xf32>
    %451 = vector.broadcast %27 : vector<1x256xf32> to vector<3x256xf32>
    %452 = arith.mulf %450, %451 : vector<3x256xf32>
    %453 = vector.extract_strided_slice %442 {offsets = [0, 17], sizes = [3, 256], strides = [1, 1]} : vector<3x290xf32> to vector<3x256xf32>
    %454 = vector.extract_strided_slice %442 {offsets = [0, 18], sizes = [3, 256], strides = [1, 1]} : vector<3x290xf32> to vector<3x256xf32>
    %455 = vector.broadcast %38 : vector<1x256xf32> to vector<3x256xf32>
    %456 = arith.mulf %454, %455 : vector<3x256xf32>
    %457 = vector.extract_strided_slice %442 {offsets = [0, 32], sizes = [3, 256], strides = [1, 1]} : vector<3x290xf32> to vector<3x256xf32>
    %458 = vector.broadcast %27 : vector<1x256xf32> to vector<3x256xf32>
    %459 = arith.mulf %457, %458 : vector<3x256xf32>
    %460 = vector.extract_strided_slice %442 {offsets = [0, 33], sizes = [3, 256], strides = [1, 1]} : vector<3x290xf32> to vector<3x256xf32>
    %461 = vector.extract_strided_slice %442 {offsets = [0, 34], sizes = [3, 256], strides = [1, 1]} : vector<3x290xf32> to vector<3x256xf32>
    %462 = vector.broadcast %38 : vector<1x256xf32> to vector<3x256xf32>
    %463 = arith.mulf %461, %462 : vector<3x256xf32>
    %464 = tpu.concatenate %445, %446, %449, %452, %453, %456, %459, %460, %463 in 0 : vector<3x256xf32>, vector<3x256xf32>, vector<3x256xf32>, vector<3x256xf32>, vector<3x256xf32>, vector<3x256xf32>, vector<3x256xf32>, vector<3x256xf32>, vector<3x256xf32> -> vector<27x256xf32>
    %cst_103 = arith.constant dense<0.000000e+00> : vector<3x256xf32>
    %465 = tpu.matmul %407, %464, %cst_103 {dimension_numbers = #tpu.dot_dimension_numbers<[1], [0], [0], [1], [0, 0, 1, 1], [], []>} : vector<3x27xf32>, vector<27x256xf32>, vector<3x256xf32> -> vector<3x256xf32>
    %466 = arith.addf %465, %405 : vector<3x256xf32>
    %cst_104 = arith.constant 0.000000e+00 : f32
    %467 = vector.broadcast %cst_104 : f32 to vector<3x256xf32>
    %468 = arith.cmpf ogt, %466, %467 : vector<3x256xf32>
    %cst_105 = arith.constant 0.000000e+00 : f32
    %469 = vector.broadcast %cst_105 : f32 to vector<3x256xf32>
    %470 = arith.minimumf %466, %469 : vector<3x256xf32>
    %471 = math.exp %470 : vector<3x256xf32>
    %cst_106 = arith.constant 1.000000e+00 : f32
    %472 = vector.broadcast %cst_106 : f32 to vector<3x256xf32>
    %473 = arith.subf %471, %472 : vector<3x256xf32>
    %474 = arith.select %468, %466, %473 : vector<3x256xi1>, vector<3x256xf32>
    %c0_107 = arith.constant 0 : index
    %c0_108 = arith.constant 0 : index
    %c0_109 = arith.constant 0 : index
    %475 = vector.load %arg16[%c0_107, %c0_108, %c0_109] : memref<1x3x256xf32, #tpu.memory_space<vmem>>, vector<1x3x256xf32>
    %476 = vector.shape_cast %475 : vector<1x3x256xf32> to vector<3x256xf32>
    %477 = vector.shape_cast %474 : vector<3x256xf32> to vector<1x3x256xf32>
    tpu.vector_store %arg16[%c0_107, %c0_108, %c0_109], %477 {strides = array<i32>} : memref<1x3x256xf32, #tpu.memory_space<vmem>>, vector<1x3x256xf32>,
    return
  }
  func.func @transform_0(%arg0: i32) -> (i32, i32, i32) {
    %c0_i32 = arith.constant 0 : i32
    %c0_i32_0 = arith.constant 0 : i32
    %c0_i32_1 = arith.constant 0 : i32
    return %arg0, %c0_i32, %c0_i32_0 : i32, i32, i32
  }
  func.func @transform_1(%arg0: i32) -> (i32, i32) {
    %c0_i32 = arith.constant 0 : i32
    %c0_i32_0 = arith.constant 0 : i32
    %c0_i32_1 = arith.constant 0 : i32
    return %c0_i32, %c0_i32_0 : i32, i32
  }
  func.func @transform_2(%arg0: i32) -> (i32, i32) {
    %c0_i32 = arith.constant 0 : i32
    %c0_i32_0 = arith.constant 0 : i32
    %c0_i32_1 = arith.constant 0 : i32
    return %c0_i32, %c0_i32_0 : i32, i32
  }
  func.func @transform_3(%arg0: i32) -> (i32, i32) {
    %c0_i32 = arith.constant 0 : i32
    %c0_i32_0 = arith.constant 0 : i32
    %c0_i32_1 = arith.constant 0 : i32
    return %c0_i32, %c0_i32_0 : i32, i32
  }
  func.func @transform_4(%arg0: i32) -> (i32, i32) {
    %c0_i32 = arith.constant 0 : i32
    %c0_i32_0 = arith.constant 0 : i32
    %c0_i32_1 = arith.constant 0 : i32
    return %c0_i32, %c0_i32_0 : i32, i32
  }
  func.func @transform_5(%arg0: i32) -> (i32, i32) {
    %c0_i32 = arith.constant 0 : i32
    %c0_i32_0 = arith.constant 0 : i32
    %c0_i32_1 = arith.constant 0 : i32
    return %c0_i32, %c0_i32_0 : i32, i32
  }
  func.func @transform_6(%arg0: i32) -> (i32, i32) {
    %c0_i32 = arith.constant 0 : i32
    %c0_i32_0 = arith.constant 0 : i32
    %c0_i32_1 = arith.constant 0 : i32
    return %c0_i32, %c0_i32_0 : i32, i32
  }
  func.func @transform_7(%arg0: i32) -> (i32, i32) {
    %c0_i32 = arith.constant 0 : i32
    %c0_i32_0 = arith.constant 0 : i32
    %c0_i32_1 = arith.constant 0 : i32
    return %c0_i32, %c0_i32_0 : i32, i32
  }
  func.func @transform_8(%arg0: i32) -> (i32, i32) {
    %c0_i32 = arith.constant 0 : i32
    %c0_i32_0 = arith.constant 0 : i32
    %c0_i32_1 = arith.constant 0 : i32
    return %c0_i32, %c0_i32_0 : i32, i32
  }
  func.func @transform_9(%arg0: i32) -> (i32, i32) {
    %c0_i32 = arith.constant 0 : i32
    %c0_i32_0 = arith.constant 0 : i32
    %c0_i32_1 = arith.constant 0 : i32
    return %c0_i32, %c0_i32_0 : i32, i32
  }
  func.func @transform_10(%arg0: i32) -> (i32, i32) {
    %c0_i32 = arith.constant 0 : i32
    %c0_i32_0 = arith.constant 0 : i32
    %c0_i32_1 = arith.constant 0 : i32
    return %c0_i32, %c0_i32_0 : i32, i32
  }
  func.func @transform_11(%arg0: i32) -> (i32, i32) {
    %c0_i32 = arith.constant 0 : i32
    %c0_i32_0 = arith.constant 0 : i32
    %c0_i32_1 = arith.constant 0 : i32
    return %c0_i32, %c0_i32_0 : i32, i32
  }
  func.func @transform_12(%arg0: i32) -> (i32, i32) {
    %c0_i32 = arith.constant 0 : i32
    %c0_i32_0 = arith.constant 0 : i32
    %c0_i32_1 = arith.constant 0 : i32
    return %c0_i32, %c0_i32_0 : i32, i32
  }
  func.func @transform_13(%arg0: i32) -> (i32, i32) {
    %c0_i32 = arith.constant 0 : i32
    %c0_i32_0 = arith.constant 0 : i32
    %c0_i32_1 = arith.constant 0 : i32
    return %c0_i32, %c0_i32_0 : i32, i32
  }
  func.func @transform_14(%arg0: i32) -> (i32, i32) {
    %c0_i32 = arith.constant 0 : i32
    %c0_i32_0 = arith.constant 0 : i32
    %c0_i32_1 = arith.constant 0 : i32
    return %c0_i32, %c0_i32_0 : i32, i32
  }
  func.func @transform_15(%arg0: i32) -> (i32, i32, i32) {
    %c0_i32 = arith.constant 0 : i32
    %c0_i32_0 = arith.constant 0 : i32
    %c0_i32_1 = arith.constant 0 : i32
    return %arg0, %c0_i32, %c0_i32_0 : i32, i32, i32
  }
}

</mosaic_0001>

<llo_original>
// kernel: tpu_custom_call.1
$region0: #{tpu_custom_call.1}
  #allocation0 [shape = 'u32[]', space=smem, size = 0x4, offset = 0x4, fixed_abs, tag = 'smem constant byte address 0x4 - core index']
  #allocation1 [shape = 'u32[144,128]{1,0:T(1,128)}', space=vmem, size = 0x12000, scoped, tag = 'internal scratch']
  %s0 = inlined_call_operand.vmem [shape: f32[2,3,256], index: 0, kind: input, shape index: {}]
  %s1 = inlined_call_operand.vmem [shape: f32[8,27], index: 1, kind: input, shape index: {}]
  %s2 = inlined_call_operand.vmem [shape: f32[8,72], index: 2, kind: input, shape index: {}]
  %s3 = inlined_call_operand.vmem [shape: f32[8,3], index: 3, kind: input, shape index: {}]
  %s4 = inlined_call_operand.vmem [shape: f32[8,72], index: 4, kind: input, shape index: {}]
  %s5 = inlined_call_operand.vmem [shape: f32[8,72], index: 5, kind: input, shape index: {}]
  %s6 = inlined_call_operand.hbm [shape: f32[8,72], index: 6, kind: input, shape index: {}]
  %s7 = inlined_call_operand.hbm [shape: f32[8,72], index: 7, kind: input, shape index: {}]
  %s8 = inlined_call_operand.hbm [shape: f32[8,72], index: 8, kind: input, shape index: {}]
  %s9 = inlined_call_operand.vmem [shape: f32[8,72], index: 9, kind: input, shape index: {}]
  %s10 = inlined_call_operand.vmem [shape: f32[3,72], index: 10, kind: input, shape index: {}]
  %s11 = inlined_call_operand.vmem [shape: f32[3,27], index: 11, kind: input, shape index: {}]
  %s12 = inlined_call_operand.hbm [shape: f32[3,8], index: 12, kind: input, shape index: {}]
  %s13 = inlined_call_operand.hbm [shape: f32[3,27], index: 13, kind: input, shape index: {}]
  %s14 = inlined_call_operand.vmem [shape: f32[3,27], index: 14, kind: input, shape index: {}]
  %s15 = inlined_call_operand.vmem [shape: f32[2,3,256], index: 15, kind: output, shape index: {}]
  %s16 = sld [smem:[#allocation0]]
  $region113: #{tpu_custom_call.1} parent=0
    _
  %s18 = ssub.s32 1, %s16
  %s19 = scalar_select 0, %s18, %s16
  $region1: #{tpu_custom_call.1} parent=0
    #allocation2 [shape = 'u8[4096]{0}', space=vmem, size = 0x1000, scoped, tag = 'input window, operand 6, single buffered']
    #allocation3 [shape = 's32[2]{0}', space=sflag, size = 0x8, scoped, tag = 'scoped memory for tpu_custom_call.1']
    #allocation4 [shape = 'u8[4096]{0}', space=vmem, size = 0x1000, scoped, tag = 'input window, operand 7, single buffered']
    #allocation5 [shape = 's32[1]{0}', space=sflag, size = 0x4, scoped, tag = 'scoped memory for tpu_custom_call.1']
    #allocation6 [shape = 'u8[4096]{0}', space=vmem, size = 0x1000, scoped, tag = 'input window, operand 8, single buffered']
    #allocation7 [shape = 'u8[2048]{0}', space=vmem, size = 0x800, scoped, tag = 'input window, operand 12, single buffered']
    #allocation8 [shape = 's32[1]{0}', space=sflag, size = 0x4, scoped, tag = 'scoped memory for tpu_custom_call.1']
    #allocation9 [shape = 'u8[2048]{0}', space=vmem, size = 0x800, scoped, tag = 'input window, operand 13, single buffered']
    %20 = vsyncpa [#allocation3], 0
    %21 = vsyncpa [#allocation5], 0
    %22 = vsyncpa [#allocation8], 0
    loop: start=0, step=1, limit=4
    $region2: #{tpu_custom_call.1} parent=1 // loop_pre_header
      _
    $region3: #{tpu_custom_call.1} parent=1 // loop_header
      %s24 = sphi 0, %s28
      %p25 = scmp.ge.s32.totalorder %s24, 4
      %s34 = sphi 0, %s36
      %s37 = sphi 0, %s34
      %s38 = sphi 0, %s37
      %s54 = sphi 0, %s38
      %s58 = sphi 0, %s58
      %s60 = sphi 0, %s58
      %s61 = sphi 0, %s60
      %s75 = sphi 0, %s61
      %s79 = sphi 0, %s79
      %s81 = sphi 0, %s79
      %s82 = sphi 0, %s81
      %s96 = sphi 0, %s82
      %s100 = sphi 0, %s100
      %s102 = sphi 0, %s100
      %s103 = sphi 0, %s102
      %s117 = sphi 0, %s103
      %s121 = sphi 0, %s121
      %s123 = sphi 0, %s121
      %s124 = sphi 0, %s123
      %s138 = sphi 0, %s124
      %s142 = sphi 0, %s142
      %s144 = sphi 0, %s142
      %s145 = sphi 0, %s144
      %s159 = sphi 0, %s145
      %s163 = sphi 0, %s163
      %s165 = sphi 0, %s163
      %s166 = sphi 0, %s165
      %s180 = sphi 0, %s166
      %s184 = sphi 0, %s184
      %s186 = sphi 0, %s184
      %s187 = sphi 0, %s186
      %s201 = sphi 0, %s187
      %s205 = sphi 0, %s205
      %s207 = sphi 0, %s205
      %s208 = sphi 0, %s207
      %s222 = sphi 0, %s208
      %s226 = sphi 0, %s226
      %s228 = sphi 0, %s226
      %s229 = sphi 0, %s228
      %s243 = sphi 0, %s229
      %s247 = sphi 0, %s247
      %s249 = sphi 0, %s247
      %s250 = sphi 0, %s249
      %s264 = sphi 0, %s250
      %s268 = sphi 0, %s268
      %s270 = sphi 0, %s268
      %s271 = sphi 0, %s270
      %s285 = sphi 0, %s271
      %s289 = sphi 0, %s289
      %s291 = sphi 0, %s289
      %s292 = sphi 0, %s291
      %s306 = sphi 0, %s292
      %s310 = sphi 0, %s310
      %s312 = sphi 0, %s310
      %s313 = sphi 0, %s312
      %s327 = sphi 0, %s313
      %s331 = sphi 0, %s331
      %s333 = sphi 0, %s331
      %s334 = sphi 0, %s333
      %s348 = sphi 0, %s334
      %s354 = sphi 0, %s356
      %s357 = sphi 0, %s354
      %s358 = sphi 0, %s357
      %s374 = sphi 0, %s358
    $region4: #{tpu_custom_call.1} parent=1 // loop_header_branch
      %27 = sbr.rel (%p25) target = $region8
    $region5: #{tpu_custom_call.1} parent=1 // loop_body
      %s29 = ssub.s32 %s24, 1
      %s30 = ssub.s32 %s24, 2
      %s31 = sadd.s32 %s24, 1
      %s32 = ssub.s32 %s24, %s31
      %p33 = scmp.eq.s32.totalorder %s32, 0
      %s35 = sadd.s32 %s34, 1
      %s36 = scalar_select %p33, %s34, %s35
      %p39 = pneg %p33
      %p40 = scmp.eq.s32.totalorder %s24, 1
      %p41 = por %p39, %p40
      %p42 = scmp.ne.s32.totalorder %s34, %s37
      %p43 = scmp.eq.s32.totalorder %s24, 0
      %p44 = por %p42, %p43
      %p45 = scmp.ne.s32.totalorder %s34, %s37
      %p46 = scmp.eq.s32.totalorder %s29, 1
      %p47 = por %p45, %p46
      %p48 = scmp.ne.s32.totalorder %s37, %s38
      %p49 = scmp.eq.s32.totalorder %s29, 0
      %p50 = por %p48, %p49
      %p51 = scmp.ne.s32.totalorder %s37, %s38
      %p52 = scmp.eq.s32.totalorder %s30, 1
      %p53 = por %p51, %p52
      %p55 = scmp.ne.s32.totalorder %s38, %s54
      %p56 = scmp.eq.s32.totalorder %s30, 0
      %p57 = por %p55, %p56
      %s59 = sadd.s32 %s58, 1
      %p62 = scmp.eq.s32.totalorder %s24, 1
      %p63 = scmp.ne.s32.totalorder %s58, %s60
      %p64 = scmp.eq.s32.totalorder %s24, 0
      %p65 = por %p63, %p64
      %p66 = scmp.ne.s32.totalorder %s58, %s60
      %p67 = scmp.eq.s32.totalorder %s29, 1
      %p68 = por %p66, %p67
      %p69 = scmp.ne.s32.totalorder %s60, %s61
      %p70 = scmp.eq.s32.totalorder %s29, 0
      %p71 = por %p69, %p70
      %p72 = scmp.ne.s32.totalorder %s60, %s61
      %p73 = scmp.eq.s32.totalorder %s30, 1
      %p74 = por %p72, %p73
      %p76 = scmp.ne.s32.totalorder %s61, %s75
      %p77 = scmp.eq.s32.totalorder %s30, 0
      %p78 = por %p76, %p77
      %s80 = sadd.s32 %s79, 1
      %p83 = scmp.eq.s32.totalorder %s24, 1
      %p84 = scmp.ne.s32.totalorder %s79, %s81
      %p85 = scmp.eq.s32.totalorder %s24, 0
      %p86 = por %p84, %p85
      %p87 = scmp.ne.s32.totalorder %s79, %s81
      %p88 = scmp.eq.s32.totalorder %s29, 1
      %p89 = por %p87, %p88
      %p90 = scmp.ne.s32.totalorder %s81, %s82
      %p91 = scmp.eq.s32.totalorder %s29, 0
      %p92 = por %p90, %p91
      %p93 = scmp.ne.s32.totalorder %s81, %s82
      %p94 = scmp.eq.s32.totalorder %s30, 1
      %p95 = por %p93, %p94
      %p97 = scmp.ne.s32.totalorder %s82, %s96
      %p98 = scmp.eq.s32.totalorder %s30, 0
      %p99 = por %p97, %p98
      %s101 = sadd.s32 %s100, 1
      %p104 = scmp.eq.s32.totalorder %s24, 1
      %p105 = scmp.ne.s32.totalorder %s100, %s102
      %p106 = scmp.eq.s32.totalorder %s24, 0
      %p107 = por %p105, %p106
      %p108 = scmp.ne.s32.totalorder %s100, %s102
      %p109 = scmp.eq.s32.totalorder %s29, 1
      %p110 = por %p108, %p109
      %p111 = scmp.ne.s32.totalorder %s102, %s103
      %p112 = scmp.eq.s32.totalorder %s29, 0
      %p113 = por %p111, %p112
      %p114 = scmp.ne.s32.totalorder %s102, %s103
      %p115 = scmp.eq.s32.totalorder %s30, 1
      %p116 = por %p114, %p115
      %p118 = scmp.ne.s32.totalorder %s103, %s117
      %p119 = scmp.eq.s32.totalorder %s30, 0
      %p120 = por %p118, %p119
      %s122 = sadd.s32 %s121, 1
      %p125 = scmp.eq.s32.totalorder %s24, 1
      %p126 = scmp.ne.s32.totalorder %s121, %s123
      %p127 = scmp.eq.s32.totalorder %s24, 0
      %p128 = por %p126, %p127
      %p129 = scmp.ne.s32.totalorder %s121, %s123
      %p130 = scmp.eq.s32.totalorder %s29, 1
      %p131 = por %p129, %p130
      %p132 = scmp.ne.s32.totalorder %s123, %s124
      %p133 = scmp.eq.s32.totalorder %s29, 0
      %p134 = por %p132, %p133
      %p135 = scmp.ne.s32.totalorder %s123, %s124
      %p136 = scmp.eq.s32.totalorder %s30, 1
      %p137 = por %p135, %p136
      %p139 = scmp.ne.s32.totalorder %s124, %s138
      %p140 = scmp.eq.s32.totalorder %s30, 0
      %p141 = por %p139, %p140
      %s143 = sadd.s32 %s142, 1
      %p146 = scmp.eq.s32.totalorder %s24, 1
      %p147 = scmp.ne.s32.totalorder %s142, %s144
      %p148 = scmp.eq.s32.totalorder %s24, 0
      %p149 = por %p147, %p148
      %p150 = scmp.ne.s32.totalorder %s142, %s144
      %p151 = scmp.eq.s32.totalorder %s29, 1
      %p152 = por %p150, %p151
      %p153 = scmp.ne.s32.totalorder %s144, %s145
      %p154 = scmp.eq.s32.totalorder %s29, 0
      %p155 = por %p153, %p154
      %p156 = scmp.ne.s32.totalorder %s144, %s145
      %p157 = scmp.eq.s32.totalorder %s30, 1
      %p158 = por %p156, %p157
      %p160 = scmp.ne.s32.totalorder %s145, %s159
      %p161 = scmp.eq.s32.totalorder %s30, 0
      %p162 = por %p160, %p161
      %s164 = sadd.s32 %s163, 1
      %p167 = scmp.eq.s32.totalorder %s24, 1
      %p168 = scmp.ne.s32.totalorder %s163, %s165
      %p169 = scmp.eq.s32.totalorder %s24, 0
      %p170 = por %p168, %p169
      %p171 = scmp.ne.s32.totalorder %s163, %s165
      %p172 = scmp.eq.s32.totalorder %s29, 1
      %p173 = por %p171, %p172
      %p174 = scmp.ne.s32.totalorder %s165, %s166
      %p175 = scmp.eq.s32.totalorder %s29, 0
      %p176 = por %p174, %p175
      %p177 = scmp.ne.s32.totalorder %s165, %s166
      %p178 = scmp.eq.s32.totalorder %s30, 1
      %p179 = por %p177, %p178
      %p181 = scmp.ne.s32.totalorder %s166, %s180
      %p182 = scmp.eq.s32.totalorder %s30, 0
      %p183 = por %p181, %p182
      %s185 = sadd.s32 %s184, 1
      %p188 = scmp.eq.s32.totalorder %s24, 1
      %p189 = scmp.ne.s32.totalorder %s184, %s186
      %p190 = scmp.eq.s32.totalorder %s24, 0
      %p191 = por %p189, %p190
      %p192 = scmp.ne.s32.totalorder %s184, %s186
      %p193 = scmp.eq.s32.totalorder %s29, 1
      %p194 = por %p192, %p193
      %p195 = scmp.ne.s32.totalorder %s186, %s187
      %p196 = scmp.eq.s32.totalorder %s29, 0
      %p197 = por %p195, %p196
      %p198 = scmp.ne.s32.totalorder %s186, %s187
      %p199 = scmp.eq.s32.totalorder %s30, 1
      %p200 = por %p198, %p199
      %p202 = scmp.ne.s32.totalorder %s187, %s201
      %p203 = scmp.eq.s32.totalorder %s30, 0
      %p204 = por %p202, %p203
      %s206 = sadd.s32 %s205, 1
      %p209 = scmp.eq.s32.totalorder %s24, 1
      %p210 = scmp.ne.s32.totalorder %s205, %s207
      %p211 = scmp.eq.s32.totalorder %s24, 0
      %p212 = por %p210, %p211
      %p213 = scmp.ne.s32.totalorder %s205, %s207
      %p214 = scmp.eq.s32.totalorder %s29, 1
      %p215 = por %p213, %p214
      %p216 = scmp.ne.s32.totalorder %s207, %s208
      %p217 = scmp.eq.s32.totalorder %s29, 0
      %p218 = por %p216, %p217
      %p219 = scmp.ne.s32.totalorder %s207, %s208
      %p220 = scmp.eq.s32.totalorder %s30, 1
      %p221 = por %p219, %p220
      %p223 = scmp.ne.s32.totalorder %s208, %s222
      %p224 = scmp.eq.s32.totalorder %s30, 0
      %p225 = por %p223, %p224
      %s227 = sadd.s32 %s226, 1
      %p230 = scmp.eq.s32.totalorder %s24, 1
      %p231 = scmp.ne.s32.totalorder %s226, %s228
      %p232 = scmp.eq.s32.totalorder %s24, 0
      %p233 = por %p231, %p232
      %p234 = scmp.ne.s32.totalorder %s226, %s228
      %p235 = scmp.eq.s32.totalorder %s29, 1
      %p236 = por %p234, %p235
      %p237 = scmp.ne.s32.totalorder %s228, %s229
      %p238 = scmp.eq.s32.totalorder %s29, 0
      %p239 = por %p237, %p238
      %p240 = scmp.ne.s32.totalorder %s228, %s229
      %p241 = scmp.eq.s32.totalorder %s30, 1
      %p242 = por %p240, %p241
      %p244 = scmp.ne.s32.totalorder %s229, %s243
      %p245 = scmp.eq.s32.totalorder %s30, 0
      %p246 = por %p244, %p245
      %s248 = sadd.s32 %s247, 1
      %p251 = scmp.eq.s32.totalorder %s24, 1
      %p252 = scmp.ne.s32.totalorder %s247, %s249
      %p253 = scmp.eq.s32.totalorder %s24, 0
      %p254 = por %p252, %p253
      %p255 = scmp.ne.s32.totalorder %s247, %s249
      %p256 = scmp.eq.s32.totalorder %s29, 1
      %p257 = por %p255, %p256
      %p258 = scmp.ne.s32.totalorder %s249, %s250
      %p259 = scmp.eq.s32.totalorder %s29, 0
      %p260 = por %p258, %p259
      %p261 = scmp.ne.s32.totalorder %s249, %s250
      %p262 = scmp.eq.s32.totalorder %s30, 1
      %p263 = por %p261, %p262
      %p265 = scmp.ne.s32.totalorder %s250, %s264
      %p266 = scmp.eq.s32.totalorder %s30, 0
      %p267 = por %p265, %p266
      %s269 = sadd.s32 %s268, 1
      %p272 = scmp.eq.s32.totalorder %s24, 1
      %p273 = scmp.ne.s32.totalorder %s268, %s270
      %p274 = scmp.eq.s32.totalorder %s24, 0
      %p275 = por %p273, %p274
      %p276 = scmp.ne.s32.totalorder %s268, %s270
      %p277 = scmp.eq.s32.totalorder %s29, 1
      %p278 = por %p276, %p277
      %p279 = scmp.ne.s32.totalorder %s270, %s271
      %p280 = scmp.eq.s32.totalorder %s29, 0
      %p281 = por %p279, %p280
      %p282 = scmp.ne.s32.totalorder %s270, %s271
      %p283 = scmp.eq.s32.totalorder %s30, 1
      %p284 = por %p282, %p283
      %p286 = scmp.ne.s32.totalorder %s271, %s285
      %p287 = scmp.eq.s32.totalorder %s30, 0
      %p288 = por %p286, %p287
      %s290 = sadd.s32 %s289, 1
      %p293 = scmp.eq.s32.totalorder %s24, 1
      %p294 = scmp.ne.s32.totalorder %s289, %s291
      %p295 = scmp.eq.s32.totalorder %s24, 0
      %p296 = por %p294, %p295
      %p297 = scmp.ne.s32.totalorder %s289, %s291
      %p298 = scmp.eq.s32.totalorder %s29, 1
      %p299 = por %p297, %p298
      %p300 = scmp.ne.s32.totalorder %s291, %s292
      %p301 = scmp.eq.s32.totalorder %s29, 0
      %p302 = por %p300, %p301
      %p303 = scmp.ne.s32.totalorder %s291, %s292
      %p304 = scmp.eq.s32.totalorder %s30, 1
      %p305 = por %p303, %p304
      %p307 = scmp.ne.s32.totalorder %s292, %s306
      %p308 = scmp.eq.s32.totalorder %s30, 0
      %p309 = por %p307, %p308
      %s311 = sadd.s32 %s310, 1
      %p314 = scmp.eq.s32.totalorder %s24, 1
      %p315 = scmp.ne.s32.totalorder %s310, %s312
      %p316 = scmp.eq.s32.totalorder %s24, 0
      %p317 = por %p315, %p316
      %p318 = scmp.ne.s32.totalorder %s310, %s312
      %p319 = scmp.eq.s32.totalorder %s29, 1
      %p320 = por %p318, %p319
      %p321 = scmp.ne.s32.totalorder %s312, %s313
      %p322 = scmp.eq.s32.totalorder %s29, 0
      %p323 = por %p321, %p322
      %p324 = scmp.ne.s32.totalorder %s312, %s313
      %p325 = scmp.eq.s32.totalorder %s30, 1
      %p326 = por %p324, %p325
      %p328 = scmp.ne.s32.totalorder %s313, %s327
      %p329 = scmp.eq.s32.totalorder %s30, 0
      %p330 = por %p328, %p329
      %s332 = sadd.s32 %s331, 1
      %p335 = scmp.eq.s32.totalorder %s24, 1
      %p336 = scmp.ne.s32.totalorder %s331, %s333
      %p337 = scmp.eq.s32.totalorder %s24, 0
      %p338 = por %p336, %p337
      %p339 = scmp.ne.s32.totalorder %s331, %s333
      %p340 = scmp.eq.s32.totalorder %s29, 1
      %p341 = por %p339, %p340
      %p342 = scmp.ne.s32.totalorder %s333, %s334
      %p343 = scmp.eq.s32.totalorder %s29, 0
      %p344 = por %p342, %p343
      %p345 = scmp.ne.s32.totalorder %s333, %s334
      %p346 = scmp.eq.s32.totalorder %s30, 1
      %p347 = por %p345, %p346
      %p349 = scmp.ne.s32.totalorder %s334, %s348
      %p350 = scmp.eq.s32.totalorder %s30, 0
      %p351 = por %p349, %p350
      %s352 = ssub.s32 %s24, %s31
      %p353 = scmp.eq.s32.totalorder %s352, 0
      %s355 = sadd.s32 %s354, 1
      %s356 = scalar_select %p353, %s354, %s355
      %p359 = pneg %p353
      %p360 = scmp.eq.s32.totalorder %s24, 1
      %p361 = por %p359, %p360
      %p362 = scmp.ne.s32.totalorder %s354, %s357
      %p363 = scmp.eq.s32.totalorder %s24, 0
      %p364 = por %p362, %p363
      %p365 = scmp.ne.s32.totalorder %s354, %s357
      %p366 = scmp.eq.s32.totalorder %s29, 1
      %p367 = por %p365, %p366
      %p368 = scmp.ne.s32.totalorder %s357, %s358
      %p369 = scmp.eq.s32.totalorder %s29, 0
      %p370 = por %p368, %p369
      %p371 = scmp.ne.s32.totalorder %s357, %s358
      %p372 = scmp.eq.s32.totalorder %s30, 1
      %p373 = por %p371, %p372
      %p375 = scmp.ne.s32.totalorder %s358, %s374
      %p376 = scmp.eq.s32.totalorder %s30, 0
      %p377 = por %p375, %p376
      %p378 = scmp.le.s32.totalorder 1, %s24
      %p379 = scmp.lt.s32.totalorder %s24, 3
      %p380 = pnand %p378, %p379
      %p381 = pneg %p380
      // Predicated region
      $region9: #{tpu_custom_call.1} parent=5 // pred_check
        _
      $region10: #{tpu_custom_call.1} parent=5 // pred_check_branch
        %383 = sbr.rel (%p380) target = $region12
      $region11: #{tpu_custom_call.1} parent=5 // pred_region
        %s384 = ssub.s32 %s24, 1
        // Predicated region
        $region13: #{tpu_custom_call.1} parent=11 // pred_check
          %p385 = pneg %p71
        $region14: #{tpu_custom_call.1} parent=11 // pred_check_branch
          %387 = sbr.rel (%p385) target = $region16
        $region15: #{tpu_custom_call.1} parent=11 // pred_region
          _
        $region16: #{tpu_custom_call.1} parent=11 // pred_fallthru
          _
        // Predicated region
        $region17: #{tpu_custom_call.1} parent=11 // pred_check
          %p388 = pneg %p92
        $region18: #{tpu_custom_call.1} parent=11 // pred_check_branch
          %390 = sbr.rel (%p388) target = $region20
        $region19: #{tpu_custom_call.1} parent=11 // pred_region
          _
        $region20: #{tpu_custom_call.1} parent=11 // pred_fallthru
          _
        // Predicated region
        $region21: #{tpu_custom_call.1} parent=11 // pred_check
          %p391 = pneg %p113
        $region22: #{tpu_custom_call.1} parent=11 // pred_check_branch
          %393 = sbr.rel (%p391) target = $region24
        $region23: #{tpu_custom_call.1} parent=11 // pred_region
          _
        $region24: #{tpu_custom_call.1} parent=11 // pred_fallthru
          _
        // Predicated region
        $region25: #{tpu_custom_call.1} parent=11 // pred_check
          %p394 = pneg %p134
        $region26: #{tpu_custom_call.1} parent=11 // pred_check_branch
          %396 = sbr.rel (%p394) target = $region28
        $region27: #{tpu_custom_call.1} parent=11 // pred_region
          _
        $region28: #{tpu_custom_call.1} parent=11 // pred_fallthru
          _
        // Predicated region
        $region29: #{tpu_custom_call.1} parent=11 // pred_check
          %p397 = pneg %p155
        $region30: #{tpu_custom_call.1} parent=11 // pred_check_branch
          %399 = sbr.rel (%p397) target = $region32
        $region31: #{tpu_custom_call.1} parent=11 // pred_region
          _
        $region32: #{tpu_custom_call.1} parent=11 // pred_fallthru
          _
        // Predicated region
        $region33: #{tpu_custom_call.1} parent=11 // pred_check
          %p400 = pneg %p176
        $region34: #{tpu_custom_call.1} parent=11 // pred_check_branch
          %402 = sbr.rel (%p400) target = $region36
        $region35: #{tpu_custom_call.1} parent=11 // pred_region
          %s404 = ssub.s32 128, 128
          %405 = vsyncadd [#allocation3], %s404
          %s407 = sshll.u32 [#allocation2], 4
          %s408 = int_to_ptr.vmem [resolvable:$true] %s407
          %410 = dma.hbm_to_vmem [thread:$0]  %s6, 128, %s408, [#allocation3]
        $region36: #{tpu_custom_call.1} parent=11 // pred_fallthru
          _
        // Predicated region
        $region37: #{tpu_custom_call.1} parent=11 // pred_check
          %p411 = pneg %p197
        $region38: #{tpu_custom_call.1} parent=11 // pred_check_branch
          %413 = sbr.rel (%p411) target = $region40
        $region39: #{tpu_custom_call.1} parent=11 // pred_region
          %s415 = ssub.s32 128, 128
          %416 = vsyncadd [#allocation5], %s415
          %s418 = sshll.u32 [#allocation4], 4
          %s419 = int_to_ptr.vmem [resolvable:$true] %s418
          %421 = dma.hbm_to_vmem [thread:$0]  %s7, 128, %s419, [#allocation5]
        $region40: #{tpu_custom_call.1} parent=11 // pred_fallthru
          _
        // Predicated region
        $region41: #{tpu_custom_call.1} parent=11 // pred_check
          %p422 = pneg %p218
        $region42: #{tpu_custom_call.1} parent=11 // pred_check_branch
          %424 = sbr.rel (%p422) target = $region44
        $region43: #{tpu_custom_call.1} parent=11 // pred_region
          %s426 = ssub.s32 128, 128
          %427 = vsyncadd [#allocation5], %s426
          %s429 = sshll.u32 [#allocation6], 4
          %s430 = int_to_ptr.vmem [resolvable:$true] %s429
          %432 = dma.hbm_to_vmem [thread:$0]  %s8, 128, %s430, [#allocation5]
        $region44: #{tpu_custom_call.1} parent=11 // pred_fallthru
          _
        // Predicated region
        $region45: #{tpu_custom_call.1} parent=11 // pred_check
          %p433 = pneg %p239
        $region46: #{tpu_custom_call.1} parent=11 // pred_check_branch
          %435 = sbr.rel (%p433) target = $region48
        $region47: #{tpu_custom_call.1} parent=11 // pred_region
          _
        $region48: #{tpu_custom_call.1} parent=11 // pred_fallthru
          _
        // Predicated region
        $region49: #{tpu_custom_call.1} parent=11 // pred_check
          %p436 = pneg %p260
        $region50: #{tpu_custom_call.1} parent=11 // pred_check_branch
          %438 = sbr.rel (%p436) target = $region52
        $region51: #{tpu_custom_call.1} parent=11 // pred_region
          _
        $region52: #{tpu_custom_call.1} parent=11 // pred_fallthru
          _
        // Predicated region
        $region53: #{tpu_custom_call.1} parent=11 // pred_check
          %p439 = pneg %p281
        $region54: #{tpu_custom_call.1} parent=11 // pred_check_branch
          %441 = sbr.rel (%p439) target = $region56
        $region55: #{tpu_custom_call.1} parent=11 // pred_region
          _
        $region56: #{tpu_custom_call.1} parent=11 // pred_fallthru
          _
        // Predicated region
        $region57: #{tpu_custom_call.1} parent=11 // pred_check
          %p442 = pneg %p302
        $region58: #{tpu_custom_call.1} parent=11 // pred_check_branch
          %444 = sbr.rel (%p442) target = $region60
        $region59: #{tpu_custom_call.1} parent=11 // pred_region
          %s446 = ssub.s32 64, 64
          %447 = vsyncadd [#allocation8], %s446
          %s449 = sshll.u32 [#allocation7], 4
          %s450 = int_to_ptr.vmem [resolvable:$true] %s449
          %452 = dma.hbm_to_vmem [thread:$0]  %s12, 64, %s450, [#allocation8]
        $region60: #{tpu_custom_call.1} parent=11 // pred_fallthru
          _
        // Predicated region
        $region61: #{tpu_custom_call.1} parent=11 // pred_check
          %p453 = pneg %p323
        $region62: #{tpu_custom_call.1} parent=11 // pred_check_branch
          %455 = sbr.rel (%p453) target = $region64
        $region63: #{tpu_custom_call.1} parent=11 // pred_region
          %s457 = ssub.s32 64, 64
          %458 = vsyncadd [#allocation8], %s457
          %s460 = sshll.u32 [#allocation9], 4
          %s461 = int_to_ptr.vmem [resolvable:$true] %s460
          %463 = dma.hbm_to_vmem [thread:$0]  %s13, 64, %s461, [#allocation8]
        $region64: #{tpu_custom_call.1} parent=11 // pred_fallthru
          _
        // Predicated region
        $region65: #{tpu_custom_call.1} parent=11 // pred_check
          %p464 = pneg %p344
        $region66: #{tpu_custom_call.1} parent=11 // pred_check_branch
          %466 = sbr.rel (%p464) target = $region68
        $region67: #{tpu_custom_call.1} parent=11 // pred_region
          _
        $region68: #{tpu_custom_call.1} parent=11 // pred_fallthru
          _
      $region12: #{tpu_custom_call.1} parent=5 // pred_fallthru
        _
      %p467 = scmp.lt.s32.totalorder %s24, 2
      // Predicated region
      $region69: #{tpu_custom_call.1} parent=5 // pred_check
        %p468 = pneg %p467
      $region70: #{tpu_custom_call.1} parent=5 // pred_check_branch
        %470 = sbr.rel (%p468) target = $region72
      $region71: #{tpu_custom_call.1} parent=5 // pred_region
        // Predicated region
        $region73: #{tpu_custom_call.1} parent=71 // pred_check
          %p471 = pneg %p44
        $region74: #{tpu_custom_call.1} parent=71 // pred_check_branch
          %473 = sbr.rel (%p471) target = $region76
        $region75: #{tpu_custom_call.1} parent=71 // pred_region
          %p474 = scmp.lt.s32.totalorder %s24, 1
          %s475 = scalar_select %p474, %s24, 1
          %s476 = smul.addr %s475, 2
          %s477 = smul.addr %s476, 4
          %s478 = scalar_lea.vmem %s0, %s477
        $region76: #{tpu_custom_call.1} parent=71 // pred_fallthru
          _
      $region72: #{tpu_custom_call.1} parent=5 // pred_fallthru
        _
      %p479 = scmp.le.s32.totalorder 1, %s24
      %p480 = scmp.lt.s32.totalorder %s24, 3
      %p481 = pnand %p479, %p480
      %p482 = pneg %p481
      // Predicated region
      $region77: #{tpu_custom_call.1} parent=5 // pred_check
        _
      $region78: #{tpu_custom_call.1} parent=5 // pred_check_branch
        %484 = sbr.rel (%p481) target = $region80
      $region79: #{tpu_custom_call.1} parent=5 // pred_region
        %s485 = ssub.s32 %s24, 1
        // Predicated region
        $region81: #{tpu_custom_call.1} parent=79 // pred_check
          %p486 = pneg %p176
        $region82: #{tpu_custom_call.1} parent=79 // pred_check_branch
          %488 = sbr.rel (%p486) target = $region84
        $region83: #{tpu_custom_call.1} parent=79 // pred_region
          %489 = dma.done [#allocation3], 128
        $region84: #{tpu_custom_call.1} parent=79 // pred_fallthru
          _
        // Predicated region
        $region85: #{tpu_custom_call.1} parent=79 // pred_check
          %p490 = pneg %p197
        $region86: #{tpu_custom_call.1} parent=79 // pred_check_branch
          %492 = sbr.rel (%p490) target = $region88
        $region87: #{tpu_custom_call.1} parent=79 // pred_region
          %493 = dma.done [#allocation5], 128
        $region88: #{tpu_custom_call.1} parent=79 // pred_fallthru
          _
        // Predicated region
        $region89: #{tpu_custom_call.1} parent=79 // pred_check
          %p494 = pneg %p218
        $region90: #{tpu_custom_call.1} parent=79 // pred_check_branch
          %496 = sbr.rel (%p494) target = $region92
        $region91: #{tpu_custom_call.1} parent=79 // pred_region
          %497 = dma.done [#allocation5], 128
        $region92: #{tpu_custom_call.1} parent=79 // pred_fallthru
          _
        // Predicated region
        $region93: #{tpu_custom_call.1} parent=79 // pred_check
          %p498 = pneg %p302
        $region94: #{tpu_custom_call.1} parent=79 // pred_check_branch
          %500 = sbr.rel (%p498) target = $region96
        $region95: #{tpu_custom_call.1} parent=79 // pred_region
          %501 = dma.done [#allocation8], 64
        $region96: #{tpu_custom_call.1} parent=79 // pred_fallthru
          _
        // Predicated region
        $region97: #{tpu_custom_call.1} parent=79 // pred_check
          %p502 = pneg %p323
        $region98: #{tpu_custom_call.1} parent=79 // pred_check_branch
          %504 = sbr.rel (%p502) target = $region100
        $region99: #{tpu_custom_call.1} parent=79 // pred_region
          %505 = dma.done [#allocation8], 64
        $region100: #{tpu_custom_call.1} parent=79 // pred_fallthru
          _
        %p506 = scmp.lt.s32.totalorder %s29, 1
        %s507 = scalar_select %p506, %s29, 1
        %s508 = smul.addr %s507, 2
        %s509 = smul.addr %s508, 4
        %s510 = scalar_lea.vmem %s0, %s509
        %p511 = pneg %p50
        %p512 = pneg %p47
        %p513 = pneg %p71
        %p514 = pneg %p68
        %p515 = pneg %p92
        %p516 = pneg %p89
        %p517 = pneg %p113
        %p518 = pneg %p110
        %p519 = pneg %p134
        %p520 = pneg %p131
        %p521 = pneg %p155
        %p522 = pneg %p152
        %p523 = pneg %p176
        %p524 = pneg %p173
        %p525 = pneg %p197
        %p526 = pneg %p194
        %p527 = pneg %p218
        %p528 = pneg %p215
        %p529 = pneg %p239
        %p530 = pneg %p236
        %p531 = pneg %p260
        %p532 = pneg %p257
        %p533 = pneg %p281
        %p534 = pneg %p278
        %p535 = pneg %p302
        %p536 = pneg %p299
        %p537 = pneg %p323
        %p538 = pneg %p320
        %p539 = pneg %p344
        %p540 = pneg %p341
        %p541 = pneg %p370
        %p542 = pneg %p367
        %p543 = scmp.lt.s32.totalorder %s29, 1
        %s544 = scalar_select %p543, %s29, 1
        %s545 = smul.addr %s544, 2
        %s546 = smul.addr %s545, 4
        %s547 = scalar_lea.vmem %s15, %s546
        %p548 = scmp.lt.s32.totalorder %s29, 1
        %s549 = scalar_select %p548, %s29, 1
        %s550 = smul.addr %s549, 2
        %s551 = smul.addr %s550, 4
        %s552 = scalar_lea.vmem %s0, %s551
        %p553 = scmp.lt.s32.totalorder %s29, 1
        %s554 = scalar_select %p553, %s29, 1
        %s555 = smul.addr %s554, 2
        %s556 = smul.addr %s555, 4
        %s557 = scalar_lea.vmem %s15, %s556
        %v558 = vlaneseq
        %v559 = vand.u32 %v558, 127
        %v560 = vadd.s32 %v559, 128
        %vm561 = vcmp.lt.s32.totalorder %v559, 0
        %v562 = vsub.s32 0, %v559
        %v563 = vsel %vm561, %v562, %v559
        %v564 = vshrl.u32 %v563, 4
        %v565 = vand.u32 %v563, 15
        %v566 = vsub.s32 0, %v565
        %v567 = vsel %vm561, %v566, %v565
        %vm568 = vcmp.lt.s32.totalorder %v560, 0
        %v569 = vsub.s32 0, %v560
        %v570 = vsel %vm568, %v569, %v560
        %v571 = vshrl.u32 %v570, 4
        %v572 = vand.u32 %v570, 15
        %v573 = vsub.s32 0, %v572
        %v574 = vsel %vm568, %v573, %v572
        %vm575 = vcmp.ne.s32.totalorder %v567, 0
        %vm576 = vcmp.ne.s32.totalorder %v574, 0
        %vm577 = vcmp.lt.s32.totalorder %v567, 0
        %vm578 = vcmp.lt.s32.totalorder %v574, 0
        %vm579 = vmand %vm577, %vm575
        %vm580 = vmand %vm578, %vm576
        %v581 = vadd.s32 %v567, 16
        %v582 = vadd.s32 %v574, 16
        %v583 = vsel %vm579, %v581, %v567
        %v584 = vsel %vm580, %v582, %v574
        %v585 = vadd.s32 %v583, 4294967295
        %v586 = vadd.s32 %v584, 4294967295
        %vm587 = vcmp.ge.s32.totalorder %v585, 0
        %vm588 = vcmp.ge.s32.totalorder %v586, 0
        %vm589 = vcmp.lt.s32.totalorder %v585, 16
        %vm590 = vcmp.lt.s32.totalorder %v586, 16
        %vm591 = vmand %vm587, %vm589
        %vm592 = vmand %vm588, %vm590
        %v593 = vsel %vm591, 1, 0
        %v594 = vsel %vm592, 1, 0
        %v595 = vcvt.s32.f32 %v593
        %v596 = vcvt.s32.f32 %v594
        %v597 = vadd.s32 %v583, 1
        %v598 = vadd.s32 %v584, 1
        %vm599 = vcmp.ge.s32.totalorder %v597, 0
        %vm600 = vcmp.ge.s32.totalorder %v598, 0
        %vm601 = vcmp.lt.s32.totalorder %v597, 16
        %vm602 = vcmp.lt.s32.totalorder %v598, 16
        %vm603 = vmand %vm599, %vm601
        %vm604 = vmand %vm600, %vm602
        %v605 = vsel %vm603, 1, 0
        %v606 = vsel %vm604, 1, 0
        %v607 = vcvt.s32.f32 %v605
        %v608 = vcvt.s32.f32 %v606
        %v609 = vld [vmem:[%s552] sm:$0x77]
        %v610 = vld [vmem:[%s1] sm:$0xff]
        %v611 = vld [vmem:[%s2] sm:$0xff]
        %v612 = vld [vmem:[%s3] sm:$0xff]
        %v614 = vcombine.high %v609, %v609
        %vm615 = vcmask 23552
        %v617 = vsel %vm615, %v612, 0
        %vm619 = vcmask 1042432
        %v620 = vsel %vm619, %v609, 0
        %v622 = vsel %vm619, %v614, 0
        %624 = vmatprep.subr.mxu0 0.0
        %625 = vmatpush1.msra.mxu0 0.0
        %626 = vmatprep.subr.mxu0 0.0
        %627 = vmatpush1.msra.mxu0 0.0
        %628 = vmatprep.subr.mxu0 0.0
        %629 = vmatpush1.msra.mxu0 0.0
        %630 = vmatprep.subr.mxu0 0.0
        %631 = vmatpush1.msra.mxu0 0.0
        %632 = vmatprep.subr.mxu0 0.0
        %633 = vmatpush1.msra.mxu0 0.0
        %634 = vmatprep.subr.mxu0 0.0
        %635 = vmatpush1.msra.mxu0 0.0
        %636 = vmatprep.subr.mxu0 0.0
        %637 = vmatpush1.msra.mxu0 0.0
        %638 = vmatprep.subr.mxu0 0.0
        %639 = vmatpush1.msra.mxu0 0.0
        %640 = vmatprep.subr.mxu0 0.0
        %641 = vmatpush1.msra.mxu0 0.0
        %642 = vmatprep.subr.mxu0 0.0
        %643 = vmatpush1.msra.mxu0 0.0
        %644 = vmatprep.subr.mxu0 0.0
        %645 = vmatpush1.msra.mxu0 0.0
        %646 = vmatprep.subr.mxu0 0.0
        %647 = vmatpush1.msra.mxu0 0.0
        %648 = vmatprep.subr.mxu0 0.0
        %649 = vmatpush1.msra.mxu0 0.0
        %650 = vmatprep.subr.mxu0 0.0
        %651 = vmatpush1.msra.mxu0 0.0
        %652 = vmatprep.subr.mxu0 0.0
        %653 = vmatpush1.msra.mxu0 0.0
        %654 = vmatprep.subr.mxu0 %v622
        %655 = vmatpush1.msra.mxu0 %v620
        %656 = vmatprep.subr.mxu0 0.0
        %657 = vmatpush2.msra.mxu0 0.0
        %658 = vmatprep.subr.mxu0 0.0
        %659 = vmatpush2.msra.mxu0 0.0
        %660 = vmatprep.subr.mxu0 0.0
        %661 = vmatpush2.msra.mxu0 0.0
        %662 = vmatprep.subr.mxu0 0.0
        %663 = vmatpush2.msra.mxu0 0.0
        %664 = vmatprep.subr.mxu0 0.0
        %665 = vmatpush2.msra.mxu0 0.0
        %666 = vmatprep.subr.mxu0 0.0
        %667 = vmatpush2.msra.mxu0 0.0
        %668 = vmatprep.subr.mxu0 0.0
        %669 = vmatpush2.msra.mxu0 0.0
        %670 = vmatprep.subr.mxu0 0.0
        %671 = vmatpush2.msra.mxu0 0.0
        %672 = vmatprep.subr.mxu0 0.0
        %673 = vmatpush2.msra.mxu0 0.0
        %674 = vmatprep.subr.mxu0 0.0
        %675 = vmatpush2.msra.mxu0 0.0
        %676 = vmatprep.subr.mxu0 0.0
        %677 = vmatpush2.msra.mxu0 0.0
        %678 = vmatprep.subr.mxu0 0.0
        %679 = vmatpush2.msra.mxu0 0.0
        %680 = vmatprep.subr.mxu0 0.0
        %681 = vmatpush2.msra.mxu0 0.0
        %682 = vmatprep.subr.mxu0 0.0
        %683 = vmatpush2.msra.mxu0 0.0
        %684 = vmatprep.subr.mxu0 0.0
        %685 = vmatpush2.msra.mxu0 0.0
        %686 = vmatprep.subr.mxu0 0.0
        %687 = vmatpush2.msra.mxu0 0.0
        %688 = vmatprep.mubr.f32.mxu0 0.0
        %689 = vmatmul.mubr.f32.gmra.mxu0 %v617
        %v690 = vpop.f32.mrf.mxu0
        %v691 = vadd.f32 0.0, %v690
        %v692 = vpop.f32.mrf.mxu0
        %v693 = vadd.f32 0.0, %v692
        %694 = vdwg.mxu0
        %vm695 = vcmp.gt.f32.partialorder %v691, 0.0
        %vm696 = vcmp.gt.f32.partialorder %v693, 0.0
        %v697 = vmin.f32 %v691, 0.0
        %v698 = vmin.f32 %v693, 0.0
        %v699 = vmul.f32 %v697, 1.442695
        %v700 = vpow.pop %v699
        %v701 = vmul.f32 %v698, 1.442695
        %v702 = vpow.pop %v701
        %v703 = vsub.f32 %v700, 1.0
        %v704 = vsub.f32 %v702, 1.0
        %v705 = vsel %vm695, %v691, %v703
        %v706 = vsel %vm696, %v693, %v704
        %707 = vrot.lane.b32.xlu0 %v609, 17
        %v708 = vpop.permute.xlu0 %707
        %709 = vrot.lane.b32.xlu0 %v614, 17
        %v710 = vpop.permute.xlu0 %709
        %vm711 = vcmask 138240
        %v712 = vsel %vm711, %v708, %v710
        %v716 = vsel %vm711, 0.0, %v708
        %v717 = vsel %vm711, %v710, 0.0
        %v718 = vmul.f32 %v716, %v595
        %v719 = vmul.f32 %v712, %v596
        %722 = vrot.lane.b32.xlu0 %v607, 2
        %v723 = vpop.permute.xlu0 %722
        %724 = vrot.lane.b32.xlu0 %v608, 2
        %v725 = vpop.permute.xlu0 %724
        %vm726 = vcmask 15360
        %v727 = vsel %vm726, %v723, %v725
        %v731 = vmul.f32 %v716, %v723
        %v732 = vmul.f32 %v712, %v727
        %v733 = vmul.f32 %v717, %v725
        %736 = vrot.lane.b32.xlu0 %v595, 16
        %v737 = vpop.permute.xlu0 %736
        %738 = vrot.lane.b32.xlu0 %v596, 16
        %v739 = vpop.permute.xlu0 %738
        %vm740 = vcmask 130048
        %v741 = vsel %vm740, %v737, %v739
        %v745 = vmul.f32 %v716, %v737
        %v746 = vmul.f32 %v712, %v741
        %v747 = vmul.f32 %v717, %v739
        %748 = vrot.lane.b32.xlu0 %v607, 18
        %v749 = vpop.permute.xlu0 %748
        %750 = vrot.lane.b32.xlu0 %v608, 18
        %v751 = vpop.permute.xlu0 %750
        %vm752 = vcmask 146432
        %v753 = vsel %vm752, %v749, %v751
        %v757 = vmul.f32 %v716, %v749
        %v758 = vmul.f32 %v712, %v753
        %v759 = vmul.f32 %v717, %v751
        %760 = vrot.lane.b32.xlu0 %v595, 32
        %v761 = vpop.permute.xlu0 %760
        %762 = vrot.lane.b32.xlu0 %v596, 32
        %v763 = vpop.permute.xlu0 %762
        %vm764 = vcmask 261120
        %v765 = vsel %vm764, %v761, %v763
        %v769 = vmul.f32 %v716, %v761
        %v770 = vmul.f32 %v712, %v765
        %v771 = vmul.f32 %v717, %v763
        %772 = vrot.lane.b32.xlu0 %v607, 34
        %v773 = vpop.permute.xlu0 %772
        %774 = vrot.lane.b32.xlu0 %v608, 34
        %v775 = vpop.permute.xlu0 %774
        %vm776 = vcmask 277504
        %v777 = vsel %vm776, %v773, %v775
        %v781 = vmul.f32 %v716, %v773
        %v782 = vmul.f32 %v712, %v777
        %v783 = vmul.f32 %v717, %v775
        %v786 = vrot.slane %v716, 5
        %v787 = vrot.slane %v712, 5
        %v788 = vrot.slane %v717, 5
        %789 = vrot.lane.b32.xlu0 %v786, 127
        %v790 = vpop.permute.xlu0 %789
        %791 = vrot.lane.b32.xlu0 %v787, 127
        %v792 = vpop.permute.xlu0 %791
        %793 = vrot.lane.b32.xlu0 %v788, 127
        %v794 = vpop.permute.xlu0 %793
        %vm795 = vcmask 1039360
        %v796 = vsel %vm795, %v790, %v792
        %v797 = vsel %vm795, %v792, %v794
        %v803 = vrot.slane %v731, 2
        %v804 = vrot.slane %v732, 2
        %v805 = vrot.slane %v733, 2
        %806 = vrot.lane.b32.xlu0 %v803, 126
        %v807 = vpop.permute.xlu0 %806
        %808 = vrot.lane.b32.xlu0 %v804, 126
        %v809 = vpop.permute.xlu0 %808
        %810 = vrot.lane.b32.xlu0 %v805, 126
        %v811 = vpop.permute.xlu0 %810
        %vm812 = vcmask 1031168
        %v813 = vsel %vm812, %v807, %v809
        %v814 = vsel %vm812, %v809, %v811
        %v820 = vrot.slane %v745, 7
        %v821 = vrot.slane %v746, 7
        %v822 = vrot.slane %v747, 7
        %823 = vrot.lane.b32.xlu0 %v820, 112
        %v824 = vpop.permute.xlu0 %823
        %825 = vrot.lane.b32.xlu0 %v821, 112
        %v826 = vpop.permute.xlu0 %825
        %827 = vrot.lane.b32.xlu0 %v822, 112
        %v828 = vpop.permute.xlu0 %827
        %vm829 = vcmask 916480
        %v830 = vsel %vm829, %v824, %v826
        %v831 = vsel %vm829, %v826, %v828
        %v834 = vrot.slane %v716, 4
        %v835 = vrot.slane %v712, 4
        %v836 = vrot.slane %v717, 4
        %837 = vrot.lane.b32.xlu0 %v834, 111
        %v838 = vpop.permute.xlu0 %837
        %839 = vrot.lane.b32.xlu0 %v835, 111
        %v840 = vpop.permute.xlu0 %839
        %841 = vrot.lane.b32.xlu0 %v836, 111
        %v842 = vpop.permute.xlu0 %841
        %vm843 = vcmask 908288
        %v844 = vsel %vm843, %v838, %v840
        %v845 = vsel %vm843, %v840, %v842
        %v851 = vrot.slane %v757, 1
        %v852 = vrot.slane %v758, 1
        %v853 = vrot.slane %v759, 1
        %854 = vrot.lane.b32.xlu0 %v851, 110
        %v855 = vpop.permute.xlu0 %854
        %856 = vrot.lane.b32.xlu0 %v852, 110
        %v857 = vpop.permute.xlu0 %856
        %858 = vrot.lane.b32.xlu0 %v853, 110
        %v859 = vpop.permute.xlu0 %858
        %vm860 = vcmask 900096
        %v861 = vsel %vm860, %v855, %v857
        %v862 = vsel %vm860, %v857, %v859
        %v868 = vrot.slane %v769, 6
        %v869 = vrot.slane %v770, 6
        %v870 = vrot.slane %v771, 6
        %871 = vrot.lane.b32.xlu0 %v868, 96
        %v872 = vpop.permute.xlu0 %871
        %873 = vrot.lane.b32.xlu0 %v869, 96
        %v874 = vpop.permute.xlu0 %873
        %875 = vrot.lane.b32.xlu0 %v870, 96
        %v876 = vpop.permute.xlu0 %875
        %vm877 = vcmask 785408
        %v878 = vsel %vm877, %v872, %v874
        %v879 = vsel %vm877, %v874, %v876
        %v882 = vrot.slane %v716, 3
        %v883 = vrot.slane %v712, 3
        %v884 = vrot.slane %v717, 3
        %885 = vrot.lane.b32.xlu0 %v882, 95
        %v886 = vpop.permute.xlu0 %885
        %887 = vrot.lane.b32.xlu0 %v883, 95
        %v888 = vpop.permute.xlu0 %887
        %889 = vrot.lane.b32.xlu0 %v884, 95
        %v890 = vpop.permute.xlu0 %889
        %vm891 = vcmask 777216
        %v892 = vsel %vm891, %v886, %v888
        %v893 = vsel %vm891, %v888, %v890
        %899 = vrot.lane.b32.xlu0 %v781, 94
        %v900 = vpop.permute.xlu0 %899
        %901 = vrot.lane.b32.xlu0 %v782, 94
        %v902 = vpop.permute.xlu0 %901
        %903 = vrot.lane.b32.xlu0 %v783, 94
        %v904 = vpop.permute.xlu0 %903
        %vm905 = vcmask 769024
        %v906 = vsel %vm905, %v900, %v902
        %v907 = vsel %vm905, %v902, %v904
        %v908 = vsel %vm619, %v718, %v796
        %v909 = vsel %vm619, %v719, %v797
        %vm910 = vcmask 1045504
        %v911 = vsel %vm910, %v908, %v813
        %v912 = vsel %vm910, %v909, %v814
        %vm913 = vcmask 1040384
        %v914 = vsel %vm913, %v813, %v830
        %v915 = vsel %vm913, %v814, %v831
        %vm916 = vcmask 1043456
        %v917 = vsel %vm916, %v914, %v844
        %v918 = vsel %vm916, %v915, %v845
        %vm919 = vcmask 1046528
        %v920 = vsel %vm919, %v917, %v861
        %v921 = vsel %vm919, %v918, %v862
        %vm922 = vcmask 1041408
        %v923 = vsel %vm922, %v861, %v878
        %v924 = vsel %vm922, %v862, %v879
        %vm925 = vcmask 1044480
        %v926 = vsel %vm925, %v923, %v892
        %v927 = vsel %vm925, %v924, %v893
        %vm928 = vcmask 220160
        %v930 = vsel %vm928, %v610, 0
        %v932 = vsel %vm619, %v906, 0
        %v934 = vsel %vm619, %v907, 0
        %936 = vmatprep.subr.mxu0 0.0
        %937 = vmatpush1.msra.mxu0 0.0
        %938 = vmatprep.subr.mxu0 0.0
        %939 = vmatpush1.msra.mxu0 0.0
        %940 = vmatprep.subr.mxu0 0.0
        %941 = vmatpush1.msra.mxu0 0.0
        %942 = vmatprep.subr.mxu0 0.0
        %943 = vmatpush1.msra.mxu0 0.0
        %944 = vmatprep.subr.mxu0 0.0
        %945 = vmatpush1.msra.mxu0 0.0
        %946 = vmatprep.subr.mxu0 0.0
        %947 = vmatpush1.msra.mxu0 0.0
        %948 = vmatprep.subr.mxu0 0.0
        %949 = vmatpush1.msra.mxu0 0.0
        %950 = vmatprep.subr.mxu0 0.0
        %951 = vmatpush1.msra.mxu0 0.0
        %952 = vmatprep.subr.mxu0 0.0
        %953 = vmatpush1.msra.mxu0 0.0
        %954 = vmatprep.subr.mxu0 0.0
        %955 = vmatpush1.msra.mxu0 0.0
        %956 = vmatprep.subr.mxu0 0.0
        %957 = vmatpush1.msra.mxu0 0.0
        %958 = vmatprep.subr.mxu0 0.0
        %959 = vmatpush1.msra.mxu0 0.0
        %960 = vmatprep.subr.mxu0 %v934
        %961 = vmatpush1.msra.mxu0 %v932
        %962 = vmatprep.subr.mxu0 %v927
        %963 = vmatpush1.msra.mxu0 %v926
        %964 = vmatprep.subr.mxu0 %v921
        %965 = vmatpush1.msra.mxu0 %v920
        %966 = vmatprep.subr.mxu0 %v912
        %967 = vmatpush1.msra.mxu0 %v911
        %968 = vmatprep.subr.mxu0 0.0
        %969 = vmatpush2.msra.mxu0 0.0
        %970 = vmatprep.subr.mxu0 0.0
        %971 = vmatpush2.msra.mxu0 0.0
        %972 = vmatprep.subr.mxu0 0.0
        %973 = vmatpush2.msra.mxu0 0.0
        %974 = vmatprep.subr.mxu0 0.0
        %975 = vmatpush2.msra.mxu0 0.0
        %976 = vmatprep.subr.mxu0 0.0
        %977 = vmatpush2.msra.mxu0 0.0
        %978 = vmatprep.subr.mxu0 0.0
        %979 = vmatpush2.msra.mxu0 0.0
        %980 = vmatprep.subr.mxu0 0.0
        %981 = vmatpush2.msra.mxu0 0.0
        %982 = vmatprep.subr.mxu0 0.0
        %983 = vmatpush2.msra.mxu0 0.0
        %984 = vmatprep.subr.mxu0 0.0
        %985 = vmatpush2.msra.mxu0 0.0
        %986 = vmatprep.subr.mxu0 0.0
        %987 = vmatpush2.msra.mxu0 0.0
        %988 = vmatprep.subr.mxu0 0.0
        %989 = vmatpush2.msra.mxu0 0.0
        %990 = vmatprep.subr.mxu0 0.0
        %991 = vmatpush2.msra.mxu0 0.0
        %992 = vmatprep.subr.mxu0 0.0
        %993 = vmatpush2.msra.mxu0 0.0
        %994 = vmatprep.subr.mxu0 0.0
        %995 = vmatpush2.msra.mxu0 0.0
        %996 = vmatprep.subr.mxu0 0.0
        %997 = vmatpush2.msra.mxu0 0.0
        %998 = vmatprep.subr.mxu0 0.0
        %999 = vmatpush2.msra.mxu0 0.0
        %1000 = vmatprep.mubr.f32.mxu0 0.0
        %1001 = vmatmul.mubr.f32.gmra.mxu0 %v930
        %v1002 = vpop.f32.mrf.mxu0
        %v1003 = vadd.f32 0.0, %v1002
        %v1004 = vpop.f32.mrf.mxu0
        %v1005 = vadd.f32 0.0, %v1004
        %1006 = vdwg.mxu0
        %vm1007 = vcmp.gt.f32.partialorder %v1003, 0.0
        %vm1008 = vcmp.gt.f32.partialorder %v1005, 0.0
        %v1009 = vmin.f32 %v1003, 0.0
        %v1010 = vmin.f32 %v1005, 0.0
        %v1011 = vmul.f32 %v1009, 1.442695
        %v1012 = vpow.pop %v1011
        %v1013 = vmul.f32 %v1010, 1.442695
        %v1014 = vpow.pop %v1013
        %v1015 = vsub.f32 %v1012, 1.0
        %v1016 = vsub.f32 %v1014, 1.0
        %v1017 = vsel %vm1007, %v1003, %v1015
        %v1018 = vsel %vm1008, %v1005, %v1016
        %1021 = vrot.lane.b32.xlu0 %v1017, 17
        %v1022 = vpop.permute.xlu0 %1021
        %1023 = vrot.lane.b32.xlu0 %v1018, 17
        %v1024 = vpop.permute.xlu0 %1023
        %v1025 = vsel %vm711, %v1022, %v1024
        %v1029 = vsel %vm711, 0.0, %v1022
        %v1030 = vsel %vm711, %v1024, 0.0
        %v1031 = vmul.f32 %v1029, %v595
        %v1032 = vmul.f32 %v1025, %v596
        %v1033 = vmul.f32 %v1029, %v723
        %v1034 = vmul.f32 %v1025, %v727
        %v1035 = vmul.f32 %v1030, %v725
        %v1036 = vmul.f32 %v1029, %v737
        %v1037 = vmul.f32 %v1025, %v741
        %v1038 = vmul.f32 %v1030, %v739
        %v1039 = vmul.f32 %v1029, %v749
        %v1040 = vmul.f32 %v1025, %v753
        %v1041 = vmul.f32 %v1030, %v751
        %v1042 = vmul.f32 %v1029, %v761
        %v1043 = vmul.f32 %v1025, %v765
        %v1044 = vmul.f32 %v1030, %v763
        %v1045 = vmul.f32 %v1029, %v773
        %v1046 = vmul.f32 %v1025, %v777
        %v1047 = vmul.f32 %v1030, %v775
        %1050 = vrot.lane.b32.xlu0 %v1029, 127
        %v1051 = vpop.permute.xlu0 %1050
        %1052 = vrot.lane.b32.xlu0 %v1025, 127
        %v1053 = vpop.permute.xlu0 %1052
        %1054 = vrot.lane.b32.xlu0 %v1030, 127
        %v1055 = vpop.permute.xlu0 %1054
        %v1056 = vsel %vm795, %v1051, %v1053
        %v1057 = vsel %vm795, %v1053, %v1055
        %1063 = vrot.lane.b32.xlu0 %v1033, 126
        %v1064 = vpop.permute.xlu0 %1063
        %1065 = vrot.lane.b32.xlu0 %v1034, 126
        %v1066 = vpop.permute.xlu0 %1065
        %1067 = vrot.lane.b32.xlu0 %v1035, 126
        %v1068 = vpop.permute.xlu0 %1067
        %v1069 = vsel %vm812, %v1064, %v1066
        %v1070 = vsel %vm812, %v1066, %v1068
        %1076 = vrot.lane.b32.xlu0 %v1036, 112
        %v1077 = vpop.permute.xlu0 %1076
        %1078 = vrot.lane.b32.xlu0 %v1037, 112
        %v1079 = vpop.permute.xlu0 %1078
        %1080 = vrot.lane.b32.xlu0 %v1038, 112
        %v1081 = vpop.permute.xlu0 %1080
        %v1082 = vsel %vm829, %v1077, %v1079
        %v1083 = vsel %vm829, %v1079, %v1081
        %1086 = vrot.lane.b32.xlu0 %v1029, 111
        %v1087 = vpop.permute.xlu0 %1086
        %1088 = vrot.lane.b32.xlu0 %v1025, 111
        %v1089 = vpop.permute.xlu0 %1088
        %1090 = vrot.lane.b32.xlu0 %v1030, 111
        %v1091 = vpop.permute.xlu0 %1090
        %v1092 = vsel %vm843, %v1087, %v1089
        %v1093 = vsel %vm843, %v1089, %v1091
        %1099 = vrot.lane.b32.xlu0 %v1039, 110
        %v1100 = vpop.permute.xlu0 %1099
        %1101 = vrot.lane.b32.xlu0 %v1040, 110
        %v1102 = vpop.permute.xlu0 %1101
        %1103 = vrot.lane.b32.xlu0 %v1041, 110
        %v1104 = vpop.permute.xlu0 %1103
        %v1105 = vsel %vm860, %v1100, %v1102
        %v1106 = vsel %vm860, %v1102, %v1104
        %1112 = vrot.lane.b32.xlu0 %v1042, 96
        %v1113 = vpop.permute.xlu0 %1112
        %1114 = vrot.lane.b32.xlu0 %v1043, 96
        %v1115 = vpop.permute.xlu0 %1114
        %1116 = vrot.lane.b32.xlu0 %v1044, 96
        %v1117 = vpop.permute.xlu0 %1116
        %v1118 = vsel %vm877, %v1113, %v1115
        %v1119 = vsel %vm877, %v1115, %v1117
        %1122 = vrot.lane.b32.xlu0 %v1029, 95
        %v1123 = vpop.permute.xlu0 %1122
        %1124 = vrot.lane.b32.xlu0 %v1025, 95
        %v1125 = vpop.permute.xlu0 %1124
        %1126 = vrot.lane.b32.xlu0 %v1030, 95
        %v1127 = vpop.permute.xlu0 %1126
        %v1128 = vsel %vm891, %v1123, %v1125
        %v1129 = vsel %vm891, %v1125, %v1127
        %1135 = vrot.lane.b32.xlu0 %v1045, 94
        %v1136 = vpop.permute.xlu0 %1135
        %1137 = vrot.lane.b32.xlu0 %v1046, 94
        %v1138 = vpop.permute.xlu0 %1137
        %1139 = vrot.lane.b32.xlu0 %v1047, 94
        %v1140 = vpop.permute.xlu0 %1139
        %v1141 = vsel %vm905, %v1136, %v1138
        %v1142 = vsel %vm905, %v1138, %v1140
        %vm1145 = vcmask 588800
        %v1147 = vsel %vm1145, %v611, 0
        %1149 = vmatprep.subr.mxu0 0.0
        %1150 = vmatpush1.msra.mxu0 0.0
        %1151 = vmatprep.subr.mxu0 0.0
        %1152 = vmatpush1.msra.mxu0 0.0
        %1153 = vmatprep.subr.mxu0 0.0
        %1154 = vmatpush1.msra.mxu0 0.0
        %1155 = vmatprep.subr.mxu0 0.0
        %1156 = vmatpush1.msra.mxu0 0.0
        %1157 = vmatprep.subr.mxu0 0.0
        %1158 = vmatpush1.msra.mxu0 0.0
        %1159 = vmatprep.subr.mxu0 0.0
        %1160 = vmatpush1.msra.mxu0 0.0
        %1161 = vmatprep.subr.mxu0 0.0
        %1162 = vmatpush1.msra.mxu0 0.0
        %1163 = vmatprep.subr.mxu0 %v1142
        %1164 = vmatpush1.msra.mxu0 %v1141
        %1165 = vmatprep.subr.mxu0 %v1129
        %1166 = vmatpush1.msra.mxu0 %v1128
        %1167 = vmatprep.subr.mxu0 %v1119
        %1168 = vmatpush1.msra.mxu0 %v1118
        %1169 = vmatprep.subr.mxu0 %v1106
        %1170 = vmatpush1.msra.mxu0 %v1105
        %1171 = vmatprep.subr.mxu0 %v1093
        %1172 = vmatpush1.msra.mxu0 %v1092
        %1173 = vmatprep.subr.mxu0 %v1083
        %1174 = vmatpush1.msra.mxu0 %v1082
        %1175 = vmatprep.subr.mxu0 %v1070
        %1176 = vmatpush1.msra.mxu0 %v1069
        %1177 = vmatprep.subr.mxu0 %v1057
        %1178 = vmatpush1.msra.mxu0 %v1056
        %1179 = vmatprep.subr.mxu0 %v1032
        %1180 = vmatpush1.msra.mxu0 %v1031
        %1181 = vmatprep.subr.mxu0 0.0
        %1182 = vmatpush2.msra.mxu0 0.0
        %1183 = vmatprep.subr.mxu0 0.0
        %1184 = vmatpush2.msra.mxu0 0.0
        %1185 = vmatprep.subr.mxu0 0.0
        %1186 = vmatpush2.msra.mxu0 0.0
        %1187 = vmatprep.subr.mxu0 0.0
        %1188 = vmatpush2.msra.mxu0 0.0
        %1189 = vmatprep.subr.mxu0 0.0
        %1190 = vmatpush2.msra.mxu0 0.0
        %1191 = vmatprep.subr.mxu0 0.0
        %1192 = vmatpush2.msra.mxu0 0.0
        %1193 = vmatprep.subr.mxu0 0.0
        %1194 = vmatpush2.msra.mxu0 0.0
        %1195 = vmatprep.subr.mxu0 0.0
        %1196 = vmatpush2.msra.mxu0 0.0
        %1197 = vmatprep.subr.mxu0 0.0
        %1198 = vmatpush2.msra.mxu0 0.0
        %1199 = vmatprep.subr.mxu0 0.0
        %1200 = vmatpush2.msra.mxu0 0.0
        %1201 = vmatprep.subr.mxu0 0.0
        %1202 = vmatpush2.msra.mxu0 0.0
        %1203 = vmatprep.subr.mxu0 0.0
        %1204 = vmatpush2.msra.mxu0 0.0
        %1205 = vmatprep.subr.mxu0 0.0
        %1206 = vmatpush2.msra.mxu0 0.0
        %1207 = vmatprep.subr.mxu0 0.0
        %1208 = vmatpush2.msra.mxu0 0.0
        %1209 = vmatprep.subr.mxu0 0.0
        %1210 = vmatpush2.msra.mxu0 0.0
        %1211 = vmatprep.subr.mxu0 0.0
        %1212 = vmatpush2.msra.mxu0 0.0
        %1213 = vmatprep.mubr.f32.mxu0 0.0
        %1214 = vmatmul.mubr.f32.gmra.mxu0 %v1147
        %v1215 = vpop.f32.mrf.mxu0
        %v1216 = vadd.f32 %v705, %v1215
        %v1217 = vpop.f32.mrf.mxu0
        %v1218 = vadd.f32 %v706, %v1217
        %1219 = vdwg.mxu0
        %vm1220 = vcmp.gt.f32.partialorder %v1216, 0.0
        %vm1221 = vcmp.gt.f32.partialorder %v1218, 0.0
        %v1222 = vmin.f32 %v1216, 0.0
        %v1223 = vmin.f32 %v1218, 0.0
        %v1224 = vmul.f32 %v1222, 1.442695
        %v1225 = vpow.pop %v1224
        %v1226 = vmul.f32 %v1223, 1.442695
        %v1227 = vpow.pop %v1226
        %v1228 = vsub.f32 %v1225, 1.0
        %v1229 = vsub.f32 %v1227, 1.0
        %v1230 = vsel %vm1220, %v1216, %v1228
        %v1231 = vsel %vm1221, %v1218, %v1229
        %v1232 = vld [vmem:[%s4] sm:$0xff]
        %v1233 = vld [vmem:[%s5] sm:$0xff]
        %1236 = vrot.lane.b32.xlu0 %v1230, 17
        %v1237 = vpop.permute.xlu0 %1236
        %1238 = vrot.lane.b32.xlu0 %v1231, 17
        %v1239 = vpop.permute.xlu0 %1238
        %v1240 = vsel %vm711, %v1237, %v1239
        %v1244 = vsel %vm711, 0.0, %v1237
        %v1245 = vsel %vm711, %v1239, 0.0
        %v1246 = vmul.f32 %v1244, %v595
        %v1247 = vmul.f32 %v1240, %v596
        %v1248 = vmul.f32 %v1244, %v723
        %v1249 = vmul.f32 %v1240, %v727
        %v1250 = vmul.f32 %v1245, %v725
        %v1251 = vmul.f32 %v1244, %v737
        %v1252 = vmul.f32 %v1240, %v741
        %v1253 = vmul.f32 %v1245, %v739
        %v1254 = vmul.f32 %v1244, %v749
        %v1255 = vmul.f32 %v1240, %v753
        %v1256 = vmul.f32 %v1245, %v751
        %v1257 = vmul.f32 %v1244, %v761
        %v1258 = vmul.f32 %v1240, %v765
        %v1259 = vmul.f32 %v1245, %v763
        %v1260 = vmul.f32 %v1244, %v773
        %v1261 = vmul.f32 %v1240, %v777
        %v1262 = vmul.f32 %v1245, %v775
        %1265 = vrot.lane.b32.xlu0 %v1244, 127
        %v1266 = vpop.permute.xlu0 %1265
        %1267 = vrot.lane.b32.xlu0 %v1240, 127
        %v1268 = vpop.permute.xlu0 %1267
        %1269 = vrot.lane.b32.xlu0 %v1245, 127
        %v1270 = vpop.permute.xlu0 %1269
        %v1271 = vsel %vm795, %v1266, %v1268
        %v1272 = vsel %vm795, %v1268, %v1270
        %1278 = vrot.lane.b32.xlu0 %v1248, 126
        %v1279 = vpop.permute.xlu0 %1278
        %1280 = vrot.lane.b32.xlu0 %v1249, 126
        %v1281 = vpop.permute.xlu0 %1280
        %1282 = vrot.lane.b32.xlu0 %v1250, 126
        %v1283 = vpop.permute.xlu0 %1282
        %v1284 = vsel %vm812, %v1279, %v1281
        %v1285 = vsel %vm812, %v1281, %v1283
        %1291 = vrot.lane.b32.xlu0 %v1251, 112
        %v1292 = vpop.permute.xlu0 %1291
        %1293 = vrot.lane.b32.xlu0 %v1252, 112
        %v1294 = vpop.permute.xlu0 %1293
        %1295 = vrot.lane.b32.xlu0 %v1253, 112
        %v1296 = vpop.permute.xlu0 %1295
        %v1297 = vsel %vm829, %v1292, %v1294
        %v1298 = vsel %vm829, %v1294, %v1296
        %1301 = vrot.lane.b32.xlu0 %v1244, 111
        %v1302 = vpop.permute.xlu0 %1301
        %1303 = vrot.lane.b32.xlu0 %v1240, 111
        %v1304 = vpop.permute.xlu0 %1303
        %1305 = vrot.lane.b32.xlu0 %v1245, 111
        %v1306 = vpop.permute.xlu0 %1305
        %v1307 = vsel %vm843, %v1302, %v1304
        %v1308 = vsel %vm843, %v1304, %v1306
        %1314 = vrot.lane.b32.xlu0 %v1254, 110
        %v1315 = vpop.permute.xlu0 %1314
        %1316 = vrot.lane.b32.xlu0 %v1255, 110
        %v1317 = vpop.permute.xlu0 %1316
        %1318 = vrot.lane.b32.xlu0 %v1256, 110
        %v1319 = vpop.permute.xlu0 %1318
        %v1320 = vsel %vm860, %v1315, %v1317
        %v1321 = vsel %vm860, %v1317, %v1319
        %1327 = vrot.lane.b32.xlu0 %v1257, 96
        %v1328 = vpop.permute.xlu0 %1327
        %1329 = vrot.lane.b32.xlu0 %v1258, 96
        %v1330 = vpop.permute.xlu0 %1329
        %1331 = vrot.lane.b32.xlu0 %v1259, 96
        %v1332 = vpop.permute.xlu0 %1331
        %v1333 = vsel %vm877, %v1328, %v1330
        %v1334 = vsel %vm877, %v1330, %v1332
        %1337 = vrot.lane.b32.xlu0 %v1244, 95
        %v1338 = vpop.permute.xlu0 %1337
        %1339 = vrot.lane.b32.xlu0 %v1240, 95
        %v1340 = vpop.permute.xlu0 %1339
        %1341 = vrot.lane.b32.xlu0 %v1245, 95
        %v1342 = vpop.permute.xlu0 %1341
        %v1343 = vsel %vm891, %v1338, %v1340
        %v1344 = vsel %vm891, %v1340, %v1342
        %1350 = vrot.lane.b32.xlu0 %v1260, 94
        %v1351 = vpop.permute.xlu0 %1350
        %1352 = vrot.lane.b32.xlu0 %v1261, 94
        %v1353 = vpop.permute.xlu0 %1352
        %1354 = vrot.lane.b32.xlu0 %v1262, 94
        %v1355 = vpop.permute.xlu0 %1354
        %v1356 = vsel %vm905, %v1351, %v1353
        %v1357 = vsel %vm905, %v1353, %v1355
        %v1361 = vsel %vm1145, %v1232, 0
        %1363 = vmatprep.subr.mxu0 0.0
        %1364 = vmatpush1.msra.mxu0 0.0
        %1365 = vmatprep.subr.mxu0 0.0
        %1366 = vmatpush1.msra.mxu0 0.0
        %1367 = vmatprep.subr.mxu0 0.0
        %1368 = vmatpush1.msra.mxu0 0.0
        %1369 = vmatprep.subr.mxu0 0.0
        %1370 = vmatpush1.msra.mxu0 0.0
        %1371 = vmatprep.subr.mxu0 0.0
        %1372 = vmatpush1.msra.mxu0 0.0
        %1373 = vmatprep.subr.mxu0 0.0
        %1374 = vmatpush1.msra.mxu0 0.0
        %1375 = vmatprep.subr.mxu0 0.0
        %1376 = vmatpush1.msra.mxu0 0.0
        %1377 = vmatprep.subr.mxu0 %v1357
        %1378 = vmatpush1.msra.mxu0 %v1356
        %1379 = vmatprep.subr.mxu0 %v1344
        %1380 = vmatpush1.msra.mxu0 %v1343
        %1381 = vmatprep.subr.mxu0 %v1334
        %1382 = vmatpush1.msra.mxu0 %v1333
        %1383 = vmatprep.subr.mxu0 %v1321
        %1384 = vmatpush1.msra.mxu0 %v1320
        %1385 = vmatprep.subr.mxu0 %v1308
        %1386 = vmatpush1.msra.mxu0 %v1307
        %1387 = vmatprep.subr.mxu0 %v1298
        %1388 = vmatpush1.msra.mxu0 %v1297
        %1389 = vmatprep.subr.mxu0 %v1285
        %1390 = vmatpush1.msra.mxu0 %v1284
        %1391 = vmatprep.subr.mxu0 %v1272
        %1392 = vmatpush1.msra.mxu0 %v1271
        %1393 = vmatprep.subr.mxu0 %v1247
        %1394 = vmatpush1.msra.mxu0 %v1246
        %1395 = vmatprep.subr.mxu0 0.0
        %1396 = vmatpush2.msra.mxu0 0.0
        %1397 = vmatprep.subr.mxu0 0.0
        %1398 = vmatpush2.msra.mxu0 0.0
        %1399 = vmatprep.subr.mxu0 0.0
        %1400 = vmatpush2.msra.mxu0 0.0
        %1401 = vmatprep.subr.mxu0 0.0
        %1402 = vmatpush2.msra.mxu0 0.0
        %1403 = vmatprep.subr.mxu0 0.0
        %1404 = vmatpush2.msra.mxu0 0.0
        %1405 = vmatprep.subr.mxu0 0.0
        %1406 = vmatpush2.msra.mxu0 0.0
        %1407 = vmatprep.subr.mxu0 0.0
        %1408 = vmatpush2.msra.mxu0 0.0
        %1409 = vmatprep.subr.mxu0 0.0
        %1410 = vmatpush2.msra.mxu0 0.0
        %1411 = vmatprep.subr.mxu0 0.0
        %1412 = vmatpush2.msra.mxu0 0.0
        %1413 = vmatprep.subr.mxu0 0.0
        %1414 = vmatpush2.msra.mxu0 0.0
        %1415 = vmatprep.subr.mxu0 0.0
        %1416 = vmatpush2.msra.mxu0 0.0
        %1417 = vmatprep.subr.mxu0 0.0
        %1418 = vmatpush2.msra.mxu0 0.0
        %1419 = vmatprep.subr.mxu0 0.0
        %1420 = vmatpush2.msra.mxu0 0.0
        %1421 = vmatprep.subr.mxu0 0.0
        %1422 = vmatpush2.msra.mxu0 0.0
        %1423 = vmatprep.subr.mxu0 0.0
        %1424 = vmatpush2.msra.mxu0 0.0
        %1425 = vmatprep.subr.mxu0 0.0
        %1426 = vmatpush2.msra.mxu0 0.0
        %1427 = vmatprep.mubr.f32.mxu0 0.0
        %1428 = vmatmul.mubr.f32.gmra.mxu0 %v1361
        %v1429 = vpop.f32.mrf.mxu0
        %v1430 = vadd.f32 0.0, %v1429
        %v1431 = vpop.f32.mrf.mxu0
        %v1432 = vadd.f32 0.0, %v1431
        %1433 = vdwg.mxu0
        %vm1434 = vcmp.gt.f32.partialorder %v1430, 0.0
        %vm1435 = vcmp.gt.f32.partialorder %v1432, 0.0
        %v1436 = vmin.f32 %v1430, 0.0
        %v1437 = vmin.f32 %v1432, 0.0
        %v1438 = vmul.f32 %v1436, 1.442695
        %v1439 = vpow.pop %v1438
        %v1440 = vmul.f32 %v1437, 1.442695
        %v1441 = vpow.pop %v1440
        %v1442 = vsub.f32 %v1439, 1.0
        %v1443 = vsub.f32 %v1441, 1.0
        %v1444 = vsel %vm1434, %v1430, %v1442
        %v1445 = vsel %vm1435, %v1432, %v1443
        %1448 = vrot.lane.b32.xlu0 %v1444, 17
        %v1449 = vpop.permute.xlu0 %1448
        %1450 = vrot.lane.b32.xlu0 %v1445, 17
        %v1451 = vpop.permute.xlu0 %1450
        %v1452 = vsel %vm711, %v1449, %v1451
        %v1456 = vsel %vm711, 0.0, %v1449
        %v1457 = vsel %vm711, %v1451, 0.0
        %v1458 = vmul.f32 %v1456, %v595
        %v1459 = vmul.f32 %v1452, %v596
        %v1460 = vmul.f32 %v1456, %v723
        %v1461 = vmul.f32 %v1452, %v727
        %v1462 = vmul.f32 %v1457, %v725
        %v1463 = vmul.f32 %v1456, %v737
        %v1464 = vmul.f32 %v1452, %v741
        %v1465 = vmul.f32 %v1457, %v739
        %v1466 = vmul.f32 %v1456, %v749
        %v1467 = vmul.f32 %v1452, %v753
        %v1468 = vmul.f32 %v1457, %v751
        %v1469 = vmul.f32 %v1456, %v761
        %v1470 = vmul.f32 %v1452, %v765
        %v1471 = vmul.f32 %v1457, %v763
        %v1472 = vmul.f32 %v1456, %v773
        %v1473 = vmul.f32 %v1452, %v777
        %v1474 = vmul.f32 %v1457, %v775
        %1477 = vrot.lane.b32.xlu0 %v1456, 127
        %v1478 = vpop.permute.xlu0 %1477
        %1479 = vrot.lane.b32.xlu0 %v1452, 127
        %v1480 = vpop.permute.xlu0 %1479
        %1481 = vrot.lane.b32.xlu0 %v1457, 127
        %v1482 = vpop.permute.xlu0 %1481
        %v1483 = vsel %vm795, %v1478, %v1480
        %v1484 = vsel %vm795, %v1480, %v1482
        %1490 = vrot.lane.b32.xlu0 %v1460, 126
        %v1491 = vpop.permute.xlu0 %1490
        %1492 = vrot.lane.b32.xlu0 %v1461, 126
        %v1493 = vpop.permute.xlu0 %1492
        %1494 = vrot.lane.b32.xlu0 %v1462, 126
        %v1495 = vpop.permute.xlu0 %1494
        %v1496 = vsel %vm812, %v1491, %v1493
        %v1497 = vsel %vm812, %v1493, %v1495
        %1503 = vrot.lane.b32.xlu0 %v1463, 112
        %v1504 = vpop.permute.xlu0 %1503
        %1505 = vrot.lane.b32.xlu0 %v1464, 112
        %v1506 = vpop.permute.xlu0 %1505
        %1507 = vrot.lane.b32.xlu0 %v1465, 112
        %v1508 = vpop.permute.xlu0 %1507
        %v1509 = vsel %vm829, %v1504, %v1506
        %v1510 = vsel %vm829, %v1506, %v1508
        %1513 = vrot.lane.b32.xlu0 %v1456, 111
        %v1514 = vpop.permute.xlu0 %1513
        %1515 = vrot.lane.b32.xlu0 %v1452, 111
        %v1516 = vpop.permute.xlu0 %1515
        %1517 = vrot.lane.b32.xlu0 %v1457, 111
        %v1518 = vpop.permute.xlu0 %1517
        %v1519 = vsel %vm843, %v1514, %v1516
        %v1520 = vsel %vm843, %v1516, %v1518
        %1526 = vrot.lane.b32.xlu0 %v1466, 110
        %v1527 = vpop.permute.xlu0 %1526
        %1528 = vrot.lane.b32.xlu0 %v1467, 110
        %v1529 = vpop.permute.xlu0 %1528
        %1530 = vrot.lane.b32.xlu0 %v1468, 110
        %v1531 = vpop.permute.xlu0 %1530
        %v1532 = vsel %vm860, %v1527, %v1529
        %v1533 = vsel %vm860, %v1529, %v1531
        %1539 = vrot.lane.b32.xlu0 %v1469, 96
        %v1540 = vpop.permute.xlu0 %1539
        %1541 = vrot.lane.b32.xlu0 %v1470, 96
        %v1542 = vpop.permute.xlu0 %1541
        %1543 = vrot.lane.b32.xlu0 %v1471, 96
        %v1544 = vpop.permute.xlu0 %1543
        %v1545 = vsel %vm877, %v1540, %v1542
        %v1546 = vsel %vm877, %v1542, %v1544
        %1549 = vrot.lane.b32.xlu0 %v1456, 95
        %v1550 = vpop.permute.xlu0 %1549
        %1551 = vrot.lane.b32.xlu0 %v1452, 95
        %v1552 = vpop.permute.xlu0 %1551
        %1553 = vrot.lane.b32.xlu0 %v1457, 95
        %v1554 = vpop.permute.xlu0 %1553
        %v1555 = vsel %vm891, %v1550, %v1552
        %v1556 = vsel %vm891, %v1552, %v1554
        %1562 = vrot.lane.b32.xlu0 %v1472, 94
        %v1563 = vpop.permute.xlu0 %1562
        %1564 = vrot.lane.b32.xlu0 %v1473, 94
        %v1565 = vpop.permute.xlu0 %1564
        %1566 = vrot.lane.b32.xlu0 %v1474, 94
        %v1567 = vpop.permute.xlu0 %1566
        %v1568 = vsel %vm905, %v1563, %v1565
        %v1569 = vsel %vm905, %v1565, %v1567
        %v1573 = vsel %vm1145, %v1233, 0
        %1575 = vmatprep.subr.mxu0 0.0
        %1576 = vmatpush1.msra.mxu0 0.0
        %1577 = vmatprep.subr.mxu0 0.0
        %1578 = vmatpush1.msra.mxu0 0.0
        %1579 = vmatprep.subr.mxu0 0.0
        %1580 = vmatpush1.msra.mxu0 0.0
        %1581 = vmatprep.subr.mxu0 0.0
        %1582 = vmatpush1.msra.mxu0 0.0
        %1583 = vmatprep.subr.mxu0 0.0
        %1584 = vmatpush1.msra.mxu0 0.0
        %1585 = vmatprep.subr.mxu0 0.0
        %1586 = vmatpush1.msra.mxu0 0.0
        %1587 = vmatprep.subr.mxu0 0.0
        %1588 = vmatpush1.msra.mxu0 0.0
        %1589 = vmatprep.subr.mxu0 %v1569
        %1590 = vmatpush1.msra.mxu0 %v1568
        %1591 = vmatprep.subr.mxu0 %v1556
        %1592 = vmatpush1.msra.mxu0 %v1555
        %1593 = vmatprep.subr.mxu0 %v1546
        %1594 = vmatpush1.msra.mxu0 %v1545
        %1595 = vmatprep.subr.mxu0 %v1533
        %1596 = vmatpush1.msra.mxu0 %v1532
        %1597 = vmatprep.subr.mxu0 %v1520
        %1598 = vmatpush1.msra.mxu0 %v1519
        %1599 = vmatprep.subr.mxu0 %v1510
        %1600 = vmatpush1.msra.mxu0 %v1509
        %1601 = vmatprep.subr.mxu0 %v1497
        %1602 = vmatpush1.msra.mxu0 %v1496
        %1603 = vmatprep.subr.mxu0 %v1484
        %1604 = vmatpush1.msra.mxu0 %v1483
        %1605 = vmatprep.subr.mxu0 %v1459
        %1606 = vmatpush1.msra.mxu0 %v1458
        %1607 = vmatprep.subr.mxu0 0.0
        %1608 = vmatpush2.msra.mxu0 0.0
        %1609 = vmatprep.subr.mxu0 0.0
        %1610 = vmatpush2.msra.mxu0 0.0
        %1611 = vmatprep.subr.mxu0 0.0
        %1612 = vmatpush2.msra.mxu0 0.0
        %1613 = vmatprep.subr.mxu0 0.0
        %1614 = vmatpush2.msra.mxu0 0.0
        %1615 = vmatprep.subr.mxu0 0.0
        %1616 = vmatpush2.msra.mxu0 0.0
        %1617 = vmatprep.subr.mxu0 0.0
        %1618 = vmatpush2.msra.mxu0 0.0
        %1619 = vmatprep.subr.mxu0 0.0
        %1620 = vmatpush2.msra.mxu0 0.0
        %1621 = vmatprep.subr.mxu0 0.0
        %1622 = vmatpush2.msra.mxu0 0.0
        %1623 = vmatprep.subr.mxu0 0.0
        %1624 = vmatpush2.msra.mxu0 0.0
        %1625 = vmatprep.subr.mxu0 0.0
        %1626 = vmatpush2.msra.mxu0 0.0
        %1627 = vmatprep.subr.mxu0 0.0
        %1628 = vmatpush2.msra.mxu0 0.0
        %1629 = vmatprep.subr.mxu0 0.0
        %1630 = vmatpush2.msra.mxu0 0.0
        %1631 = vmatprep.subr.mxu0 0.0
        %1632 = vmatpush2.msra.mxu0 0.0
        %1633 = vmatprep.subr.mxu0 0.0
        %1634 = vmatpush2.msra.mxu0 0.0
        %1635 = vmatprep.subr.mxu0 0.0
        %1636 = vmatpush2.msra.mxu0 0.0
        %1637 = vmatprep.subr.mxu0 0.0
        %1638 = vmatpush2.msra.mxu0 0.0
        %1639 = vmatprep.mubr.f32.mxu0 0.0
        %1640 = vmatmul.mubr.f32.gmra.mxu0 %v1573
        %v1641 = vpop.f32.mrf.mxu0
        %v1642 = vadd.f32 %v1230, %v1641
        %v1643 = vpop.f32.mrf.mxu0
        %v1644 = vadd.f32 %v1231, %v1643
        %1645 = vdwg.mxu0
        %vm1646 = vcmp.gt.f32.partialorder %v1642, 0.0
        %vm1647 = vcmp.gt.f32.partialorder %v1644, 0.0
        %v1648 = vmin.f32 %v1642, 0.0
        %v1649 = vmin.f32 %v1644, 0.0
        %v1650 = vmul.f32 %v1648, 1.442695
        %v1651 = vpow.pop %v1650
        %v1652 = vmul.f32 %v1649, 1.442695
        %v1653 = vpow.pop %v1652
        %v1654 = vsub.f32 %v1651, 1.0
        %v1655 = vsub.f32 %v1653, 1.0
        %v1656 = vsel %vm1646, %v1642, %v1654
        %v1657 = vsel %vm1647, %v1644, %v1655
        %v1658 = vld [vmem:[#allocation2] sm:$0xff]
        %v1659 = vld [vmem:[#allocation4] sm:$0xff]
        %1662 = vrot.lane.b32.xlu0 %v1656, 17
        %v1663 = vpop.permute.xlu0 %1662
        %1664 = vrot.lane.b32.xlu0 %v1657, 17
        %v1665 = vpop.permute.xlu0 %1664
        %v1666 = vsel %vm711, %v1663, %v1665
        %v1670 = vsel %vm711, 0.0, %v1663
        %v1671 = vsel %vm711, %v1665, 0.0
        %v1672 = vmul.f32 %v1670, %v595
        %v1673 = vmul.f32 %v1666, %v596
        %v1674 = vmul.f32 %v1670, %v723
        %v1675 = vmul.f32 %v1666, %v727
        %v1676 = vmul.f32 %v1671, %v725
        %v1677 = vmul.f32 %v1670, %v737
        %v1678 = vmul.f32 %v1666, %v741
        %v1679 = vmul.f32 %v1671, %v739
        %v1680 = vmul.f32 %v1670, %v749
        %v1681 = vmul.f32 %v1666, %v753
        %v1682 = vmul.f32 %v1671, %v751
        %v1683 = vmul.f32 %v1670, %v761
        %v1684 = vmul.f32 %v1666, %v765
        %v1685 = vmul.f32 %v1671, %v763
        %v1686 = vmul.f32 %v1670, %v773
        %v1687 = vmul.f32 %v1666, %v777
        %v1688 = vmul.f32 %v1671, %v775
        %1691 = vrot.lane.b32.xlu0 %v1670, 127
        %v1692 = vpop.permute.xlu0 %1691
        %1693 = vrot.lane.b32.xlu0 %v1666, 127
        %v1694 = vpop.permute.xlu0 %1693
        %1695 = vrot.lane.b32.xlu0 %v1671, 127
        %v1696 = vpop.permute.xlu0 %1695
        %v1697 = vsel %vm795, %v1692, %v1694
        %v1698 = vsel %vm795, %v1694, %v1696
        %1704 = vrot.lane.b32.xlu0 %v1674, 126
        %v1705 = vpop.permute.xlu0 %1704
        %1706 = vrot.lane.b32.xlu0 %v1675, 126
        %v1707 = vpop.permute.xlu0 %1706
        %1708 = vrot.lane.b32.xlu0 %v1676, 126
        %v1709 = vpop.permute.xlu0 %1708
        %v1710 = vsel %vm812, %v1705, %v1707
        %v1711 = vsel %vm812, %v1707, %v1709
        %1717 = vrot.lane.b32.xlu0 %v1677, 112
        %v1718 = vpop.permute.xlu0 %1717
        %1719 = vrot.lane.b32.xlu0 %v1678, 112
        %v1720 = vpop.permute.xlu0 %1719
        %1721 = vrot.lane.b32.xlu0 %v1679, 112
        %v1722 = vpop.permute.xlu0 %1721
        %v1723 = vsel %vm829, %v1718, %v1720
        %v1724 = vsel %vm829, %v1720, %v1722
        %1727 = vrot.lane.b32.xlu0 %v1670, 111
        %v1728 = vpop.permute.xlu0 %1727
        %1729 = vrot.lane.b32.xlu0 %v1666, 111
        %v1730 = vpop.permute.xlu0 %1729
        %1731 = vrot.lane.b32.xlu0 %v1671, 111
        %v1732 = vpop.permute.xlu0 %1731
        %v1733 = vsel %vm843, %v1728, %v1730
        %v1734 = vsel %vm843, %v1730, %v1732
        %1740 = vrot.lane.b32.xlu0 %v1680, 110
        %v1741 = vpop.permute.xlu0 %1740
        %1742 = vrot.lane.b32.xlu0 %v1681, 110
        %v1743 = vpop.permute.xlu0 %1742
        %1744 = vrot.lane.b32.xlu0 %v1682, 110
        %v1745 = vpop.permute.xlu0 %1744
        %v1746 = vsel %vm860, %v1741, %v1743
        %v1747 = vsel %vm860, %v1743, %v1745
        %1753 = vrot.lane.b32.xlu0 %v1683, 96
        %v1754 = vpop.permute.xlu0 %1753
        %1755 = vrot.lane.b32.xlu0 %v1684, 96
        %v1756 = vpop.permute.xlu0 %1755
        %1757 = vrot.lane.b32.xlu0 %v1685, 96
        %v1758 = vpop.permute.xlu0 %1757
        %v1759 = vsel %vm877, %v1754, %v1756
        %v1760 = vsel %vm877, %v1756, %v1758
        %1763 = vrot.lane.b32.xlu0 %v1670, 95
        %v1764 = vpop.permute.xlu0 %1763
        %1765 = vrot.lane.b32.xlu0 %v1666, 95
        %v1766 = vpop.permute.xlu0 %1765
        %1767 = vrot.lane.b32.xlu0 %v1671, 95
        %v1768 = vpop.permute.xlu0 %1767
        %v1769 = vsel %vm891, %v1764, %v1766
        %v1770 = vsel %vm891, %v1766, %v1768
        %1776 = vrot.lane.b32.xlu0 %v1686, 94
        %v1777 = vpop.permute.xlu0 %1776
        %1778 = vrot.lane.b32.xlu0 %v1687, 94
        %v1779 = vpop.permute.xlu0 %1778
        %1780 = vrot.lane.b32.xlu0 %v1688, 94
        %v1781 = vpop.permute.xlu0 %1780
        %v1782 = vsel %vm905, %v1777, %v1779
        %v1783 = vsel %vm905, %v1779, %v1781
        %v1787 = vsel %vm1145, %v1658, 0
        %1789 = vmatprep.subr.mxu0 0.0
        %1790 = vmatpush1.msra.mxu0 0.0
        %1791 = vmatprep.subr.mxu0 0.0
        %1792 = vmatpush1.msra.mxu0 0.0
        %1793 = vmatprep.subr.mxu0 0.0
        %1794 = vmatpush1.msra.mxu0 0.0
        %1795 = vmatprep.subr.mxu0 0.0
        %1796 = vmatpush1.msra.mxu0 0.0
        %1797 = vmatprep.subr.mxu0 0.0
        %1798 = vmatpush1.msra.mxu0 0.0
        %1799 = vmatprep.subr.mxu0 0.0
        %1800 = vmatpush1.msra.mxu0 0.0
        %1801 = vmatprep.subr.mxu0 0.0
        %1802 = vmatpush1.msra.mxu0 0.0
        %1803 = vmatprep.subr.mxu0 %v1783
        %1804 = vmatpush1.msra.mxu0 %v1782
        %1805 = vmatprep.subr.mxu0 %v1770
        %1806 = vmatpush1.msra.mxu0 %v1769
        %1807 = vmatprep.subr.mxu0 %v1760
        %1808 = vmatpush1.msra.mxu0 %v1759
        %1809 = vmatprep.subr.mxu0 %v1747
        %1810 = vmatpush1.msra.mxu0 %v1746
        %1811 = vmatprep.subr.mxu0 %v1734
        %1812 = vmatpush1.msra.mxu0 %v1733
        %1813 = vmatprep.subr.mxu0 %v1724
        %1814 = vmatpush1.msra.mxu0 %v1723
        %1815 = vmatprep.subr.mxu0 %v1711
        %1816 = vmatpush1.msra.mxu0 %v1710
        %1817 = vmatprep.subr.mxu0 %v1698
        %1818 = vmatpush1.msra.mxu0 %v1697
        %1819 = vmatprep.subr.mxu0 %v1673
        %1820 = vmatpush1.msra.mxu0 %v1672
        %1821 = vmatprep.subr.mxu0 0.0
        %1822 = vmatpush2.msra.mxu0 0.0
        %1823 = vmatprep.subr.mxu0 0.0
        %1824 = vmatpush2.msra.mxu0 0.0
        %1825 = vmatprep.subr.mxu0 0.0
        %1826 = vmatpush2.msra.mxu0 0.0
        %1827 = vmatprep.subr.mxu0 0.0
        %1828 = vmatpush2.msra.mxu0 0.0
        %1829 = vmatprep.subr.mxu0 0.0
        %1830 = vmatpush2.msra.mxu0 0.0
        %1831 = vmatprep.subr.mxu0 0.0
        %1832 = vmatpush2.msra.mxu0 0.0
        %1833 = vmatprep.subr.mxu0 0.0
        %1834 = vmatpush2.msra.mxu0 0.0
        %1835 = vmatprep.subr.mxu0 0.0
        %1836 = vmatpush2.msra.mxu0 0.0
        %1837 = vmatprep.subr.mxu0 0.0
        %1838 = vmatpush2.msra.mxu0 0.0
        %1839 = vmatprep.subr.mxu0 0.0
        %1840 = vmatpush2.msra.mxu0 0.0
        %1841 = vmatprep.subr.mxu0 0.0
        %1842 = vmatpush2.msra.mxu0 0.0
        %1843 = vmatprep.subr.mxu0 0.0
        %1844 = vmatpush2.msra.mxu0 0.0
        %1845 = vmatprep.subr.mxu0 0.0
        %1846 = vmatpush2.msra.mxu0 0.0
        %1847 = vmatprep.subr.mxu0 0.0
        %1848 = vmatpush2.msra.mxu0 0.0
        %1849 = vmatprep.subr.mxu0 0.0
        %1850 = vmatpush2.msra.mxu0 0.0
        %1851 = vmatprep.subr.mxu0 0.0
        %1852 = vmatpush2.msra.mxu0 0.0
        %1853 = vmatprep.mubr.f32.mxu0 0.0
        %1854 = vmatmul.mubr.f32.gmra.mxu0 %v1787
        %v1855 = vpop.f32.mrf.mxu0
        %v1856 = vadd.f32 0.0, %v1855
        %v1857 = vpop.f32.mrf.mxu0
        %v1858 = vadd.f32 0.0, %v1857
        %1859 = vdwg.mxu0
        %vm1860 = vcmp.gt.f32.partialorder %v1856, 0.0
        %vm1861 = vcmp.gt.f32.partialorder %v1858, 0.0
        %v1862 = vmin.f32 %v1856, 0.0
        %v1863 = vmin.f32 %v1858, 0.0
        %v1864 = vmul.f32 %v1862, 1.442695
        %v1865 = vpow.pop %v1864
        %v1866 = vmul.f32 %v1863, 1.442695
        %v1867 = vpow.pop %v1866
        %v1868 = vsub.f32 %v1865, 1.0
        %v1869 = vsub.f32 %v1867, 1.0
        %v1870 = vsel %vm1860, %v1856, %v1868
        %v1871 = vsel %vm1861, %v1858, %v1869
        %1874 = vrot.lane.b32.xlu0 %v1870, 17
        %v1875 = vpop.permute.xlu0 %1874
        %1876 = vrot.lane.b32.xlu0 %v1871, 17
        %v1877 = vpop.permute.xlu0 %1876
        %v1878 = vsel %vm711, %v1875, %v1877
        %v1882 = vsel %vm711, 0.0, %v1875
        %v1883 = vsel %vm711, %v1877, 0.0
        %v1884 = vmul.f32 %v1882, %v595
        %v1885 = vmul.f32 %v1878, %v596
        %v1886 = vmul.f32 %v1882, %v723
        %v1887 = vmul.f32 %v1878, %v727
        %v1888 = vmul.f32 %v1883, %v725
        %v1889 = vmul.f32 %v1882, %v737
        %v1890 = vmul.f32 %v1878, %v741
        %v1891 = vmul.f32 %v1883, %v739
        %v1892 = vmul.f32 %v1882, %v749
        %v1893 = vmul.f32 %v1878, %v753
        %v1894 = vmul.f32 %v1883, %v751
        %v1895 = vmul.f32 %v1882, %v761
        %v1896 = vmul.f32 %v1878, %v765
        %v1897 = vmul.f32 %v1883, %v763
        %v1898 = vmul.f32 %v1882, %v773
        %v1899 = vmul.f32 %v1878, %v777
        %v1900 = vmul.f32 %v1883, %v775
        %1903 = vrot.lane.b32.xlu0 %v1882, 127
        %v1904 = vpop.permute.xlu0 %1903
        %1905 = vrot.lane.b32.xlu0 %v1878, 127
        %v1906 = vpop.permute.xlu0 %1905
        %1907 = vrot.lane.b32.xlu0 %v1883, 127
        %v1908 = vpop.permute.xlu0 %1907
        %v1909 = vsel %vm795, %v1904, %v1906
        %v1910 = vsel %vm795, %v1906, %v1908
        %1916 = vrot.lane.b32.xlu0 %v1886, 126
        %v1917 = vpop.permute.xlu0 %1916
        %1918 = vrot.lane.b32.xlu0 %v1887, 126
        %v1919 = vpop.permute.xlu0 %1918
        %1920 = vrot.lane.b32.xlu0 %v1888, 126
        %v1921 = vpop.permute.xlu0 %1920
        %v1922 = vsel %vm812, %v1917, %v1919
        %v1923 = vsel %vm812, %v1919, %v1921
        %1929 = vrot.lane.b32.xlu0 %v1889, 112
        %v1930 = vpop.permute.xlu0 %1929
        %1931 = vrot.lane.b32.xlu0 %v1890, 112
        %v1932 = vpop.permute.xlu0 %1931
        %1933 = vrot.lane.b32.xlu0 %v1891, 112
        %v1934 = vpop.permute.xlu0 %1933
        %v1935 = vsel %vm829, %v1930, %v1932
        %v1936 = vsel %vm829, %v1932, %v1934
        %1939 = vrot.lane.b32.xlu0 %v1882, 111
        %v1940 = vpop.permute.xlu0 %1939
        %1941 = vrot.lane.b32.xlu0 %v1878, 111
        %v1942 = vpop.permute.xlu0 %1941
        %1943 = vrot.lane.b32.xlu0 %v1883, 111
        %v1944 = vpop.permute.xlu0 %1943
        %v1945 = vsel %vm843, %v1940, %v1942
        %v1946 = vsel %vm843, %v1942, %v1944
        %1952 = vrot.lane.b32.xlu0 %v1892, 110
        %v1953 = vpop.permute.xlu0 %1952
        %1954 = vrot.lane.b32.xlu0 %v1893, 110
        %v1955 = vpop.permute.xlu0 %1954
        %1956 = vrot.lane.b32.xlu0 %v1894, 110
        %v1957 = vpop.permute.xlu0 %1956
        %v1958 = vsel %vm860, %v1953, %v1955
        %v1959 = vsel %vm860, %v1955, %v1957
        %1965 = vrot.lane.b32.xlu0 %v1895, 96
        %v1966 = vpop.permute.xlu0 %1965
        %1967 = vrot.lane.b32.xlu0 %v1896, 96
        %v1968 = vpop.permute.xlu0 %1967
        %1969 = vrot.lane.b32.xlu0 %v1897, 96
        %v1970 = vpop.permute.xlu0 %1969
        %v1971 = vsel %vm877, %v1966, %v1968
        %v1972 = vsel %vm877, %v1968, %v1970
        %1975 = vrot.lane.b32.xlu0 %v1882, 95
        %v1976 = vpop.permute.xlu0 %1975
        %1977 = vrot.lane.b32.xlu0 %v1878, 95
        %v1978 = vpop.permute.xlu0 %1977
        %1979 = vrot.lane.b32.xlu0 %v1883, 95
        %v1980 = vpop.permute.xlu0 %1979
        %v1981 = vsel %vm891, %v1976, %v1978
        %v1982 = vsel %vm891, %v1978, %v1980
        %1988 = vrot.lane.b32.xlu0 %v1898, 94
        %v1989 = vpop.permute.xlu0 %1988
        %1990 = vrot.lane.b32.xlu0 %v1899, 94
        %v1991 = vpop.permute.xlu0 %1990
        %1992 = vrot.lane.b32.xlu0 %v1900, 94
        %v1993 = vpop.permute.xlu0 %1992
        %v1994 = vsel %vm905, %v1989, %v1991
        %v1995 = vsel %vm905, %v1991, %v1993
        %v1999 = vsel %vm1145, %v1659, 0
        %2001 = vmatprep.subr.mxu0 0.0
        %2002 = vmatpush1.msra.mxu0 0.0
        %2003 = vmatprep.subr.mxu0 0.0
        %2004 = vmatpush1.msra.mxu0 0.0
        %2005 = vmatprep.subr.mxu0 0.0
        %2006 = vmatpush1.msra.mxu0 0.0
        %2007 = vmatprep.subr.mxu0 0.0
        %2008 = vmatpush1.msra.mxu0 0.0
        %2009 = vmatprep.subr.mxu0 0.0
        %2010 = vmatpush1.msra.mxu0 0.0
        %2011 = vmatprep.subr.mxu0 0.0
        %2012 = vmatpush1.msra.mxu0 0.0
        %2013 = vmatprep.subr.mxu0 0.0
        %2014 = vmatpush1.msra.mxu0 0.0
        %2015 = vmatprep.subr.mxu0 %v1995
        %2016 = vmatpush1.msra.mxu0 %v1994
        %2017 = vmatprep.subr.mxu0 %v1982
        %2018 = vmatpush1.msra.mxu0 %v1981
        %2019 = vmatprep.subr.mxu0 %v1972
        %2020 = vmatpush1.msra.mxu0 %v1971
        %2021 = vmatprep.subr.mxu0 %v1959
        %2022 = vmatpush1.msra.mxu0 %v1958
        %2023 = vmatprep.subr.mxu0 %v1946
        %2024 = vmatpush1.msra.mxu0 %v1945
        %2025 = vmatprep.subr.mxu0 %v1936
        %2026 = vmatpush1.msra.mxu0 %v1935
        %2027 = vmatprep.subr.mxu0 %v1923
        %2028 = vmatpush1.msra.mxu0 %v1922
        %2029 = vmatprep.subr.mxu0 %v1910
        %2030 = vmatpush1.msra.mxu0 %v1909
        %2031 = vmatprep.subr.mxu0 %v1885
        %2032 = vmatpush1.msra.mxu0 %v1884
        %2033 = vmatprep.subr.mxu0 0.0
        %2034 = vmatpush2.msra.mxu0 0.0
        %2035 = vmatprep.subr.mxu0 0.0
        %2036 = vmatpush2.msra.mxu0 0.0
        %2037 = vmatprep.subr.mxu0 0.0
        %2038 = vmatpush2.msra.mxu0 0.0
        %2039 = vmatprep.subr.mxu0 0.0
        %2040 = vmatpush2.msra.mxu0 0.0
        %2041 = vmatprep.subr.mxu0 0.0
        %2042 = vmatpush2.msra.mxu0 0.0
        %2043 = vmatprep.subr.mxu0 0.0
        %2044 = vmatpush2.msra.mxu0 0.0
        %2045 = vmatprep.subr.mxu0 0.0
        %2046 = vmatpush2.msra.mxu0 0.0
        %2047 = vmatprep.subr.mxu0 0.0
        %2048 = vmatpush2.msra.mxu0 0.0
        %2049 = vmatprep.subr.mxu0 0.0
        %2050 = vmatpush2.msra.mxu0 0.0
        %2051 = vmatprep.subr.mxu0 0.0
        %2052 = vmatpush2.msra.mxu0 0.0
        %2053 = vmatprep.subr.mxu0 0.0
        %2054 = vmatpush2.msra.mxu0 0.0
        %2055 = vmatprep.subr.mxu0 0.0
        %2056 = vmatpush2.msra.mxu0 0.0
        %2057 = vmatprep.subr.mxu0 0.0
        %2058 = vmatpush2.msra.mxu0 0.0
        %2059 = vmatprep.subr.mxu0 0.0
        %2060 = vmatpush2.msra.mxu0 0.0
        %2061 = vmatprep.subr.mxu0 0.0
        %2062 = vmatpush2.msra.mxu0 0.0
        %2063 = vmatprep.subr.mxu0 0.0
        %2064 = vmatpush2.msra.mxu0 0.0
        %2065 = vmatprep.mubr.f32.mxu0 0.0
        %2066 = vmatmul.mubr.f32.gmra.mxu0 %v1999
        %v2067 = vpop.f32.mrf.mxu0
        %v2068 = vadd.f32 %v1656, %v2067
        %v2069 = vpop.f32.mrf.mxu0
        %v2070 = vadd.f32 %v1657, %v2069
        %2071 = vdwg.mxu0
        %vm2072 = vcmp.gt.f32.partialorder %v2068, 0.0
        %vm2073 = vcmp.gt.f32.partialorder %v2070, 0.0
        %v2074 = vmin.f32 %v2068, 0.0
        %v2075 = vmin.f32 %v2070, 0.0
        %v2076 = vmul.f32 %v2074, 1.442695
        %v2077 = vpow.pop %v2076
        %v2078 = vmul.f32 %v2075, 1.442695
        %v2079 = vpow.pop %v2078
        %v2080 = vsub.f32 %v2077, 1.0
        %v2081 = vsub.f32 %v2079, 1.0
        %v2082 = vsel %vm2072, %v2068, %v2080
        %v2083 = vsel %vm2073, %v2070, %v2081
        %v2084 = vld [vmem:[#allocation6] sm:$0xff]
        %v2085 = vld [vmem:[%s9] sm:$0xff]
        %2088 = vrot.lane.b32.xlu0 %v2082, 17
        %v2089 = vpop.permute.xlu0 %2088
        %2090 = vrot.lane.b32.xlu0 %v2083, 17
        %v2091 = vpop.permute.xlu0 %2090
        %v2092 = vsel %vm711, %v2089, %v2091
        %v2096 = vsel %vm711, 0.0, %v2089
        %v2097 = vsel %vm711, %v2091, 0.0
        %v2098 = vmul.f32 %v2096, %v595
        %v2099 = vmul.f32 %v2092, %v596
        %v2100 = vmul.f32 %v2096, %v723
        %v2101 = vmul.f32 %v2092, %v727
        %v2102 = vmul.f32 %v2097, %v725
        %v2103 = vmul.f32 %v2096, %v737
        %v2104 = vmul.f32 %v2092, %v741
        %v2105 = vmul.f32 %v2097, %v739
        %v2106 = vmul.f32 %v2096, %v749
        %v2107 = vmul.f32 %v2092, %v753
        %v2108 = vmul.f32 %v2097, %v751
        %v2109 = vmul.f32 %v2096, %v761
        %v2110 = vmul.f32 %v2092, %v765
        %v2111 = vmul.f32 %v2097, %v763
        %v2112 = vmul.f32 %v2096, %v773
        %v2113 = vmul.f32 %v2092, %v777
        %v2114 = vmul.f32 %v2097, %v775
        %2117 = vrot.lane.b32.xlu0 %v2096, 127
        %v2118 = vpop.permute.xlu0 %2117
        %2119 = vrot.lane.b32.xlu0 %v2092, 127
        %v2120 = vpop.permute.xlu0 %2119
        %2121 = vrot.lane.b32.xlu0 %v2097, 127
        %v2122 = vpop.permute.xlu0 %2121
        %v2123 = vsel %vm795, %v2118, %v2120
        %v2124 = vsel %vm795, %v2120, %v2122
        %2130 = vrot.lane.b32.xlu0 %v2100, 126
        %v2131 = vpop.permute.xlu0 %2130
        %2132 = vrot.lane.b32.xlu0 %v2101, 126
        %v2133 = vpop.permute.xlu0 %2132
        %2134 = vrot.lane.b32.xlu0 %v2102, 126
        %v2135 = vpop.permute.xlu0 %2134
        %v2136 = vsel %vm812, %v2131, %v2133
        %v2137 = vsel %vm812, %v2133, %v2135
        %2143 = vrot.lane.b32.xlu0 %v2103, 112
        %v2144 = vpop.permute.xlu0 %2143
        %2145 = vrot.lane.b32.xlu0 %v2104, 112
        %v2146 = vpop.permute.xlu0 %2145
        %2147 = vrot.lane.b32.xlu0 %v2105, 112
        %v2148 = vpop.permute.xlu0 %2147
        %v2149 = vsel %vm829, %v2144, %v2146
        %v2150 = vsel %vm829, %v2146, %v2148
        %2153 = vrot.lane.b32.xlu0 %v2096, 111
        %v2154 = vpop.permute.xlu0 %2153
        %2155 = vrot.lane.b32.xlu0 %v2092, 111
        %v2156 = vpop.permute.xlu0 %2155
        %2157 = vrot.lane.b32.xlu0 %v2097, 111
        %v2158 = vpop.permute.xlu0 %2157
        %v2159 = vsel %vm843, %v2154, %v2156
        %v2160 = vsel %vm843, %v2156, %v2158
        %2166 = vrot.lane.b32.xlu0 %v2106, 110
        %v2167 = vpop.permute.xlu0 %2166
        %2168 = vrot.lane.b32.xlu0 %v2107, 110
        %v2169 = vpop.permute.xlu0 %2168
        %2170 = vrot.lane.b32.xlu0 %v2108, 110
        %v2171 = vpop.permute.xlu0 %2170
        %v2172 = vsel %vm860, %v2167, %v2169
        %v2173 = vsel %vm860, %v2169, %v2171
        %2179 = vrot.lane.b32.xlu0 %v2109, 96
        %v2180 = vpop.permute.xlu0 %2179
        %2181 = vrot.lane.b32.xlu0 %v2110, 96
        %v2182 = vpop.permute.xlu0 %2181
        %2183 = vrot.lane.b32.xlu0 %v2111, 96
        %v2184 = vpop.permute.xlu0 %2183
        %v2185 = vsel %vm877, %v2180, %v2182
        %v2186 = vsel %vm877, %v2182, %v2184
        %2189 = vrot.lane.b32.xlu0 %v2096, 95
        %v2190 = vpop.permute.xlu0 %2189
        %2191 = vrot.lane.b32.xlu0 %v2092, 95
        %v2192 = vpop.permute.xlu0 %2191
        %2193 = vrot.lane.b32.xlu0 %v2097, 95
        %v2194 = vpop.permute.xlu0 %2193
        %v2195 = vsel %vm891, %v2190, %v2192
        %v2196 = vsel %vm891, %v2192, %v2194
        %2202 = vrot.lane.b32.xlu0 %v2112, 94
        %v2203 = vpop.permute.xlu0 %2202
        %2204 = vrot.lane.b32.xlu0 %v2113, 94
        %v2205 = vpop.permute.xlu0 %2204
        %2206 = vrot.lane.b32.xlu0 %v2114, 94
        %v2207 = vpop.permute.xlu0 %2206
        %v2208 = vsel %vm905, %v2203, %v2205
        %v2209 = vsel %vm905, %v2205, %v2207
        %v2213 = vsel %vm1145, %v2084, 0
        %2215 = vmatprep.subr.mxu0 0.0
        %2216 = vmatpush1.msra.mxu0 0.0
        %2217 = vmatprep.subr.mxu0 0.0
        %2218 = vmatpush1.msra.mxu0 0.0
        %2219 = vmatprep.subr.mxu0 0.0
        %2220 = vmatpush1.msra.mxu0 0.0
        %2221 = vmatprep.subr.mxu0 0.0
        %2222 = vmatpush1.msra.mxu0 0.0
        %2223 = vmatprep.subr.mxu0 0.0
        %2224 = vmatpush1.msra.mxu0 0.0
        %2225 = vmatprep.subr.mxu0 0.0
        %2226 = vmatpush1.msra.mxu0 0.0
        %2227 = vmatprep.subr.mxu0 0.0
        %2228 = vmatpush1.msra.mxu0 0.0
        %2229 = vmatprep.subr.mxu0 %v2209
        %2230 = vmatpush1.msra.mxu0 %v2208
        %2231 = vmatprep.subr.mxu0 %v2196
        %2232 = vmatpush1.msra.mxu0 %v2195
        %2233 = vmatprep.subr.mxu0 %v2186
        %2234 = vmatpush1.msra.mxu0 %v2185
        %2235 = vmatprep.subr.mxu0 %v2173
        %2236 = vmatpush1.msra.mxu0 %v2172
        %2237 = vmatprep.subr.mxu0 %v2160
        %2238 = vmatpush1.msra.mxu0 %v2159
        %2239 = vmatprep.subr.mxu0 %v2150
        %2240 = vmatpush1.msra.mxu0 %v2149
        %2241 = vmatprep.subr.mxu0 %v2137
        %2242 = vmatpush1.msra.mxu0 %v2136
        %2243 = vmatprep.subr.mxu0 %v2124
        %2244 = vmatpush1.msra.mxu0 %v2123
        %2245 = vmatprep.subr.mxu0 %v2099
        %2246 = vmatpush1.msra.mxu0 %v2098
        %2247 = vmatprep.subr.mxu0 0.0
        %2248 = vmatpush2.msra.mxu0 0.0
        %2249 = vmatprep.subr.mxu0 0.0
        %2250 = vmatpush2.msra.mxu0 0.0
        %2251 = vmatprep.subr.mxu0 0.0
        %2252 = vmatpush2.msra.mxu0 0.0
        %2253 = vmatprep.subr.mxu0 0.0
        %2254 = vmatpush2.msra.mxu0 0.0
        %2255 = vmatprep.subr.mxu0 0.0
        %2256 = vmatpush2.msra.mxu0 0.0
        %2257 = vmatprep.subr.mxu0 0.0
        %2258 = vmatpush2.msra.mxu0 0.0
        %2259 = vmatprep.subr.mxu0 0.0
        %2260 = vmatpush2.msra.mxu0 0.0
        %2261 = vmatprep.subr.mxu0 0.0
        %2262 = vmatpush2.msra.mxu0 0.0
        %2263 = vmatprep.subr.mxu0 0.0
        %2264 = vmatpush2.msra.mxu0 0.0
        %2265 = vmatprep.subr.mxu0 0.0
        %2266 = vmatpush2.msra.mxu0 0.0
        %2267 = vmatprep.subr.mxu0 0.0
        %2268 = vmatpush2.msra.mxu0 0.0
        %2269 = vmatprep.subr.mxu0 0.0
        %2270 = vmatpush2.msra.mxu0 0.0
        %2271 = vmatprep.subr.mxu0 0.0
        %2272 = vmatpush2.msra.mxu0 0.0
        %2273 = vmatprep.subr.mxu0 0.0
        %2274 = vmatpush2.msra.mxu0 0.0
        %2275 = vmatprep.subr.mxu0 0.0
        %2276 = vmatpush2.msra.mxu0 0.0
        %2277 = vmatprep.subr.mxu0 0.0
        %2278 = vmatpush2.msra.mxu0 0.0
        %2279 = vmatprep.mubr.f32.mxu0 0.0
        %2280 = vmatmul.mubr.f32.gmra.mxu0 %v2213
        %v2281 = vpop.f32.mrf.mxu0
        %v2282 = vadd.f32 0.0, %v2281
        %v2283 = vpop.f32.mrf.mxu0
        %v2284 = vadd.f32 0.0, %v2283
        %2285 = vdwg.mxu0
        %vm2286 = vcmp.gt.f32.partialorder %v2282, 0.0
        %vm2287 = vcmp.gt.f32.partialorder %v2284, 0.0
        %v2288 = vmin.f32 %v2282, 0.0
        %v2289 = vmin.f32 %v2284, 0.0
        %v2290 = vmul.f32 %v2288, 1.442695
        %v2291 = vpow.pop %v2290
        %v2292 = vmul.f32 %v2289, 1.442695
        %v2293 = vpow.pop %v2292
        %v2294 = vsub.f32 %v2291, 1.0
        %v2295 = vsub.f32 %v2293, 1.0
        %v2296 = vsel %vm2286, %v2282, %v2294
        %v2297 = vsel %vm2287, %v2284, %v2295
        %2300 = vrot.lane.b32.xlu0 %v2296, 17
        %v2301 = vpop.permute.xlu0 %2300
        %2302 = vrot.lane.b32.xlu0 %v2297, 17
        %v2303 = vpop.permute.xlu0 %2302
        %v2304 = vsel %vm711, %v2301, %v2303
        %v2308 = vsel %vm711, 0.0, %v2301
        %v2309 = vsel %vm711, %v2303, 0.0
        %v2310 = vmul.f32 %v2308, %v595
        %v2311 = vmul.f32 %v2304, %v596
        %v2312 = vmul.f32 %v2308, %v723
        %v2313 = vmul.f32 %v2304, %v727
        %v2314 = vmul.f32 %v2309, %v725
        %v2315 = vmul.f32 %v2308, %v737
        %v2316 = vmul.f32 %v2304, %v741
        %v2317 = vmul.f32 %v2309, %v739
        %v2318 = vmul.f32 %v2308, %v749
        %v2319 = vmul.f32 %v2304, %v753
        %v2320 = vmul.f32 %v2309, %v751
        %v2321 = vmul.f32 %v2308, %v761
        %v2322 = vmul.f32 %v2304, %v765
        %v2323 = vmul.f32 %v2309, %v763
        %v2324 = vmul.f32 %v2308, %v773
        %v2325 = vmul.f32 %v2304, %v777
        %v2326 = vmul.f32 %v2309, %v775
        %2329 = vrot.lane.b32.xlu0 %v2308, 127
        %v2330 = vpop.permute.xlu0 %2329
        %2331 = vrot.lane.b32.xlu0 %v2304, 127
        %v2332 = vpop.permute.xlu0 %2331
        %2333 = vrot.lane.b32.xlu0 %v2309, 127
        %v2334 = vpop.permute.xlu0 %2333
        %v2335 = vsel %vm795, %v2330, %v2332
        %v2336 = vsel %vm795, %v2332, %v2334
        %2342 = vrot.lane.b32.xlu0 %v2312, 126
        %v2343 = vpop.permute.xlu0 %2342
        %2344 = vrot.lane.b32.xlu0 %v2313, 126
        %v2345 = vpop.permute.xlu0 %2344
        %2346 = vrot.lane.b32.xlu0 %v2314, 126
        %v2347 = vpop.permute.xlu0 %2346
        %v2348 = vsel %vm812, %v2343, %v2345
        %v2349 = vsel %vm812, %v2345, %v2347
        %2355 = vrot.lane.b32.xlu0 %v2315, 112
        %v2356 = vpop.permute.xlu0 %2355
        %2357 = vrot.lane.b32.xlu0 %v2316, 112
        %v2358 = vpop.permute.xlu0 %2357
        %2359 = vrot.lane.b32.xlu0 %v2317, 112
        %v2360 = vpop.permute.xlu0 %2359
        %v2361 = vsel %vm829, %v2356, %v2358
        %v2362 = vsel %vm829, %v2358, %v2360
        %2365 = vrot.lane.b32.xlu0 %v2308, 111
        %v2366 = vpop.permute.xlu0 %2365
        %2367 = vrot.lane.b32.xlu0 %v2304, 111
        %v2368 = vpop.permute.xlu0 %2367
        %2369 = vrot.lane.b32.xlu0 %v2309, 111
        %v2370 = vpop.permute.xlu0 %2369
        %v2371 = vsel %vm843, %v2366, %v2368
        %v2372 = vsel %vm843, %v2368, %v2370
        %2378 = vrot.lane.b32.xlu0 %v2318, 110
        %v2379 = vpop.permute.xlu0 %2378
        %2380 = vrot.lane.b32.xlu0 %v2319, 110
        %v2381 = vpop.permute.xlu0 %2380
        %2382 = vrot.lane.b32.xlu0 %v2320, 110
        %v2383 = vpop.permute.xlu0 %2382
        %v2384 = vsel %vm860, %v2379, %v2381
        %v2385 = vsel %vm860, %v2381, %v2383
        %2391 = vrot.lane.b32.xlu0 %v2321, 96
        %v2392 = vpop.permute.xlu0 %2391
        %2393 = vrot.lane.b32.xlu0 %v2322, 96
        %v2394 = vpop.permute.xlu0 %2393
        %2395 = vrot.lane.b32.xlu0 %v2323, 96
        %v2396 = vpop.permute.xlu0 %2395
        %v2397 = vsel %vm877, %v2392, %v2394
        %v2398 = vsel %vm877, %v2394, %v2396
        %2401 = vrot.lane.b32.xlu0 %v2308, 95
        %v2402 = vpop.permute.xlu0 %2401
        %2403 = vrot.lane.b32.xlu0 %v2304, 95
        %v2404 = vpop.permute.xlu0 %2403
        %2405 = vrot.lane.b32.xlu0 %v2309, 95
        %v2406 = vpop.permute.xlu0 %2405
        %v2407 = vsel %vm891, %v2402, %v2404
        %v2408 = vsel %vm891, %v2404, %v2406
        %2414 = vrot.lane.b32.xlu0 %v2324, 94
        %v2415 = vpop.permute.xlu0 %2414
        %2416 = vrot.lane.b32.xlu0 %v2325, 94
        %v2417 = vpop.permute.xlu0 %2416
        %2418 = vrot.lane.b32.xlu0 %v2326, 94
        %v2419 = vpop.permute.xlu0 %2418
        %v2420 = vsel %vm905, %v2415, %v2417
        %v2421 = vsel %vm905, %v2417, %v2419
        %v2425 = vsel %vm1145, %v2085, 0
        %2427 = vmatprep.subr.mxu0 0.0
        %2428 = vmatpush1.msra.mxu0 0.0
        %2429 = vmatprep.subr.mxu0 0.0
        %2430 = vmatpush1.msra.mxu0 0.0
        %2431 = vmatprep.subr.mxu0 0.0
        %2432 = vmatpush1.msra.mxu0 0.0
        %2433 = vmatprep.subr.mxu0 0.0
        %2434 = vmatpush1.msra.mxu0 0.0
        %2435 = vmatprep.subr.mxu0 0.0
        %2436 = vmatpush1.msra.mxu0 0.0
        %2437 = vmatprep.subr.mxu0 0.0
        %2438 = vmatpush1.msra.mxu0 0.0
        %2439 = vmatprep.subr.mxu0 0.0
        %2440 = vmatpush1.msra.mxu0 0.0
        %2441 = vmatprep.subr.mxu0 %v2421
        %2442 = vmatpush1.msra.mxu0 %v2420
        %2443 = vmatprep.subr.mxu0 %v2408
        %2444 = vmatpush1.msra.mxu0 %v2407
        %2445 = vmatprep.subr.mxu0 %v2398
        %2446 = vmatpush1.msra.mxu0 %v2397
        %2447 = vmatprep.subr.mxu0 %v2385
        %2448 = vmatpush1.msra.mxu0 %v2384
        %2449 = vmatprep.subr.mxu0 %v2372
        %2450 = vmatpush1.msra.mxu0 %v2371
        %2451 = vmatprep.subr.mxu0 %v2362
        %2452 = vmatpush1.msra.mxu0 %v2361
        %2453 = vmatprep.subr.mxu0 %v2349
        %2454 = vmatpush1.msra.mxu0 %v2348
        %2455 = vmatprep.subr.mxu0 %v2336
        %2456 = vmatpush1.msra.mxu0 %v2335
        %2457 = vmatprep.subr.mxu0 %v2311
        %2458 = vmatpush1.msra.mxu0 %v2310
        %2459 = vmatprep.subr.mxu0 0.0
        %2460 = vmatpush2.msra.mxu0 0.0
        %2461 = vmatprep.subr.mxu0 0.0
        %2462 = vmatpush2.msra.mxu0 0.0
        %2463 = vmatprep.subr.mxu0 0.0
        %2464 = vmatpush2.msra.mxu0 0.0
        %2465 = vmatprep.subr.mxu0 0.0
        %2466 = vmatpush2.msra.mxu0 0.0
        %2467 = vmatprep.subr.mxu0 0.0
        %2468 = vmatpush2.msra.mxu0 0.0
        %2469 = vmatprep.subr.mxu0 0.0
        %2470 = vmatpush2.msra.mxu0 0.0
        %2471 = vmatprep.subr.mxu0 0.0
        %2472 = vmatpush2.msra.mxu0 0.0
        %2473 = vmatprep.subr.mxu0 0.0
        %2474 = vmatpush2.msra.mxu0 0.0
        %2475 = vmatprep.subr.mxu0 0.0
        %2476 = vmatpush2.msra.mxu0 0.0
        %2477 = vmatprep.subr.mxu0 0.0
        %2478 = vmatpush2.msra.mxu0 0.0
        %2479 = vmatprep.subr.mxu0 0.0
        %2480 = vmatpush2.msra.mxu0 0.0
        %2481 = vmatprep.subr.mxu0 0.0
        %2482 = vmatpush2.msra.mxu0 0.0
        %2483 = vmatprep.subr.mxu0 0.0
        %2484 = vmatpush2.msra.mxu0 0.0
        %2485 = vmatprep.subr.mxu0 0.0
        %2486 = vmatpush2.msra.mxu0 0.0
        %2487 = vmatprep.subr.mxu0 0.0
        %2488 = vmatpush2.msra.mxu0 0.0
        %2489 = vmatprep.subr.mxu0 0.0
        %2490 = vmatpush2.msra.mxu0 0.0
        %2491 = vmatprep.mubr.f32.mxu0 0.0
        %2492 = vmatmul.mubr.f32.gmra.mxu0 %v2425
        %v2493 = vpop.f32.mrf.mxu0
        %v2494 = vadd.f32 %v2082, %v2493
        %v2495 = vpop.f32.mrf.mxu0
        %v2496 = vadd.f32 %v2083, %v2495
        %2497 = vdwg.mxu0
        %vm2498 = vcmp.gt.f32.partialorder %v2494, 0.0
        %vm2499 = vcmp.gt.f32.partialorder %v2496, 0.0
        %v2500 = vmin.f32 %v2494, 0.0
        %v2501 = vmin.f32 %v2496, 0.0
        %v2502 = vmul.f32 %v2500, 1.442695
        %v2503 = vpow.pop %v2502
        %v2504 = vmul.f32 %v2501, 1.442695
        %v2505 = vpow.pop %v2504
        %v2506 = vsub.f32 %v2503, 1.0
        %v2507 = vsub.f32 %v2505, 1.0
        %v2508 = vsel %vm2498, %v2494, %v2506
        %v2509 = vsel %vm2499, %v2496, %v2507
        %v2510 = vld [vmem:[%s10] sm:$0x7]
        %v2511 = vld [vmem:[%s11] sm:$0x7]
        %v2512 = vld [vmem:[#allocation7] sm:$0x7]
        %vm2513 = vcmask 64512
        %v2515 = vsel %vm2513, %v2512, 0
        %2517 = vmatprep.subr.mxu0 0.0
        %2518 = vmatpush1.msra.mxu0 0.0
        %2519 = vmatprep.subr.mxu0 0.0
        %2520 = vmatpush1.msra.mxu0 0.0
        %2521 = vmatprep.subr.mxu0 0.0
        %2522 = vmatpush1.msra.mxu0 0.0
        %2523 = vmatprep.subr.mxu0 0.0
        %2524 = vmatpush1.msra.mxu0 0.0
        %2525 = vmatprep.subr.mxu0 0.0
        %2526 = vmatpush1.msra.mxu0 0.0
        %2527 = vmatprep.subr.mxu0 0.0
        %2528 = vmatpush1.msra.mxu0 0.0
        %2529 = vmatprep.subr.mxu0 0.0
        %2530 = vmatpush1.msra.mxu0 0.0
        %2531 = vmatprep.subr.mxu0 0.0
        %2532 = vmatpush1.msra.mxu0 0.0
        %2533 = vmatprep.subr.mxu0 0.0
        %2534 = vmatpush1.msra.mxu0 0.0
        %2535 = vmatprep.subr.mxu0 0.0
        %2536 = vmatpush1.msra.mxu0 0.0
        %2537 = vmatprep.subr.mxu0 0.0
        %2538 = vmatpush1.msra.mxu0 0.0
        %2539 = vmatprep.subr.mxu0 0.0
        %2540 = vmatpush1.msra.mxu0 0.0
        %2541 = vmatprep.subr.mxu0 0.0
        %2542 = vmatpush1.msra.mxu0 0.0
        %2543 = vmatprep.subr.mxu0 0.0
        %2544 = vmatpush1.msra.mxu0 0.0
        %2545 = vmatprep.subr.mxu0 0.0
        %2546 = vmatpush1.msra.mxu0 0.0
        %2547 = vmatprep.subr.mxu0 %v2509
        %2548 = vmatpush1.msra.mxu0 %v2508
        %2549 = vmatprep.subr.mxu0 0.0
        %2550 = vmatpush2.msra.mxu0 0.0
        %2551 = vmatprep.subr.mxu0 0.0
        %2552 = vmatpush2.msra.mxu0 0.0
        %2553 = vmatprep.subr.mxu0 0.0
        %2554 = vmatpush2.msra.mxu0 0.0
        %2555 = vmatprep.subr.mxu0 0.0
        %2556 = vmatpush2.msra.mxu0 0.0
        %2557 = vmatprep.subr.mxu0 0.0
        %2558 = vmatpush2.msra.mxu0 0.0
        %2559 = vmatprep.subr.mxu0 0.0
        %2560 = vmatpush2.msra.mxu0 0.0
        %2561 = vmatprep.subr.mxu0 0.0
        %2562 = vmatpush2.msra.mxu0 0.0
        %2563 = vmatprep.subr.mxu0 0.0
        %2564 = vmatpush2.msra.mxu0 0.0
        %2565 = vmatprep.subr.mxu0 0.0
        %2566 = vmatpush2.msra.mxu0 0.0
        %2567 = vmatprep.subr.mxu0 0.0
        %2568 = vmatpush2.msra.mxu0 0.0
        %2569 = vmatprep.subr.mxu0 0.0
        %2570 = vmatpush2.msra.mxu0 0.0
        %2571 = vmatprep.subr.mxu0 0.0
        %2572 = vmatpush2.msra.mxu0 0.0
        %2573 = vmatprep.subr.mxu0 0.0
        %2574 = vmatpush2.msra.mxu0 0.0
        %2575 = vmatprep.subr.mxu0 0.0
        %2576 = vmatpush2.msra.mxu0 0.0
        %2577 = vmatprep.subr.mxu0 0.0
        %2578 = vmatpush2.msra.mxu0 0.0
        %2579 = vmatprep.subr.mxu0 0.0
        %2580 = vmatpush2.msra.mxu0 0.0
        %2581 = vmatprep.mubr.f32.mxu0 0.0
        %2582 = vmatmul.mubr.f32.gmra.mxu0 %v2515
        %v2583 = vpop.f32.mrf.mxu0
        %v2584 = vadd.f32 0.0, %v2583
        %v2585 = vpop.f32.mrf.mxu0
        %v2586 = vadd.f32 0.0, %v2585
        %2587 = vdwg.mxu0
        %vm2588 = vcmp.gt.f32.partialorder %v2584, 0.0
        %vm2589 = vcmp.gt.f32.partialorder %v2586, 0.0
        %v2590 = vmin.f32 %v2584, 0.0
        %v2591 = vmin.f32 %v2586, 0.0
        %v2592 = vmul.f32 %v2590, 1.442695
        %v2593 = vpow.pop %v2592
        %v2594 = vmul.f32 %v2591, 1.442695
        %v2595 = vpow.pop %v2594
        %v2596 = vsub.f32 %v2593, 1.0
        %v2597 = vsub.f32 %v2595, 1.0
        %v2598 = vsel %vm2588, %v2584, %v2596
        %v2599 = vsel %vm2589, %v2586, %v2597
        %2602 = vrot.lane.b32.xlu0 %v2508, 17
        %v2603 = vpop.permute.xlu0 %2602
        %2604 = vrot.lane.b32.xlu0 %v2509, 17
        %v2605 = vpop.permute.xlu0 %2604
        %v2606 = vsel %vm711, %v2603, %v2605
        %v2610 = vsel %vm711, 0.0, %v2603
        %v2611 = vsel %vm711, %v2605, 0.0
        %v2612 = vmul.f32 %v2610, %v595
        %v2613 = vmul.f32 %v2606, %v596
        %v2614 = vmul.f32 %v2610, %v723
        %v2615 = vmul.f32 %v2606, %v727
        %v2616 = vmul.f32 %v2611, %v725
        %v2617 = vmul.f32 %v2610, %v737
        %v2618 = vmul.f32 %v2606, %v741
        %v2619 = vmul.f32 %v2611, %v739
        %v2620 = vmul.f32 %v2610, %v749
        %v2621 = vmul.f32 %v2606, %v753
        %v2622 = vmul.f32 %v2611, %v751
        %v2623 = vmul.f32 %v2610, %v761
        %v2624 = vmul.f32 %v2606, %v765
        %v2625 = vmul.f32 %v2611, %v763
        %v2626 = vmul.f32 %v2610, %v773
        %v2627 = vmul.f32 %v2606, %v777
        %v2628 = vmul.f32 %v2611, %v775
        %2631 = vrot.lane.b32.xlu0 %v2610, 127
        %v2632 = vpop.permute.xlu0 %2631
        %2633 = vrot.lane.b32.xlu0 %v2606, 127
        %v2634 = vpop.permute.xlu0 %2633
        %2635 = vrot.lane.b32.xlu0 %v2611, 127
        %v2636 = vpop.permute.xlu0 %2635
        %v2637 = vsel %vm795, %v2632, %v2634
        %v2638 = vsel %vm795, %v2634, %v2636
        %2644 = vrot.lane.b32.xlu0 %v2614, 126
        %v2645 = vpop.permute.xlu0 %2644
        %2646 = vrot.lane.b32.xlu0 %v2615, 126
        %v2647 = vpop.permute.xlu0 %2646
        %2648 = vrot.lane.b32.xlu0 %v2616, 126
        %v2649 = vpop.permute.xlu0 %2648
        %v2650 = vsel %vm812, %v2645, %v2647
        %v2651 = vsel %vm812, %v2647, %v2649
        %2657 = vrot.lane.b32.xlu0 %v2617, 112
        %v2658 = vpop.permute.xlu0 %2657
        %2659 = vrot.lane.b32.xlu0 %v2618, 112
        %v2660 = vpop.permute.xlu0 %2659
        %2661 = vrot.lane.b32.xlu0 %v2619, 112
        %v2662 = vpop.permute.xlu0 %2661
        %v2663 = vsel %vm829, %v2658, %v2660
        %v2664 = vsel %vm829, %v2660, %v2662
        %2667 = vrot.lane.b32.xlu0 %v2610, 111
        %v2668 = vpop.permute.xlu0 %2667
        %2669 = vrot.lane.b32.xlu0 %v2606, 111
        %v2670 = vpop.permute.xlu0 %2669
        %2671 = vrot.lane.b32.xlu0 %v2611, 111
        %v2672 = vpop.permute.xlu0 %2671
        %v2673 = vsel %vm843, %v2668, %v2670
        %v2674 = vsel %vm843, %v2670, %v2672
        %2680 = vrot.lane.b32.xlu0 %v2620, 110
        %v2681 = vpop.permute.xlu0 %2680
        %2682 = vrot.lane.b32.xlu0 %v2621, 110
        %v2683 = vpop.permute.xlu0 %2682
        %2684 = vrot.lane.b32.xlu0 %v2622, 110
        %v2685 = vpop.permute.xlu0 %2684
        %v2686 = vsel %vm860, %v2681, %v2683
        %v2687 = vsel %vm860, %v2683, %v2685
        %2693 = vrot.lane.b32.xlu0 %v2623, 96
        %v2694 = vpop.permute.xlu0 %2693
        %2695 = vrot.lane.b32.xlu0 %v2624, 96
        %v2696 = vpop.permute.xlu0 %2695
        %2697 = vrot.lane.b32.xlu0 %v2625, 96
        %v2698 = vpop.permute.xlu0 %2697
        %v2699 = vsel %vm877, %v2694, %v2696
        %v2700 = vsel %vm877, %v2696, %v2698
        %2703 = vrot.lane.b32.xlu0 %v2610, 95
        %v2704 = vpop.permute.xlu0 %2703
        %2705 = vrot.lane.b32.xlu0 %v2606, 95
        %v2706 = vpop.permute.xlu0 %2705
        %2707 = vrot.lane.b32.xlu0 %v2611, 95
        %v2708 = vpop.permute.xlu0 %2707
        %v2709 = vsel %vm891, %v2704, %v2706
        %v2710 = vsel %vm891, %v2706, %v2708
        %2716 = vrot.lane.b32.xlu0 %v2626, 94
        %v2717 = vpop.permute.xlu0 %2716
        %2718 = vrot.lane.b32.xlu0 %v2627, 94
        %v2719 = vpop.permute.xlu0 %2718
        %2720 = vrot.lane.b32.xlu0 %v2628, 94
        %v2721 = vpop.permute.xlu0 %2720
        %v2722 = vsel %vm905, %v2717, %v2719
        %v2723 = vsel %vm905, %v2719, %v2721
        %v2727 = vsel %vm1145, %v2510, 0
        %2729 = vmatprep.subr.mxu0 0.0
        %2730 = vmatpush1.msra.mxu0 0.0
        %2731 = vmatprep.subr.mxu0 0.0
        %2732 = vmatpush1.msra.mxu0 0.0
        %2733 = vmatprep.subr.mxu0 0.0
        %2734 = vmatpush1.msra.mxu0 0.0
        %2735 = vmatprep.subr.mxu0 0.0
        %2736 = vmatpush1.msra.mxu0 0.0
        %2737 = vmatprep.subr.mxu0 0.0
        %2738 = vmatpush1.msra.mxu0 0.0
        %2739 = vmatprep.subr.mxu0 0.0
        %2740 = vmatpush1.msra.mxu0 0.0
        %2741 = vmatprep.subr.mxu0 0.0
        %2742 = vmatpush1.msra.mxu0 0.0
        %2743 = vmatprep.subr.mxu0 %v2723
        %2744 = vmatpush1.msra.mxu0 %v2722
        %2745 = vmatprep.subr.mxu0 %v2710
        %2746 = vmatpush1.msra.mxu0 %v2709
        %2747 = vmatprep.subr.mxu0 %v2700
        %2748 = vmatpush1.msra.mxu0 %v2699
        %2749 = vmatprep.subr.mxu0 %v2687
        %2750 = vmatpush1.msra.mxu0 %v2686
        %2751 = vmatprep.subr.mxu0 %v2674
        %2752 = vmatpush1.msra.mxu0 %v2673
        %2753 = vmatprep.subr.mxu0 %v2664
        %2754 = vmatpush1.msra.mxu0 %v2663
        %2755 = vmatprep.subr.mxu0 %v2651
        %2756 = vmatpush1.msra.mxu0 %v2650
        %2757 = vmatprep.subr.mxu0 %v2638
        %2758 = vmatpush1.msra.mxu0 %v2637
        %2759 = vmatprep.subr.mxu0 %v2613
        %2760 = vmatpush1.msra.mxu0 %v2612
        %2761 = vmatprep.subr.mxu0 0.0
        %2762 = vmatpush2.msra.mxu0 0.0
        %2763 = vmatprep.subr.mxu0 0.0
        %2764 = vmatpush2.msra.mxu0 0.0
        %2765 = vmatprep.subr.mxu0 0.0
        %2766 = vmatpush2.msra.mxu0 0.0
        %2767 = vmatprep.subr.mxu0 0.0
        %2768 = vmatpush2.msra.mxu0 0.0
        %2769 = vmatprep.subr.mxu0 0.0
        %2770 = vmatpush2.msra.mxu0 0.0
        %2771 = vmatprep.subr.mxu0 0.0
        %2772 = vmatpush2.msra.mxu0 0.0
        %2773 = vmatprep.subr.mxu0 0.0
        %2774 = vmatpush2.msra.mxu0 0.0
        %2775 = vmatprep.subr.mxu0 0.0
        %2776 = vmatpush2.msra.mxu0 0.0
        %2777 = vmatprep.subr.mxu0 0.0
        %2778 = vmatpush2.msra.mxu0 0.0
        %2779 = vmatprep.subr.mxu0 0.0
        %2780 = vmatpush2.msra.mxu0 0.0
        %2781 = vmatprep.subr.mxu0 0.0
        %2782 = vmatpush2.msra.mxu0 0.0
        %2783 = vmatprep.subr.mxu0 0.0
        %2784 = vmatpush2.msra.mxu0 0.0
        %2785 = vmatprep.subr.mxu0 0.0
        %2786 = vmatpush2.msra.mxu0 0.0
        %2787 = vmatprep.subr.mxu0 0.0
        %2788 = vmatpush2.msra.mxu0 0.0
        %2789 = vmatprep.subr.mxu0 0.0
        %2790 = vmatpush2.msra.mxu0 0.0
        %2791 = vmatprep.subr.mxu0 0.0
        %2792 = vmatpush2.msra.mxu0 0.0
        %2793 = vmatprep.mubr.f32.mxu0 0.0
        %2794 = vmatmul.mubr.f32.gmra.mxu0 %v2727
        %v2795 = vpop.f32.mrf.mxu0
        %v2796 = vadd.f32 0.0, %v2795
        %v2797 = vpop.f32.mrf.mxu0
        %v2798 = vadd.f32 0.0, %v2797
        %2799 = vdwg.mxu0
        %vm2800 = vcmp.gt.f32.partialorder %v2796, 0.0
        %vm2801 = vcmp.gt.f32.partialorder %v2798, 0.0
        %v2802 = vmin.f32 %v2796, 0.0
        %v2803 = vmin.f32 %v2798, 0.0
        %v2804 = vmul.f32 %v2802, 1.442695
        %v2805 = vpow.pop %v2804
        %v2806 = vmul.f32 %v2803, 1.442695
        %v2807 = vpow.pop %v2806
        %v2808 = vsub.f32 %v2805, 1.0
        %v2809 = vsub.f32 %v2807, 1.0
        %v2810 = vsel %vm2800, %v2796, %v2808
        %v2811 = vsel %vm2801, %v2798, %v2809
        %2814 = vrot.lane.b32.xlu0 %v2810, 17
        %v2815 = vpop.permute.xlu0 %2814
        %2816 = vrot.lane.b32.xlu0 %v2811, 17
        %v2817 = vpop.permute.xlu0 %2816
        %v2818 = vsel %vm711, %v2815, %v2817
        %v2822 = vsel %vm711, 0.0, %v2815
        %v2823 = vsel %vm711, %v2817, 0.0
        %v2824 = vmul.f32 %v2822, %v595
        %v2825 = vmul.f32 %v2818, %v596
        %v2826 = vmul.f32 %v2822, %v723
        %v2827 = vmul.f32 %v2818, %v727
        %v2828 = vmul.f32 %v2823, %v725
        %v2829 = vmul.f32 %v2822, %v737
        %v2830 = vmul.f32 %v2818, %v741
        %v2831 = vmul.f32 %v2823, %v739
        %v2832 = vmul.f32 %v2822, %v749
        %v2833 = vmul.f32 %v2818, %v753
        %v2834 = vmul.f32 %v2823, %v751
        %v2835 = vmul.f32 %v2822, %v761
        %v2836 = vmul.f32 %v2818, %v765
        %v2837 = vmul.f32 %v2823, %v763
        %v2838 = vmul.f32 %v2822, %v773
        %v2839 = vmul.f32 %v2818, %v777
        %v2840 = vmul.f32 %v2823, %v775
        %v2843 = vrot.slane %v2822, 5
        %v2844 = vrot.slane %v2818, 5
        %v2845 = vrot.slane %v2823, 5
        %2846 = vrot.lane.b32.xlu0 %v2843, 127
        %v2847 = vpop.permute.xlu0 %2846
        %2848 = vrot.lane.b32.xlu0 %v2844, 127
        %v2849 = vpop.permute.xlu0 %2848
        %2850 = vrot.lane.b32.xlu0 %v2845, 127
        %v2851 = vpop.permute.xlu0 %2850
        %v2852 = vsel %vm795, %v2847, %v2849
        %v2853 = vsel %vm795, %v2849, %v2851
        %v2859 = vrot.slane %v2826, 2
        %v2860 = vrot.slane %v2827, 2
        %v2861 = vrot.slane %v2828, 2
        %2862 = vrot.lane.b32.xlu0 %v2859, 126
        %v2863 = vpop.permute.xlu0 %2862
        %2864 = vrot.lane.b32.xlu0 %v2860, 126
        %v2865 = vpop.permute.xlu0 %2864
        %2866 = vrot.lane.b32.xlu0 %v2861, 126
        %v2867 = vpop.permute.xlu0 %2866
        %v2868 = vsel %vm812, %v2863, %v2865
        %v2869 = vsel %vm812, %v2865, %v2867
        %v2875 = vrot.slane %v2829, 7
        %v2876 = vrot.slane %v2830, 7
        %v2877 = vrot.slane %v2831, 7
        %2878 = vrot.lane.b32.xlu0 %v2875, 112
        %v2879 = vpop.permute.xlu0 %2878
        %2880 = vrot.lane.b32.xlu0 %v2876, 112
        %v2881 = vpop.permute.xlu0 %2880
        %2882 = vrot.lane.b32.xlu0 %v2877, 112
        %v2883 = vpop.permute.xlu0 %2882
        %v2884 = vsel %vm829, %v2879, %v2881
        %v2885 = vsel %vm829, %v2881, %v2883
        %v2888 = vrot.slane %v2822, 4
        %v2889 = vrot.slane %v2818, 4
        %v2890 = vrot.slane %v2823, 4
        %2891 = vrot.lane.b32.xlu0 %v2888, 111
        %v2892 = vpop.permute.xlu0 %2891
        %2893 = vrot.lane.b32.xlu0 %v2889, 111
        %v2894 = vpop.permute.xlu0 %2893
        %2895 = vrot.lane.b32.xlu0 %v2890, 111
        %v2896 = vpop.permute.xlu0 %2895
        %v2897 = vsel %vm843, %v2892, %v2894
        %v2898 = vsel %vm843, %v2894, %v2896
        %v2904 = vrot.slane %v2832, 1
        %v2905 = vrot.slane %v2833, 1
        %v2906 = vrot.slane %v2834, 1
        %2907 = vrot.lane.b32.xlu0 %v2904, 110
        %v2908 = vpop.permute.xlu0 %2907
        %2909 = vrot.lane.b32.xlu0 %v2905, 110
        %v2910 = vpop.permute.xlu0 %2909
        %2911 = vrot.lane.b32.xlu0 %v2906, 110
        %v2912 = vpop.permute.xlu0 %2911
        %v2913 = vsel %vm860, %v2908, %v2910
        %v2914 = vsel %vm860, %v2910, %v2912
        %v2920 = vrot.slane %v2835, 6
        %v2921 = vrot.slane %v2836, 6
        %v2922 = vrot.slane %v2837, 6
        %2923 = vrot.lane.b32.xlu0 %v2920, 96
        %v2924 = vpop.permute.xlu0 %2923
        %2925 = vrot.lane.b32.xlu0 %v2921, 96
        %v2926 = vpop.permute.xlu0 %2925
        %2927 = vrot.lane.b32.xlu0 %v2922, 96
        %v2928 = vpop.permute.xlu0 %2927
        %v2929 = vsel %vm877, %v2924, %v2926
        %v2930 = vsel %vm877, %v2926, %v2928
        %v2933 = vrot.slane %v2822, 3
        %v2934 = vrot.slane %v2818, 3
        %v2935 = vrot.slane %v2823, 3
        %2936 = vrot.lane.b32.xlu0 %v2933, 95
        %v2937 = vpop.permute.xlu0 %2936
        %2938 = vrot.lane.b32.xlu0 %v2934, 95
        %v2939 = vpop.permute.xlu0 %2938
        %2940 = vrot.lane.b32.xlu0 %v2935, 95
        %v2941 = vpop.permute.xlu0 %2940
        %v2942 = vsel %vm891, %v2937, %v2939
        %v2943 = vsel %vm891, %v2939, %v2941
        %2949 = vrot.lane.b32.xlu0 %v2838, 94
        %v2950 = vpop.permute.xlu0 %2949
        %2951 = vrot.lane.b32.xlu0 %v2839, 94
        %v2952 = vpop.permute.xlu0 %2951
        %2953 = vrot.lane.b32.xlu0 %v2840, 94
        %v2954 = vpop.permute.xlu0 %2953
        %v2955 = vsel %vm905, %v2950, %v2952
        %v2956 = vsel %vm905, %v2952, %v2954
        %v2957 = vsel %vm619, %v2824, %v2852
        %v2958 = vsel %vm619, %v2825, %v2853
        %v2959 = vsel %vm910, %v2957, %v2868
        %v2960 = vsel %vm910, %v2958, %v2869
        %v2961 = vsel %vm913, %v2868, %v2884
        %v2962 = vsel %vm913, %v2869, %v2885
        %v2963 = vsel %vm916, %v2961, %v2897
        %v2964 = vsel %vm916, %v2962, %v2898
        %v2965 = vsel %vm919, %v2963, %v2913
        %v2966 = vsel %vm919, %v2964, %v2914
        %v2967 = vsel %vm922, %v2913, %v2929
        %v2968 = vsel %vm922, %v2914, %v2930
        %v2969 = vsel %vm925, %v2967, %v2942
        %v2970 = vsel %vm925, %v2968, %v2943
        %v2972 = vsel %vm928, %v2511, 0
        %v2974 = vsel %vm619, %v2955, 0
        %v2976 = vsel %vm619, %v2956, 0
        %2978 = vmatprep.subr.mxu0 0.0
        %2979 = vmatpush1.msra.mxu0 0.0
        %2980 = vmatprep.subr.mxu0 0.0
        %2981 = vmatpush1.msra.mxu0 0.0
        %2982 = vmatprep.subr.mxu0 0.0
        %2983 = vmatpush1.msra.mxu0 0.0
        %2984 = vmatprep.subr.mxu0 0.0
        %2985 = vmatpush1.msra.mxu0 0.0
        %2986 = vmatprep.subr.mxu0 0.0
        %2987 = vmatpush1.msra.mxu0 0.0
        %2988 = vmatprep.subr.mxu0 0.0
        %2989 = vmatpush1.msra.mxu0 0.0
        %2990 = vmatprep.subr.mxu0 0.0
        %2991 = vmatpush1.msra.mxu0 0.0
        %2992 = vmatprep.subr.mxu0 0.0
        %2993 = vmatpush1.msra.mxu0 0.0
        %2994 = vmatprep.subr.mxu0 0.0
        %2995 = vmatpush1.msra.mxu0 0.0
        %2996 = vmatprep.subr.mxu0 0.0
        %2997 = vmatpush1.msra.mxu0 0.0
        %2998 = vmatprep.subr.mxu0 0.0
        %2999 = vmatpush1.msra.mxu0 0.0
        %3000 = vmatprep.subr.mxu0 0.0
        %3001 = vmatpush1.msra.mxu0 0.0
        %3002 = vmatprep.subr.mxu0 %v2976
        %3003 = vmatpush1.msra.mxu0 %v2974
        %3004 = vmatprep.subr.mxu0 %v2970
        %3005 = vmatpush1.msra.mxu0 %v2969
        %3006 = vmatprep.subr.mxu0 %v2966
        %3007 = vmatpush1.msra.mxu0 %v2965
        %3008 = vmatprep.subr.mxu0 %v2960
        %3009 = vmatpush1.msra.mxu0 %v2959
        %3010 = vmatprep.subr.mxu0 0.0
        %3011 = vmatpush2.msra.mxu0 0.0
        %3012 = vmatprep.subr.mxu0 0.0
        %3013 = vmatpush2.msra.mxu0 0.0
        %3014 = vmatprep.subr.mxu0 0.0
        %3015 = vmatpush2.msra.mxu0 0.0
        %3016 = vmatprep.subr.mxu0 0.0
        %3017 = vmatpush2.msra.mxu0 0.0
        %3018 = vmatprep.subr.mxu0 0.0
        %3019 = vmatpush2.msra.mxu0 0.0
        %3020 = vmatprep.subr.mxu0 0.0
        %3021 = vmatpush2.msra.mxu0 0.0
        %3022 = vmatprep.subr.mxu0 0.0
        %3023 = vmatpush2.msra.mxu0 0.0
        %3024 = vmatprep.subr.mxu0 0.0
        %3025 = vmatpush2.msra.mxu0 0.0
        %3026 = vmatprep.subr.mxu0 0.0
        %3027 = vmatpush2.msra.mxu0 0.0
        %3028 = vmatprep.subr.mxu0 0.0
        %3029 = vmatpush2.msra.mxu0 0.0
        %3030 = vmatprep.subr.mxu0 0.0
        %3031 = vmatpush2.msra.mxu0 0.0
        %3032 = vmatprep.subr.mxu0 0.0
        %3033 = vmatpush2.msra.mxu0 0.0
        %3034 = vmatprep.subr.mxu0 0.0
        %3035 = vmatpush2.msra.mxu0 0.0
        %3036 = vmatprep.subr.mxu0 0.0
        %3037 = vmatpush2.msra.mxu0 0.0
        %3038 = vmatprep.subr.mxu0 0.0
        %3039 = vmatpush2.msra.mxu0 0.0
        %3040 = vmatprep.subr.mxu0 0.0
        %3041 = vmatpush2.msra.mxu0 0.0
        %3042 = vmatprep.mubr.f32.mxu0 0.0
        %3043 = vmatmul.mubr.f32.gmra.mxu0 %v2972
        %v3044 = vpop.f32.mrf.mxu0
        %v3045 = vadd.f32 %v2598, %v3044
        %v3046 = vpop.f32.mrf.mxu0
        %v3047 = vadd.f32 %v2599, %v3046
        %3048 = vdwg.mxu0
        %vm3049 = vcmp.gt.f32.partialorder %v3045, 0.0
        %vm3050 = vcmp.gt.f32.partialorder %v3047, 0.0
        %v3051 = vmin.f32 %v3045, 0.0
        %v3052 = vmin.f32 %v3047, 0.0
        %v3053 = vmul.f32 %v3051, 1.442695
        %v3054 = vpow.pop %v3053
        %v3055 = vmul.f32 %v3052, 1.442695
        %v3056 = vpow.pop %v3055
        %v3057 = vsub.f32 %v3054, 1.0
        %v3058 = vsub.f32 %v3056, 1.0
        %v3059 = vsel %vm3049, %v3045, %v3057
        %v3060 = vsel %vm3050, %v3047, %v3058
        %v3061 = vld [vmem:[#allocation9] sm:$0x7]
        %v3062 = vld [vmem:[%s14] sm:$0x7]
        %3065 = vrot.lane.b32.xlu0 %v3059, 17
        %v3066 = vpop.permute.xlu0 %3065
        %3067 = vrot.lane.b32.xlu0 %v3060, 17
        %v3068 = vpop.permute.xlu0 %3067
        %v3069 = vsel %vm711, %v3066, %v3068
        %v3073 = vsel %vm711, 0.0, %v3066
        %v3074 = vsel %vm711, %v3068, 0.0
        %v3075 = vmul.f32 %v3073, %v595
        %v3076 = vmul.f32 %v3069, %v596
        %v3077 = vmul.f32 %v3073, %v723
        %v3078 = vmul.f32 %v3069, %v727
        %v3079 = vmul.f32 %v3074, %v725
        %v3080 = vmul.f32 %v3073, %v737
        %v3081 = vmul.f32 %v3069, %v741
        %v3082 = vmul.f32 %v3074, %v739
        %v3083 = vmul.f32 %v3073, %v749
        %v3084 = vmul.f32 %v3069, %v753
        %v3085 = vmul.f32 %v3074, %v751
        %v3086 = vmul.f32 %v3073, %v761
        %v3087 = vmul.f32 %v3069, %v765
        %v3088 = vmul.f32 %v3074, %v763
        %v3089 = vmul.f32 %v3073, %v773
        %v3090 = vmul.f32 %v3069, %v777
        %v3091 = vmul.f32 %v3074, %v775
        %v3094 = vrot.slane %v3073, 5
        %v3095 = vrot.slane %v3069, 5
        %v3096 = vrot.slane %v3074, 5
        %3097 = vrot.lane.b32.xlu0 %v3094, 127
        %v3098 = vpop.permute.xlu0 %3097
        %3099 = vrot.lane.b32.xlu0 %v3095, 127
        %v3100 = vpop.permute.xlu0 %3099
        %3101 = vrot.lane.b32.xlu0 %v3096, 127
        %v3102 = vpop.permute.xlu0 %3101
        %v3103 = vsel %vm795, %v3098, %v3100
        %v3104 = vsel %vm795, %v3100, %v3102
        %v3110 = vrot.slane %v3077, 2
        %v3111 = vrot.slane %v3078, 2
        %v3112 = vrot.slane %v3079, 2
        %3113 = vrot.lane.b32.xlu0 %v3110, 126
        %v3114 = vpop.permute.xlu0 %3113
        %3115 = vrot.lane.b32.xlu0 %v3111, 126
        %v3116 = vpop.permute.xlu0 %3115
        %3117 = vrot.lane.b32.xlu0 %v3112, 126
        %v3118 = vpop.permute.xlu0 %3117
        %v3119 = vsel %vm812, %v3114, %v3116
        %v3120 = vsel %vm812, %v3116, %v3118
        %v3126 = vrot.slane %v3080, 7
        %v3127 = vrot.slane %v3081, 7
        %v3128 = vrot.slane %v3082, 7
        %3129 = vrot.lane.b32.xlu0 %v3126, 112
        %v3130 = vpop.permute.xlu0 %3129
        %3131 = vrot.lane.b32.xlu0 %v3127, 112
        %v3132 = vpop.permute.xlu0 %3131
        %3133 = vrot.lane.b32.xlu0 %v3128, 112
        %v3134 = vpop.permute.xlu0 %3133
        %v3135 = vsel %vm829, %v3130, %v3132
        %v3136 = vsel %vm829, %v3132, %v3134
        %v3139 = vrot.slane %v3073, 4
        %v3140 = vrot.slane %v3069, 4
        %v3141 = vrot.slane %v3074, 4
        %3142 = vrot.lane.b32.xlu0 %v3139, 111
        %v3143 = vpop.permute.xlu0 %3142
        %3144 = vrot.lane.b32.xlu0 %v3140, 111
        %v3145 = vpop.permute.xlu0 %3144
        %3146 = vrot.lane.b32.xlu0 %v3141, 111
        %v3147 = vpop.permute.xlu0 %3146
        %v3148 = vsel %vm843, %v3143, %v3145
        %v3149 = vsel %vm843, %v3145, %v3147
        %v3155 = vrot.slane %v3083, 1
        %v3156 = vrot.slane %v3084, 1
        %v3157 = vrot.slane %v3085, 1
        %3158 = vrot.lane.b32.xlu0 %v3155, 110
        %v3159 = vpop.permute.xlu0 %3158
        %3160 = vrot.lane.b32.xlu0 %v3156, 110
        %v3161 = vpop.permute.xlu0 %3160
        %3162 = vrot.lane.b32.xlu0 %v3157, 110
        %v3163 = vpop.permute.xlu0 %3162
        %v3164 = vsel %vm860, %v3159, %v3161
        %v3165 = vsel %vm860, %v3161, %v3163
        %v3171 = vrot.slane %v3086, 6
        %v3172 = vrot.slane %v3087, 6
        %v3173 = vrot.slane %v3088, 6
        %3174 = vrot.lane.b32.xlu0 %v3171, 96
        %v3175 = vpop.permute.xlu0 %3174
        %3176 = vrot.lane.b32.xlu0 %v3172, 96
        %v3177 = vpop.permute.xlu0 %3176
        %3178 = vrot.lane.b32.xlu0 %v3173, 96
        %v3179 = vpop.permute.xlu0 %3178
        %v3180 = vsel %vm877, %v3175, %v3177
        %v3181 = vsel %vm877, %v3177, %v3179
        %v3184 = vrot.slane %v3073, 3
        %v3185 = vrot.slane %v3069, 3
        %v3186 = vrot.slane %v3074, 3
        %3187 = vrot.lane.b32.xlu0 %v3184, 95
        %v3188 = vpop.permute.xlu0 %3187
        %3189 = vrot.lane.b32.xlu0 %v3185, 95
        %v3190 = vpop.permute.xlu0 %3189
        %3191 = vrot.lane.b32.xlu0 %v3186, 95
        %v3192 = vpop.permute.xlu0 %3191
        %v3193 = vsel %vm891, %v3188, %v3190
        %v3194 = vsel %vm891, %v3190, %v3192
        %3200 = vrot.lane.b32.xlu0 %v3089, 94
        %v3201 = vpop.permute.xlu0 %3200
        %3202 = vrot.lane.b32.xlu0 %v3090, 94
        %v3203 = vpop.permute.xlu0 %3202
        %3204 = vrot.lane.b32.xlu0 %v3091, 94
        %v3205 = vpop.permute.xlu0 %3204
        %v3206 = vsel %vm905, %v3201, %v3203
        %v3207 = vsel %vm905, %v3203, %v3205
        %v3208 = vsel %vm619, %v3075, %v3103
        %v3209 = vsel %vm619, %v3076, %v3104
        %v3210 = vsel %vm910, %v3208, %v3119
        %v3211 = vsel %vm910, %v3209, %v3120
        %v3212 = vsel %vm913, %v3119, %v3135
        %v3213 = vsel %vm913, %v3120, %v3136
        %v3214 = vsel %vm916, %v3212, %v3148
        %v3215 = vsel %vm916, %v3213, %v3149
        %v3216 = vsel %vm919, %v3214, %v3164
        %v3217 = vsel %vm919, %v3215, %v3165
        %v3218 = vsel %vm922, %v3164, %v3180
        %v3219 = vsel %vm922, %v3165, %v3181
        %v3220 = vsel %vm925, %v3218, %v3193
        %v3221 = vsel %vm925, %v3219, %v3194
        %v3223 = vsel %vm928, %v3061, 0
        %v3225 = vsel %vm619, %v3206, 0
        %v3227 = vsel %vm619, %v3207, 0
        %3229 = vmatprep.subr.mxu0 0.0
        %3230 = vmatpush1.msra.mxu0 0.0
        %3231 = vmatprep.subr.mxu0 0.0
        %3232 = vmatpush1.msra.mxu0 0.0
        %3233 = vmatprep.subr.mxu0 0.0
        %3234 = vmatpush1.msra.mxu0 0.0
        %3235 = vmatprep.subr.mxu0 0.0
        %3236 = vmatpush1.msra.mxu0 0.0
        %3237 = vmatprep.subr.mxu0 0.0
        %3238 = vmatpush1.msra.mxu0 0.0
        %3239 = vmatprep.subr.mxu0 0.0
        %3240 = vmatpush1.msra.mxu0 0.0
        %3241 = vmatprep.subr.mxu0 0.0
        %3242 = vmatpush1.msra.mxu0 0.0
        %3243 = vmatprep.subr.mxu0 0.0
        %3244 = vmatpush1.msra.mxu0 0.0
        %3245 = vmatprep.subr.mxu0 0.0
        %3246 = vmatpush1.msra.mxu0 0.0
        %3247 = vmatprep.subr.mxu0 0.0
        %3248 = vmatpush1.msra.mxu0 0.0
        %3249 = vmatprep.subr.mxu0 0.0
        %3250 = vmatpush1.msra.mxu0 0.0
        %3251 = vmatprep.subr.mxu0 0.0
        %3252 = vmatpush1.msra.mxu0 0.0
        %3253 = vmatprep.subr.mxu0 %v3227
        %3254 = vmatpush1.msra.mxu0 %v3225
        %3255 = vmatprep.subr.mxu0 %v3221
        %3256 = vmatpush1.msra.mxu0 %v3220
        %3257 = vmatprep.subr.mxu0 %v3217
        %3258 = vmatpush1.msra.mxu0 %v3216
        %3259 = vmatprep.subr.mxu0 %v3211
        %3260 = vmatpush1.msra.mxu0 %v3210
        %3261 = vmatprep.subr.mxu0 0.0
        %3262 = vmatpush2.msra.mxu0 0.0
        %3263 = vmatprep.subr.mxu0 0.0
        %3264 = vmatpush2.msra.mxu0 0.0
        %3265 = vmatprep.subr.mxu0 0.0
        %3266 = vmatpush2.msra.mxu0 0.0
        %3267 = vmatprep.subr.mxu0 0.0
        %3268 = vmatpush2.msra.mxu0 0.0
        %3269 = vmatprep.subr.mxu0 0.0
        %3270 = vmatpush2.msra.mxu0 0.0
        %3271 = vmatprep.subr.mxu0 0.0
        %3272 = vmatpush2.msra.mxu0 0.0
        %3273 = vmatprep.subr.mxu0 0.0
        %3274 = vmatpush2.msra.mxu0 0.0
        %3275 = vmatprep.subr.mxu0 0.0
        %3276 = vmatpush2.msra.mxu0 0.0
        %3277 = vmatprep.subr.mxu0 0.0
        %3278 = vmatpush2.msra.mxu0 0.0
        %3279 = vmatprep.subr.mxu0 0.0
        %3280 = vmatpush2.msra.mxu0 0.0
        %3281 = vmatprep.subr.mxu0 0.0
        %3282 = vmatpush2.msra.mxu0 0.0
        %3283 = vmatprep.subr.mxu0 0.0
        %3284 = vmatpush2.msra.mxu0 0.0
        %3285 = vmatprep.subr.mxu0 0.0
        %3286 = vmatpush2.msra.mxu0 0.0
        %3287 = vmatprep.subr.mxu0 0.0
        %3288 = vmatpush2.msra.mxu0 0.0
        %3289 = vmatprep.subr.mxu0 0.0
        %3290 = vmatpush2.msra.mxu0 0.0
        %3291 = vmatprep.subr.mxu0 0.0
        %3292 = vmatpush2.msra.mxu0 0.0
        %3293 = vmatprep.mubr.f32.mxu0 0.0
        %3294 = vmatmul.mubr.f32.gmra.mxu0 %v3223
        %v3295 = vpop.f32.mrf.mxu0
        %v3296 = vadd.f32 0.0, %v3295
        %v3297 = vpop.f32.mrf.mxu0
        %v3298 = vadd.f32 0.0, %v3297
        %3299 = vdwg.mxu0
        %vm3300 = vcmp.gt.f32.partialorder %v3296, 0.0
        %vm3301 = vcmp.gt.f32.partialorder %v3298, 0.0
        %v3302 = vmin.f32 %v3296, 0.0
        %v3303 = vmin.f32 %v3298, 0.0
        %v3304 = vmul.f32 %v3302, 1.442695
        %v3305 = vpow.pop %v3304
        %v3306 = vmul.f32 %v3303, 1.442695
        %v3307 = vpow.pop %v3306
        %v3308 = vsub.f32 %v3305, 1.0
        %v3309 = vsub.f32 %v3307, 1.0
        %v3310 = vsel %vm3300, %v3296, %v3308
        %v3311 = vsel %vm3301, %v3298, %v3309
        %3314 = vrot.lane.b32.xlu0 %v3310, 17
        %v3315 = vpop.permute.xlu0 %3314
        %3316 = vrot.lane.b32.xlu0 %v3311, 17
        %v3317 = vpop.permute.xlu0 %3316
        %v3318 = vsel %vm711, %v3315, %v3317
        %v3322 = vsel %vm711, 0.0, %v3315
        %v3323 = vsel %vm711, %v3317, 0.0
        %v3324 = vmul.f32 %v3322, %v595
        %v3325 = vmul.f32 %v3318, %v596
        %v3326 = vmul.f32 %v3322, %v723
        %v3327 = vmul.f32 %v3318, %v727
        %v3328 = vmul.f32 %v3323, %v725
        %v3329 = vmul.f32 %v3322, %v737
        %v3330 = vmul.f32 %v3318, %v741
        %v3331 = vmul.f32 %v3323, %v739
        %v3332 = vmul.f32 %v3322, %v749
        %v3333 = vmul.f32 %v3318, %v753
        %v3334 = vmul.f32 %v3323, %v751
        %v3335 = vmul.f32 %v3322, %v761
        %v3336 = vmul.f32 %v3318, %v765
        %v3337 = vmul.f32 %v3323, %v763
        %v3338 = vmul.f32 %v3322, %v773
        %v3339 = vmul.f32 %v3318, %v777
        %v3340 = vmul.f32 %v3323, %v775
        %v3343 = vrot.slane %v3322, 5
        %v3344 = vrot.slane %v3318, 5
        %v3345 = vrot.slane %v3323, 5
        %3346 = vrot.lane.b32.xlu0 %v3343, 127
        %v3347 = vpop.permute.xlu0 %3346
        %3348 = vrot.lane.b32.xlu0 %v3344, 127
        %v3349 = vpop.permute.xlu0 %3348
        %3350 = vrot.lane.b32.xlu0 %v3345, 127
        %v3351 = vpop.permute.xlu0 %3350
        %v3352 = vsel %vm795, %v3347, %v3349
        %v3353 = vsel %vm795, %v3349, %v3351
        %v3359 = vrot.slane %v3326, 2
        %v3360 = vrot.slane %v3327, 2
        %v3361 = vrot.slane %v3328, 2
        %3362 = vrot.lane.b32.xlu0 %v3359, 126
        %v3363 = vpop.permute.xlu0 %3362
        %3364 = vrot.lane.b32.xlu0 %v3360, 126
        %v3365 = vpop.permute.xlu0 %3364
        %3366 = vrot.lane.b32.xlu0 %v3361, 126
        %v3367 = vpop.permute.xlu0 %3366
        %v3368 = vsel %vm812, %v3363, %v3365
        %v3369 = vsel %vm812, %v3365, %v3367
        %v3375 = vrot.slane %v3329, 7
        %v3376 = vrot.slane %v3330, 7
        %v3377 = vrot.slane %v3331, 7
        %3378 = vrot.lane.b32.xlu0 %v3375, 112
        %v3379 = vpop.permute.xlu0 %3378
        %3380 = vrot.lane.b32.xlu0 %v3376, 112
        %v3381 = vpop.permute.xlu0 %3380
        %3382 = vrot.lane.b32.xlu0 %v3377, 112
        %v3383 = vpop.permute.xlu0 %3382
        %v3384 = vsel %vm829, %v3379, %v3381
        %v3385 = vsel %vm829, %v3381, %v3383
        %v3388 = vrot.slane %v3322, 4
        %v3389 = vrot.slane %v3318, 4
        %v3390 = vrot.slane %v3323, 4
        %3391 = vrot.lane.b32.xlu0 %v3388, 111
        %v3392 = vpop.permute.xlu0 %3391
        %3393 = vrot.lane.b32.xlu0 %v3389, 111
        %v3394 = vpop.permute.xlu0 %3393
        %3395 = vrot.lane.b32.xlu0 %v3390, 111
        %v3396 = vpop.permute.xlu0 %3395
        %v3397 = vsel %vm843, %v3392, %v3394
        %v3398 = vsel %vm843, %v3394, %v3396
        %v3404 = vrot.slane %v3332, 1
        %v3405 = vrot.slane %v3333, 1
        %v3406 = vrot.slane %v3334, 1
        %3407 = vrot.lane.b32.xlu0 %v3404, 110
        %v3408 = vpop.permute.xlu0 %3407
        %3409 = vrot.lane.b32.xlu0 %v3405, 110
        %v3410 = vpop.permute.xlu0 %3409
        %3411 = vrot.lane.b32.xlu0 %v3406, 110
        %v3412 = vpop.permute.xlu0 %3411
        %v3413 = vsel %vm860, %v3408, %v3410
        %v3414 = vsel %vm860, %v3410, %v3412
        %v3420 = vrot.slane %v3335, 6
        %v3421 = vrot.slane %v3336, 6
        %v3422 = vrot.slane %v3337, 6
        %3423 = vrot.lane.b32.xlu0 %v3420, 96
        %v3424 = vpop.permute.xlu0 %3423
        %3425 = vrot.lane.b32.xlu0 %v3421, 96
        %v3426 = vpop.permute.xlu0 %3425
        %3427 = vrot.lane.b32.xlu0 %v3422, 96
        %v3428 = vpop.permute.xlu0 %3427
        %v3429 = vsel %vm877, %v3424, %v3426
        %v3430 = vsel %vm877, %v3426, %v3428
        %v3433 = vrot.slane %v3322, 3
        %v3434 = vrot.slane %v3318, 3
        %v3435 = vrot.slane %v3323, 3
        %3436 = vrot.lane.b32.xlu0 %v3433, 95
        %v3437 = vpop.permute.xlu0 %3436
        %3438 = vrot.lane.b32.xlu0 %v3434, 95
        %v3439 = vpop.permute.xlu0 %3438
        %3440 = vrot.lane.b32.xlu0 %v3435, 95
        %v3441 = vpop.permute.xlu0 %3440
        %v3442 = vsel %vm891, %v3437, %v3439
        %v3443 = vsel %vm891, %v3439, %v3441
        %3449 = vrot.lane.b32.xlu0 %v3338, 94
        %v3450 = vpop.permute.xlu0 %3449
        %3451 = vrot.lane.b32.xlu0 %v3339, 94
        %v3452 = vpop.permute.xlu0 %3451
        %3453 = vrot.lane.b32.xlu0 %v3340, 94
        %v3454 = vpop.permute.xlu0 %3453
        %v3455 = vsel %vm905, %v3450, %v3452
        %v3456 = vsel %vm905, %v3452, %v3454
        %v3457 = vsel %vm619, %v3324, %v3352
        %v3458 = vsel %vm619, %v3325, %v3353
        %v3459 = vsel %vm910, %v3457, %v3368
        %v3460 = vsel %vm910, %v3458, %v3369
        %v3461 = vsel %vm913, %v3368, %v3384
        %v3462 = vsel %vm913, %v3369, %v3385
        %v3463 = vsel %vm916, %v3461, %v3397
        %v3464 = vsel %vm916, %v3462, %v3398
        %v3465 = vsel %vm919, %v3463, %v3413
        %v3466 = vsel %vm919, %v3464, %v3414
        %v3467 = vsel %vm922, %v3413, %v3429
        %v3468 = vsel %vm922, %v3414, %v3430
        %v3469 = vsel %vm925, %v3467, %v3442
        %v3470 = vsel %vm925, %v3468, %v3443
        %v3472 = vsel %vm928, %v3062, 0
        %v3474 = vsel %vm619, %v3455, 0
        %v3476 = vsel %vm619, %v3456, 0
        %3478 = vmatprep.subr.mxu0 0.0
        %3479 = vmatpush1.msra.mxu0 0.0
        %3480 = vmatprep.subr.mxu0 0.0
        %3481 = vmatpush1.msra.mxu0 0.0
        %3482 = vmatprep.subr.mxu0 0.0
        %3483 = vmatpush1.msra.mxu0 0.0
        %3484 = vmatprep.subr.mxu0 0.0
        %3485 = vmatpush1.msra.mxu0 0.0
        %3486 = vmatprep.subr.mxu0 0.0
        %3487 = vmatpush1.msra.mxu0 0.0
        %3488 = vmatprep.subr.mxu0 0.0
        %3489 = vmatpush1.msra.mxu0 0.0
        %3490 = vmatprep.subr.mxu0 0.0
        %3491 = vmatpush1.msra.mxu0 0.0
        %3492 = vmatprep.subr.mxu0 0.0
        %3493 = vmatpush1.msra.mxu0 0.0
        %3494 = vmatprep.subr.mxu0 0.0
        %3495 = vmatpush1.msra.mxu0 0.0
        %3496 = vmatprep.subr.mxu0 0.0
        %3497 = vmatpush1.msra.mxu0 0.0
        %3498 = vmatprep.subr.mxu0 0.0
        %3499 = vmatpush1.msra.mxu0 0.0
        %3500 = vmatprep.subr.mxu0 0.0
        %3501 = vmatpush1.msra.mxu0 0.0
        %3502 = vmatprep.subr.mxu0 %v3476
        %3503 = vmatpush1.msra.mxu0 %v3474
        %3504 = vmatprep.subr.mxu0 %v3470
        %3505 = vmatpush1.msra.mxu0 %v3469
        %3506 = vmatprep.subr.mxu0 %v3466
        %3507 = vmatpush1.msra.mxu0 %v3465
        %3508 = vmatprep.subr.mxu0 %v3460
        %3509 = vmatpush1.msra.mxu0 %v3459
        %3510 = vmatprep.subr.mxu0 0.0
        %3511 = vmatpush2.msra.mxu0 0.0
        %3512 = vmatprep.subr.mxu0 0.0
        %3513 = vmatpush2.msra.mxu0 0.0
        %3514 = vmatprep.subr.mxu0 0.0
        %3515 = vmatpush2.msra.mxu0 0.0
        %3516 = vmatprep.subr.mxu0 0.0
        %3517 = vmatpush2.msra.mxu0 0.0
        %3518 = vmatprep.subr.mxu0 0.0
        %3519 = vmatpush2.msra.mxu0 0.0
        %3520 = vmatprep.subr.mxu0 0.0
        %3521 = vmatpush2.msra.mxu0 0.0
        %3522 = vmatprep.subr.mxu0 0.0
        %3523 = vmatpush2.msra.mxu0 0.0
        %3524 = vmatprep.subr.mxu0 0.0
        %3525 = vmatpush2.msra.mxu0 0.0
        %3526 = vmatprep.subr.mxu0 0.0
        %3527 = vmatpush2.msra.mxu0 0.0
        %3528 = vmatprep.subr.mxu0 0.0
        %3529 = vmatpush2.msra.mxu0 0.0
        %3530 = vmatprep.subr.mxu0 0.0
        %3531 = vmatpush2.msra.mxu0 0.0
        %3532 = vmatprep.subr.mxu0 0.0
        %3533 = vmatpush2.msra.mxu0 0.0
        %3534 = vmatprep.subr.mxu0 0.0
        %3535 = vmatpush2.msra.mxu0 0.0
        %3536 = vmatprep.subr.mxu0 0.0
        %3537 = vmatpush2.msra.mxu0 0.0
        %3538 = vmatprep.subr.mxu0 0.0
        %3539 = vmatpush2.msra.mxu0 0.0
        %3540 = vmatprep.subr.mxu0 0.0
        %3541 = vmatpush2.msra.mxu0 0.0
        %3542 = vmatprep.mubr.f32.mxu0 0.0
        %3543 = vmatmul.mubr.f32.gmra.mxu0 %v3472
        %v3544 = vpop.f32.mrf.mxu0
        %v3545 = vadd.f32 %v3059, %v3544
        %v3546 = vpop.f32.mrf.mxu0
        %v3547 = vadd.f32 %v3060, %v3546
        %3548 = vdwg.mxu0
        %vm3549 = vcmp.gt.f32.partialorder %v3545, 0.0
        %vm3550 = vcmp.gt.f32.partialorder %v3547, 0.0
        %v3551 = vmin.f32 %v3545, 0.0
        %v3552 = vmin.f32 %v3547, 0.0
        %v3553 = vmul.f32 %v3551, 1.442695
        %v3554 = vpow.pop %v3553
        %v3555 = vmul.f32 %v3552, 1.442695
        %v3556 = vpow.pop %v3555
        %v3557 = vsub.f32 %v3554, 1.0
        %v3558 = vsub.f32 %v3556, 1.0
        %v3559 = vsel %vm3549, %v3545, %v3557
        %v3560 = vsel %vm3550, %v3547, %v3558
        %v3563 = vcombine.low %v3559, %v3560
        %3565 = vst [vmem:[%s557] sm:$0x77] %v3563
        %p3566 = scmp.lt.s32.totalorder %s29, 1
        %s3567 = scalar_select %p3566, %s29, 1
        %s3568 = smul.addr %s3567, 2
        %s3569 = smul.addr %s3568, 4
        %s3570 = scalar_lea.vmem %s15, %s3569
        // Predicated region
        $region101: #{tpu_custom_call.1} parent=79 // pred_check
          %p3571 = pneg %p367
        $region102: #{tpu_custom_call.1} parent=79 // pred_check_branch
          %3573 = sbr.rel (%p3571) target = $region104
        $region103: #{tpu_custom_call.1} parent=79 // pred_region
          _
        $region104: #{tpu_custom_call.1} parent=79 // pred_fallthru
          _
      $region80: #{tpu_custom_call.1} parent=5 // pred_fallthru
        _
      %p3574 = scmp.le.s32.totalorder 2, %s24
      // Predicated region
      $region105: #{tpu_custom_call.1} parent=5 // pred_check
        %p3575 = pneg %p3574
      $region106: #{tpu_custom_call.1} parent=5 // pred_check_branch
        %3577 = sbr.rel (%p3575) target = $region108
      $region107: #{tpu_custom_call.1} parent=5 // pred_region
        %s3578 = ssub.s32 %s24, 2
        // Predicated region
        $region109: #{tpu_custom_call.1} parent=107 // pred_check
          %p3579 = pneg %p373
        $region110: #{tpu_custom_call.1} parent=107 // pred_check_branch
          %3581 = sbr.rel (%p3579) target = $region112
        $region111: #{tpu_custom_call.1} parent=107 // pred_region
          %p3582 = scmp.lt.s32.totalorder %s30, 1
          %s3583 = scalar_select %p3582, %s30, 1
          %s3584 = smul.addr %s3583, 2
          %s3585 = smul.addr %s3584, 4
          %s3586 = scalar_lea.vmem %s15, %s3585
        $region112: #{tpu_custom_call.1} parent=107 // pred_fallthru
          _
      $region108: #{tpu_custom_call.1} parent=5 // pred_fallthru
        _
    $region6: #{tpu_custom_call.1} parent=1 // loop_footer
      %s28 = sadd.s32 1, %s24
    $region7: #{tpu_custom_call.1} parent=1 // loop_footer_branch
      %23 = sbr.rel target = $region3
    $region8: #{tpu_custom_call.1} parent=1 // loop_exit
      _
    %3587 = vsyncpa [#allocation3], 1
    %s3588 = scalar_lea.sflag [#allocation3], 1
    %3589 = vsyncpa %s3588, 1
    %3590 = vsyncpa [#allocation5], 1
    %3591 = vsyncpa [#allocation8], 1

</llo_original>
